<compile_context>
chip_gen: v5e
topology: v5e:2x2
jax: 0.10.0
libtpu: 0.0.40
codegen_flags: <defaults>
</compile_context>

<pallas_src>
import functools

import jax
import jax.numpy as jnp
from jax.experimental import pallas as pl
from jax.experimental.pallas import tpu as pltpu


# ------------------------------------------------------------------- helpers
def _round_up(n, m):
    return ((n + m - 1) // m) * m


def _tpu_kind():
    try:
        return jax.devices()[0].device_kind.lower()
    except Exception:  # non-TPU fallback, keeps the script importable anywhere
        return ""


def _use_bf16_activations(kind):
    # v6e / v7x have bf16-capable VPU + EUP; v2..v5 do not.
    return not any(tag in kind for tag in ("v2", "v3", "v4", "v5"))


def _num_tensorcores(kind):
    # v7x exposes 2 TensorCores per chip; v5e/v6e are single-TC.
    return 2 if "v7" in kind else 1


def _choose_batch_tile(B, two_cores):
    """Pick (TB, B_pad).  TB is a multiple of 128 (or of 8 for tiny batches),
    chosen to keep per-step work large, padding waste <= ~12.5%, and at least
    two grid steps on 2-TensorCore chips."""
    if B <= 128:
        tb = _round_up(B, 8)
        return tb, tb
    candidates = (512, 256, 128)
    tb = b_pad = None
    for cand in candidates:                      # largest tile w/ <=12.5% pad
        pad = _round_up(B, cand)
        if (pad - B) * 8 <= pad:
            tb, b_pad = cand, pad
            break
    if tb is None:                               # otherwise minimize padding
        for cand in candidates:
            pad = _round_up(B, cand)
            if b_pad is None or pad < b_pad:
                tb, b_pad = cand, pad
    if two_cores and b_pad // tb < 2 and tb > 128:   # keep both TCs busy
        tb //= 2
        b_pad = _round_up(B, tb)
    return tb, b_pad


# -------------------------------------------------------------------- kernel
def mlp_kernel(x_ref,
               w1_ref, b1_ref,
               w2_ref, b2_ref,
               w3_ref, b3_ref,
               w4_ref, b4_ref,
               o_ref, *, act_dtype):
    # MXU inputs in bf16, accumulation in f32.  Bias-add + SiLU run in
    # `act_dtype` (bf16 on v6e/v7x where VPU/EUP are bf16-capable, f32 on v5e).
    h = x_ref[...].astype(jnp.bfloat16)

    def dense_silu(h, w_ref, b_ref):
        acc = jnp.dot(h, w_ref[...], preferred_element_type=jnp.float32)
        z = (acc + b_ref[...]).astype(act_dtype)
        z = z * jax.nn.sigmoid(z)            # SiLU: EUP sigmoid + VPU mul
        return z.astype(jnp.bfloat16)        # feed next MXU dot

    h = dense_silu(h, w1_ref, b1_ref)        # (TB, 512)
    h = dense_silu(h, w2_ref, b2_ref)        # (TB, 512)
    h = dense_silu(h, w3_ref, b3_ref)        # (TB, 128)  lane-padded 64 -> 128
    acc = jnp.dot(h, w4_ref[...], preferred_element_type=jnp.float32)
    o_ref[...] = (acc + b4_ref[...]).astype(o_ref.dtype)   # (TB, 128) bf16


# ------------------------------------------------------------------- wrapper
def mlp_forward(x, kernel_params):
    """x: (B, 1280) f32.  kernel_params: padded bf16 weights / f32 biases from
    prep_kernel_params().  Returns (B, 10) f32 (values rounded through bf16)."""
    w1, b1, w2, b2, w3, b3, w4, b4 = kernel_params
    B, D = x.shape
    assert D == 1280

    kind = _tpu_kind()
    act_dtype = jnp.bfloat16 if _use_bf16_activations(kind) else jnp.float32
    TB, B_pad = _choose_batch_tile(B, _num_tensorcores(kind) > 1)
    if B_pad != B:
        x = jnp.pad(x, ((0, B_pad - B), (0, 0)))

    grid = (B_pad // TB,)
    n_out = w4.shape[1]          # 128 (lane-padded)
    const = lambda i: (0, 0)     # weights/biases stay resident across steps

    # NOTE: x stays f32 here (module spec).  If the upstream producer can emit
    # bf16 x (fused, not a separate cast pass), dropping the in-kernel cast
    # would nearly halve HBM traffic on v6e/v7x.
    flops = 2 * B_pad * (1280 * 512 + 512 * 512 + 512 * 128 + 128 * 128)
    bytes_accessed = (
        x.size * x.dtype.itemsize + B_pad * n_out * 2
        + sum(a.size * a.dtype.itemsize
              for a in (w1, b1, w2, b2, w3, b3, w4, b4)))
    transcendentals = B_pad * (512 + 512 + 128)

    out = pl.pallas_call(
        functools.partial(mlp_kernel, act_dtype=act_dtype),
        out_shape=jax.ShapeDtypeStruct((B_pad, n_out), jnp.bfloat16),
        grid=grid,
        in_specs=[
            pl.BlockSpec((TB, 1280), lambda i: (i, 0)),   # x tile (pipelined)
            pl.BlockSpec(w1.shape, const), pl.BlockSpec(b1.shape, const),
            pl.BlockSpec(w2.shape, const), pl.BlockSpec(b2.shape, const),
            pl.BlockSpec(w3.shape, const), pl.BlockSpec(b3.shape, const),
            pl.BlockSpec(w4.shape, const), pl.BlockSpec(b4.shape, const),
        ],
        out_specs=pl.BlockSpec((TB, n_out), lambda i: (i, 0)),
        compiler_params=pltpu.CompilerParams(
            dimension_semantics=("parallel",),
            vmem_limit_bytes=32 * 1024 * 1024),
        cost_estimate=pl.CostEstimate(
            flops=flops,
            bytes_accessed=bytes_accessed,
            transcendentals=transcendentals),
    )(x, w1, b1, w2, b2, w3, b3, w4, b4)

    # TODO(synk): if the consumer can take the padded bf16 slab directly, drop
    # this slice/cast pass to avoid re-reading the output from HBM.
    return out[:B, :10].astype(jnp.float32)


# ------------------------------------------------------------ params / tests
def init_params(key):
    """f32 params matching nn.Linear shapes; weights stored transposed as
    (in_features, out_features) so the forward is x @ W + b."""
    dims = [(1280, 512), (512, 512), (512, 64), (64, 10)]
    params = []
    keys = jax.random.split(key, len(dims) * 2)
    for i, (din, dout) in enumerate(dims):
        bound = 1.0 / jnp.sqrt(jnp.float32(din))
        w = jax.random.uniform(keys[2 * i], (din, dout), jnp.float32,
                               minval=-bound, maxval=bound)
        b = jax.random.uniform(keys[2 * i + 1], (1, dout), jnp.float32,
                               minval=-bound, maxval=bound)
        params.extend([w, b])
    return tuple(params)


def prep_kernel_params(params):
    """Cast weights to bf16 and zero-pad the narrow tail layers to lane
    width (128)."""
    w1, b1, w2, b2, w3, b3, w4, b4 = params
    w1 = w1.astype(jnp.bfloat16)
    w2 = w2.astype(jnp.bfloat16)
    # Layer 3: pad output cols 64 -> 128.
    w3p = jnp.pad(w3, ((0, 0), (0, 128 - w3.shape[1]))).astype(jnp.bfloat16)
    b3p = jnp.pad(b3, ((0, 0), (0, 128 - b3.shape[1])))
    # Layer 4: pad contraction 64 -> 128 and output cols 10 -> 128.
    w4p = jnp.pad(w4, ((0, 128 - w4.shape[0]),
                       (0, 128 - w4.shape[1]))).astype(jnp.bfloat16)
    b4p = jnp.pad(b4, ((0, 0), (0, 128 - b4.shape[1])))
    return (w1, b1, w2, b2, w3p, b3p, w4p, b4p)


def reference_forward(x, params, act_dtype):
    """Plain-JAX reference mirroring the kernel numerics: bf16-rounded matmul
    inputs with f32 accumulation, SiLU in act_dtype, bf16-rounded output."""
    w1, b1, w2, b2, w3, b3, w4, b4 = params

    def mm(a, w):
        return jnp.dot(a.astype(jnp.bfloat16).astype(jnp.float32),
                       w.astype(jnp.bfloat16).astype(jnp.float32))

    def silu(z):
        z = z.astype(act_dtype)
        return (z * jax.nn.sigmoid(z)).astype(jnp.float32)

    h = silu(mm(x, w1) + b1)
    h = silu(mm(h, w2) + b2)
    h = silu(mm(h, w3) + b3)
    out = mm(h, w4) + b4
    return out.astype(jnp.bfloat16).astype(jnp.float32)


if __name__ == "__main__":
    key = jax.random.PRNGKey(0)
    kx, kp = jax.random.split(key)

    params_f32 = init_params(kp)
    kernel_params = prep_kernel_params(params_f32)

    kind = _tpu_kind()
    act_dtype = jnp.bfloat16 if _use_bf16_activations(kind) else jnp.float32

    # B=8: single-step grid; B=300: multi-step grid + batch-padding path.
    for B in (8, 300):
        x = jax.random.normal(jax.random.fold_in(kx, B), (B, 1280),
                              dtype=jnp.float32)
        out = jax.block_until_ready(mlp_forward(x, kernel_params))
        ref = reference_forward(x, params_f32, act_dtype)
        assert out.shape == (B, 10)
        # bf16 output / bf16 activation rounding => ~1 bf16-ulp tolerance.
        assert jnp.allclose(out, ref, atol=1e-2, rtol=1e-2), (
            B, float(jnp.max(jnp.abs(out - ref))))
    print("KERNEL_OK")
</pallas_src>

<mosaic_0001>
module attributes {stable_mosaic.version = 11 : i64} {
  func.func @mlp_kernel(%arg0: i32, %arg1: memref<8x1280xf32, #tpu.memory_space<vmem>>, %arg2: memref<1280x512xbf16, #tpu.memory_space<vmem>>, %arg3: memref<1x512xf32, #tpu.memory_space<vmem>>, %arg4: memref<512x512xbf16, #tpu.memory_space<vmem>>, %arg5: memref<1x512xf32, #tpu.memory_space<vmem>>, %arg6: memref<512x128xbf16, #tpu.memory_space<vmem>>, %arg7: memref<1x128xf32, #tpu.memory_space<vmem>>, %arg8: memref<128x128xbf16, #tpu.memory_space<vmem>>, %arg9: memref<1x128xf32, #tpu.memory_space<vmem>>, %arg10: memref<8x128xbf16, #tpu.memory_space<vmem>>) attributes {dimension_semantics = [#tpu.dimension_semantics<parallel>], iteration_bounds = array<i64: 1>, scalar_prefetch = 0 : i64, scratch_operands = 0 : i64, tpu.core_type = #tpu.core_type<tc>, window_params = [{transform_indices = @transform_0, window_bounds = array<i64: 8, 1280>}, {pipeline_mode = #tpu.pipeline_mode<synchronous>, transform_indices = @transform_1, window_bounds = array<i64: 1280, 512>}, {pipeline_mode = #tpu.pipeline_mode<synchronous>, transform_indices = @transform_2, window_bounds = array<i64: 1, 512>}, {pipeline_mode = #tpu.pipeline_mode<synchronous>, transform_indices = @transform_3, window_bounds = array<i64: 512, 512>}, {pipeline_mode = #tpu.pipeline_mode<synchronous>, transform_indices = @transform_4, window_bounds = array<i64: 1, 512>}, {pipeline_mode = #tpu.pipeline_mode<synchronous>, transform_indices = @transform_5, window_bounds = array<i64: 512, 128>}, {pipeline_mode = #tpu.pipeline_mode<synchronous>, transform_indices = @transform_6, window_bounds = array<i64: 1, 128>}, {pipeline_mode = #tpu.pipeline_mode<synchronous>, transform_indices = @transform_7, window_bounds = array<i64: 128, 128>}, {pipeline_mode = #tpu.pipeline_mode<synchronous>, transform_indices = @transform_8, window_bounds = array<i64: 1, 128>}, {transform_indices = @transform_9, window_bounds = array<i64: 8, 128>}]} {
    %c0 = arith.constant 0 : index
    %c0_0 = arith.constant 0 : index
    %0 = vector.load %arg1[%c0, %c0_0] : memref<8x1280xf32, #tpu.memory_space<vmem>>, vector<8x1280xf32>
    %1 = arith.truncf %0 : vector<8x1280xf32> to vector<8x1280xbf16>
    %c0_1 = arith.constant 0 : index
    %c0_2 = arith.constant 0 : index
    %2 = vector.load %arg2[%c0_1, %c0_2] : memref<1280x512xbf16, #tpu.memory_space<vmem>>, vector<1280x512xbf16>
    %cst = arith.constant dense<0.000000e+00> : vector<8x512xf32>
    %3 = tpu.matmul %1, %2, %cst {dimension_numbers = #tpu.dot_dimension_numbers<[1], [0], [0], [1], [0, 0, 1, 1], [], []>} : vector<8x1280xbf16>, vector<1280x512xbf16>, vector<8x512xf32> -> vector<8x512xf32>
    %c0_3 = arith.constant 0 : index
    %c0_4 = arith.constant 0 : index
    %4 = vector.load %arg3[%c0_3, %c0_4] : memref<1x512xf32, #tpu.memory_space<vmem>>, vector<1x512xf32>
    %5 = vector.broadcast %4 : vector<1x512xf32> to vector<8x512xf32>
    %6 = arith.addf %3, %5 : vector<8x512xf32>
    %7 = arith.truncf %6 : vector<8x512xf32> to vector<8x512xbf16>
    %8 = arith.negf %7 : vector<8x512xbf16>
    %9 = math.exp %8 : vector<8x512xbf16>
    %cst_5 = arith.constant 1.000000e+00 : bf16
    %10 = vector.broadcast %cst_5 : bf16 to vector<8x512xbf16>
    %11 = arith.addf %10, %9 : vector<8x512xbf16>
    %12 = arith.divf %10, %11 : vector<8x512xbf16>
    %13 = arith.mulf %7, %12 : vector<8x512xbf16>
    %c0_6 = arith.constant 0 : index
    %c0_7 = arith.constant 0 : index
    %14 = vector.load %arg4[%c0_6, %c0_7] : memref<512x512xbf16, #tpu.memory_space<vmem>>, vector<512x512xbf16>
    %cst_8 = arith.constant dense<0.000000e+00> : vector<8x512xf32>
    %15 = tpu.matmul %13, %14, %cst_8 {dimension_numbers = #tpu.dot_dimension_numbers<[1], [0], [0], [1], [0, 0, 1, 1], [], []>} : vector<8x512xbf16>, vector<512x512xbf16>, vector<8x512xf32> -> vector<8x512xf32>
    %c0_9 = arith.constant 0 : index
    %c0_10 = arith.constant 0 : index
    %16 = vector.load %arg5[%c0_9, %c0_10] : memref<1x512xf32, #tpu.memory_space<vmem>>, vector<1x512xf32>
    %17 = vector.broadcast %16 : vector<1x512xf32> to vector<8x512xf32>
    %18 = arith.addf %15, %17 : vector<8x512xf32>
    %19 = arith.truncf %18 : vector<8x512xf32> to vector<8x512xbf16>
    %20 = arith.negf %19 : vector<8x512xbf16>
    %21 = math.exp %20 : vector<8x512xbf16>
    %cst_11 = arith.constant 1.000000e+00 : bf16
    %22 = vector.broadcast %cst_11 : bf16 to vector<8x512xbf16>
    %23 = arith.addf %22, %21 : vector<8x512xbf16>
    %24 = arith.divf %22, %23 : vector<8x512xbf16>
    %25 = arith.mulf %19, %24 : vector<8x512xbf16>
    %c0_12 = arith.constant 0 : index
    %c0_13 = arith.constant 0 : index
    %26 = vector.load %arg6[%c0_12, %c0_13] : memref<512x128xbf16, #tpu.memory_space<vmem>>, vector<512x128xbf16>
    %cst_14 = arith.constant dense<0.000000e+00> : vector<8x128xf32>
    %27 = tpu.matmul %25, %26, %cst_14 {dimension_numbers = #tpu.dot_dimension_numbers<[1], [0], [0], [1], [0, 0, 1, 1], [], []>} : vector<8x512xbf16>, vector<512x128xbf16>, vector<8x128xf32> -> vector<8x128xf32>
    %c0_15 = arith.constant 0 : index
    %c0_16 = arith.constant 0 : index
    %28 = vector.load %arg7[%c0_15, %c0_16] : memref<1x128xf32, #tpu.memory_space<vmem>>, vector<1x128xf32>
    %29 = vector.broadcast %28 : vector<1x128xf32> to vector<8x128xf32>
    %30 = arith.addf %27, %29 : vector<8x128xf32>
    %31 = arith.truncf %30 : vector<8x128xf32> to vector<8x128xbf16>
    %32 = arith.negf %31 : vector<8x128xbf16>
    %33 = math.exp %32 : vector<8x128xbf16>
    %cst_17 = arith.constant 1.000000e+00 : bf16
    %34 = vector.broadcast %cst_17 : bf16 to vector<8x128xbf16>
    %35 = arith.addf %34, %33 : vector<8x128xbf16>
    %36 = arith.divf %34, %35 : vector<8x128xbf16>
    %37 = arith.mulf %31, %36 : vector<8x128xbf16>
    %c0_18 = arith.constant 0 : index
    %c0_19 = arith.constant 0 : index
    %38 = vector.load %arg8[%c0_18, %c0_19] : memref<128x128xbf16, #tpu.memory_space<vmem>>, vector<128x128xbf16>
    %cst_20 = arith.constant dense<0.000000e+00> : vector<8x128xf32>
    %39 = tpu.matmul %37, %38, %cst_20 {dimension_numbers = #tpu.dot_dimension_numbers<[1], [0], [0], [1], [0, 0, 1, 1], [], []>} : vector<8x128xbf16>, vector<128x128xbf16>, vector<8x128xf32> -> vector<8x128xf32>
    %c0_21 = arith.constant 0 : index
    %c0_22 = arith.constant 0 : index
    %40 = vector.load %arg9[%c0_21, %c0_22] : memref<1x128xf32, #tpu.memory_space<vmem>>, vector<1x128xf32>
    %41 = vector.broadcast %40 : vector<1x128xf32> to vector<8x128xf32>
    %42 = arith.addf %39, %41 : vector<8x128xf32>
    %43 = arith.truncf %42 : vector<8x128xf32> to vector<8x128xbf16>
    %c0_23 = arith.constant 0 : index
    %c0_24 = arith.constant 0 : index
    %44 = vector.load %arg10[%c0_23, %c0_24] : memref<8x128xbf16, #tpu.memory_space<vmem>>, vector<8x128xbf16>
    tpu.vector_store %arg10[%c0_23, %c0_24], %43 {strides = array<i32>} : memref<8x128xbf16, #tpu.memory_space<vmem>>, vector<8x128xbf16>,
    return
  }
  func.func @transform_0(%arg0: i32) -> (i32, i32) {
    %c0_i32 = arith.constant 0 : i32
    %c0_i32_0 = arith.constant 0 : i32
    return %arg0, %c0_i32 : i32, i32
  }
  func.func @transform_1(%arg0: i32) -> (i32, i32) {
    %c0_i32 = arith.constant 0 : i32
    %c0_i32_0 = arith.constant 0 : i32
    %c0_i32_1 = arith.constant 0 : i32
    return %c0_i32, %c0_i32_0 : i32, i32
  }
  func.func @transform_2(%arg0: i32) -> (i32, i32) {
    %c0_i32 = arith.constant 0 : i32
    %c0_i32_0 = arith.constant 0 : i32
    %c0_i32_1 = arith.constant 0 : i32
    return %c0_i32, %c0_i32_0 : i32, i32
  }
  func.func @transform_3(%arg0: i32) -> (i32, i32) {
    %c0_i32 = arith.constant 0 : i32
    %c0_i32_0 = arith.constant 0 : i32
    %c0_i32_1 = arith.constant 0 : i32
    return %c0_i32, %c0_i32_0 : i32, i32
  }
  func.func @transform_4(%arg0: i32) -> (i32, i32) {
    %c0_i32 = arith.constant 0 : i32
    %c0_i32_0 = arith.constant 0 : i32
    %c0_i32_1 = arith.constant 0 : i32
    return %c0_i32, %c0_i32_0 : i32, i32
  }
  func.func @transform_5(%arg0: i32) -> (i32, i32) {
    %c0_i32 = arith.constant 0 : i32
    %c0_i32_0 = arith.constant 0 : i32
    %c0_i32_1 = arith.constant 0 : i32
    return %c0_i32, %c0_i32_0 : i32, i32
  }
  func.func @transform_6(%arg0: i32) -> (i32, i32) {
    %c0_i32 = arith.constant 0 : i32
    %c0_i32_0 = arith.constant 0 : i32
    %c0_i32_1 = arith.constant 0 : i32
    return %c0_i32, %c0_i32_0 : i32, i32
  }
  func.func @transform_7(%arg0: i32) -> (i32, i32) {
    %c0_i32 = arith.constant 0 : i32
    %c0_i32_0 = arith.constant 0 : i32
    %c0_i32_1 = arith.constant 0 : i32
    return %c0_i32, %c0_i32_0 : i32, i32
  }
  func.func @transform_8(%arg0: i32) -> (i32, i32) {
    %c0_i32 = arith.constant 0 : i32
    %c0_i32_0 = arith.constant 0 : i32
    %c0_i32_1 = arith.constant 0 : i32
    return %c0_i32, %c0_i32_0 : i32, i32
  }
  func.func @transform_9(%arg0: i32) -> (i32, i32) {
    %c0_i32 = arith.constant 0 : i32
    %c0_i32_0 = arith.constant 0 : i32
    return %arg0, %c0_i32 : i32, i32
  }
}

</mosaic_0001>

<llo_original>
// kernel: tpu_custom_call.1
$region0: #{tpu_custom_call.1}
  #allocation0 [shape = 'u32[]', space=smem, size = 0x4, offset = 0x4, fixed_abs, tag = 'smem constant byte address 0x4 - core index']
  #allocation1 [shape = 'u32[72,128]{1,0:T(1,128)}', space=vmem, size = 0x9000, scoped, tag = 'internal scratch']
  %s0 = inlined_call_operand.hbm [shape: f32[8,1280], index: 0, kind: input, shape index: {}]
  %s1 = inlined_call_operand.hbm [shape: bf16[1280,512], index: 1, kind: input, shape index: {}]
  %s2 = inlined_call_operand.hbm [shape: f32[1,512], index: 2, kind: input, shape index: {}]
  %s3 = inlined_call_operand.hbm [shape: bf16[512,512], index: 3, kind: input, shape index: {}]
  %s4 = inlined_call_operand.hbm [shape: f32[1,512], index: 4, kind: input, shape index: {}]
  %s5 = inlined_call_operand.hbm [shape: bf16[512,128], index: 5, kind: input, shape index: {}]
  %s6 = inlined_call_operand.hbm [shape: f32[1,128], index: 6, kind: input, shape index: {}]
  %s7 = inlined_call_operand.hbm [shape: bf16[128,128], index: 7, kind: input, shape index: {}]
  %s8 = inlined_call_operand.hbm [shape: f32[1,128], index: 8, kind: input, shape index: {}]
  %s9 = inlined_call_operand.hbm [shape: bf16[8,128], index: 9, kind: output, shape index: {}]
  %s10 = sld [smem:[#allocation0]]
  $region82: #{tpu_custom_call.1} parent=0
    _
  %s12 = ssub.s32 1, %s10
  %s13 = scalar_select 0, %s12, %s10
  $region1: #{tpu_custom_call.1} parent=0
    #allocation2 [shape = 'u8[40960]{0}', space=vmem, size = 0xa000, scoped, tag = 'input window, operand 0, single buffered']
    #allocation3 [shape = 's32[1]{0}', space=sflag, size = 0x4, scoped, tag = 'scoped memory for tpu_custom_call.1']
    #allocation4 [shape = 's32[1]{0}', space=sflag, size = 0x4, scoped, tag = 'scoped memory for tpu_custom_call.1']
    #allocation5 [shape = 'u8[1310720]{0}', space=vmem, size = 0x140000, scoped, tag = 'input window, operand 1, single buffered']
    #allocation6 [shape = 's32[1]{0}', space=sflag, size = 0x4, scoped, tag = 'scoped memory for tpu_custom_call.1']
    #allocation7 [shape = 'u8[2048]{0}', space=vmem, size = 0x800, scoped, tag = 'input window, operand 2, single buffered']
    #allocation8 [shape = 'u8[524288]{0}', space=vmem, size = 0x80000, scoped, tag = 'input window, operand 3, single buffered']
    #allocation9 [shape = 's32[1]{0}', space=sflag, size = 0x4, scoped, tag = 'scoped memory for tpu_custom_call.1']
    #allocation10 [shape = 'u8[2048]{0}', space=vmem, size = 0x800, scoped, tag = 'input window, operand 4, single buffered']
    #allocation11 [shape = 'u8[131072]{0}', space=vmem, size = 0x20000, scoped, tag = 'input window, operand 5, single buffered']
    #allocation12 [shape = 's32[1]{0}', space=sflag, size = 0x4, scoped, tag = 'scoped memory for tpu_custom_call.1']
    #allocation13 [shape = 'u8[512]{0}', space=vmem, size = 0x400, scoped, tag = 'input window, operand 6, single buffered']
    #allocation14 [shape = 'u8[32768]{0}', space=vmem, size = 0x8000, scoped, tag = 'input window, operand 7, single buffered']
    #allocation15 [shape = 's32[1]{0}', space=sflag, size = 0x4, scoped, tag = 'scoped memory for tpu_custom_call.1']
    #allocation16 [shape = 'u8[512]{0}', space=vmem, size = 0x400, scoped, tag = 'input window, operand 8, single buffered']
    #allocation17 [shape = 'u8[2048]{0}', space=vmem, size = 0x800, scoped, tag = 'output window, operand 0, single buffered']
    %14 = vsyncpa [#allocation3], 0
    %15 = vsyncpa [#allocation6], 0
    %16 = vsyncpa [#allocation9], 0
    %17 = vsyncpa [#allocation12], 0
    %18 = vsyncpa [#allocation15], 0
    %19 = vsyncpa [#allocation4], 0
    // Predicated region
    $region2: #{tpu_custom_call.1} parent=1 // pred_check
      _
    $region3: #{tpu_custom_call.1} parent=1 // pred_check_branch
      %21 = sbr.rel (0) target = $region5
    $region4: #{tpu_custom_call.1} parent=1 // pred_region
      %23 = vsyncadd [#allocation3], 0
      %s25 = sshll.u32 %s0, 4
      %s26 = int_to_ptr.hbm [resolvable:$true] %s25
      %s27 = sshll.u32 [#allocation2], 4
      %s28 = int_to_ptr.vmem [resolvable:$true] %s27
      %30 = dma.hbm_to_vmem [thread:$0]  %s26, 1280, %s28, [#allocation3]
    $region5: #{tpu_custom_call.1} parent=1 // pred_fallthru
      _
    // Predicated region
    $region6: #{tpu_custom_call.1} parent=1 // pred_check
      _
    $region7: #{tpu_custom_call.1} parent=1 // pred_check_branch
      %32 = sbr.rel (0) target = $region9
    $region8: #{tpu_custom_call.1} parent=1 // pred_region
      %34 = vsyncadd [#allocation6], 0
      %s35 = sshll.u32 %s1, 4
      %s36 = int_to_ptr.hbm [resolvable:$true] %s35
      %s37 = sshll.u32 [#allocation5], 4
      %s38 = int_to_ptr.vmem [resolvable:$true] %s37
      %43 = dma.hbm_to_vmem [thread:$0]  %s36, 40960, %s38, [#allocation6], 256, 256, 16
    $region9: #{tpu_custom_call.1} parent=1 // pred_fallthru
      _
    // Predicated region
    $region10: #{tpu_custom_call.1} parent=1 // pred_check
      _
    $region11: #{tpu_custom_call.1} parent=1 // pred_check_branch
      %45 = sbr.rel (0) target = $region13
    $region12: #{tpu_custom_call.1} parent=1 // pred_region
      %47 = vsyncadd [#allocation6], 0
      %s49 = sshll.u32 %s2, 4
      %s50 = int_to_ptr.hbm [resolvable:$true] %s49
      %s51 = sshll.u32 [#allocation7], 4
      %s52 = int_to_ptr.vmem [resolvable:$true] %s51
      %54 = dma.hbm_to_vmem [thread:$0]  %s50, 64, %s52, [#allocation6]
    $region13: #{tpu_custom_call.1} parent=1 // pred_fallthru
      _
    // Predicated region
    $region14: #{tpu_custom_call.1} parent=1 // pred_check
      _
    $region15: #{tpu_custom_call.1} parent=1 // pred_check_branch
      %56 = sbr.rel (0) target = $region17
    $region16: #{tpu_custom_call.1} parent=1 // pred_region
      %58 = vsyncadd [#allocation9], 0
      %s59 = sshll.u32 %s3, 4
      %s60 = int_to_ptr.hbm [resolvable:$true] %s59
      %s61 = sshll.u32 [#allocation8], 4
      %s62 = int_to_ptr.vmem [resolvable:$true] %s61
      %67 = dma.hbm_to_vmem [thread:$0]  %s60, 16384, %s62, [#allocation9], 256, 256, 16
    $region17: #{tpu_custom_call.1} parent=1 // pred_fallthru
      _
    // Predicated region
    $region18: #{tpu_custom_call.1} parent=1 // pred_check
      _
    $region19: #{tpu_custom_call.1} parent=1 // pred_check_branch
      %69 = sbr.rel (0) target = $region21
    $region20: #{tpu_custom_call.1} parent=1 // pred_region
      %71 = vsyncadd [#allocation9], 0
      %s73 = sshll.u32 %s4, 4
      %s74 = int_to_ptr.hbm [resolvable:$true] %s73
      %s75 = sshll.u32 [#allocation10], 4
      %s76 = int_to_ptr.vmem [resolvable:$true] %s75
      %78 = dma.hbm_to_vmem [thread:$0]  %s74, 64, %s76, [#allocation9]
    $region21: #{tpu_custom_call.1} parent=1 // pred_fallthru
      _
    // Predicated region
    $region22: #{tpu_custom_call.1} parent=1 // pred_check
      _
    $region23: #{tpu_custom_call.1} parent=1 // pred_check_branch
      %80 = sbr.rel (0) target = $region25
    $region24: #{tpu_custom_call.1} parent=1 // pred_region
      %82 = vsyncadd [#allocation12], 0
      %s83 = sshll.u32 %s5, 4
      %s84 = int_to_ptr.hbm [resolvable:$true] %s83
      %s85 = sshll.u32 [#allocation11], 4
      %s86 = int_to_ptr.vmem [resolvable:$true] %s85
      %91 = dma.hbm_to_vmem [thread:$0]  %s84, 4096, %s86, [#allocation12], 64, 64, 4
    $region25: #{tpu_custom_call.1} parent=1 // pred_fallthru
      _
    // Predicated region
    $region26: #{tpu_custom_call.1} parent=1 // pred_check
      _
    $region27: #{tpu_custom_call.1} parent=1 // pred_check_branch
      %93 = sbr.rel (0) target = $region29
    $region28: #{tpu_custom_call.1} parent=1 // pred_region
      %95 = vsyncadd [#allocation12], 0
      %s97 = sshll.u32 %s6, 4
      %s98 = int_to_ptr.hbm [resolvable:$true] %s97
      %s99 = sshll.u32 [#allocation13], 4
      %s100 = int_to_ptr.vmem [resolvable:$true] %s99
      %102 = dma.hbm_to_vmem [thread:$0]  %s98, 16, %s100, [#allocation12]
    $region29: #{tpu_custom_call.1} parent=1 // pred_fallthru
      _
    // Predicated region
    $region30: #{tpu_custom_call.1} parent=1 // pred_check
      _
    $region31: #{tpu_custom_call.1} parent=1 // pred_check_branch
      %104 = sbr.rel (0) target = $region33
    $region32: #{tpu_custom_call.1} parent=1 // pred_region
      %106 = vsyncadd [#allocation15], 0
      %s107 = sshll.u32 %s7, 4
      %s108 = int_to_ptr.hbm [resolvable:$true] %s107
      %s109 = sshll.u32 [#allocation14], 4
      %s110 = int_to_ptr.vmem [resolvable:$true] %s109
      %115 = dma.hbm_to_vmem [thread:$0]  %s108, 1024, %s110, [#allocation15], 64, 64, 4
    $region33: #{tpu_custom_call.1} parent=1 // pred_fallthru
      _
    // Predicated region
    $region34: #{tpu_custom_call.1} parent=1 // pred_check
      _
    $region35: #{tpu_custom_call.1} parent=1 // pred_check_branch
      %117 = sbr.rel (0) target = $region37
    $region36: #{tpu_custom_call.1} parent=1 // pred_region
      %119 = vsyncadd [#allocation15], 0
      %s121 = sshll.u32 %s8, 4
      %s122 = int_to_ptr.hbm [resolvable:$true] %s121
      %s123 = sshll.u32 [#allocation16], 4
      %s124 = int_to_ptr.vmem [resolvable:$true] %s123
      %126 = dma.hbm_to_vmem [thread:$0]  %s122, 16, %s124, [#allocation15]
    $region37: #{tpu_custom_call.1} parent=1 // pred_fallthru
      _
    // Predicated region
    $region38: #{tpu_custom_call.1} parent=1 // pred_check
      _
    $region39: #{tpu_custom_call.1} parent=1 // pred_check_branch
      %128 = sbr.rel (0) target = $region41
    $region40: #{tpu_custom_call.1} parent=1 // pred_region
      %130 = dma.done [#allocation3], 1280
    $region41: #{tpu_custom_call.1} parent=1 // pred_fallthru
      _
    // Predicated region
    $region42: #{tpu_custom_call.1} parent=1 // pred_check
      _
    $region43: #{tpu_custom_call.1} parent=1 // pred_check_branch
      %132 = sbr.rel (0) target = $region45
    $region44: #{tpu_custom_call.1} parent=1 // pred_region
      %134 = dma.done [#allocation6], 40960
    $region45: #{tpu_custom_call.1} parent=1 // pred_fallthru
      _
    // Predicated region
    $region46: #{tpu_custom_call.1} parent=1 // pred_check
      _
    $region47: #{tpu_custom_call.1} parent=1 // pred_check_branch
      %136 = sbr.rel (0) target = $region49
    $region48: #{tpu_custom_call.1} parent=1 // pred_region
      %138 = dma.done [#allocation6], 64
    $region49: #{tpu_custom_call.1} parent=1 // pred_fallthru
      _
    // Predicated region
    $region50: #{tpu_custom_call.1} parent=1 // pred_check
      _
    $region51: #{tpu_custom_call.1} parent=1 // pred_check_branch
      %140 = sbr.rel (0) target = $region53
    $region52: #{tpu_custom_call.1} parent=1 // pred_region
      %142 = dma.done [#allocation9], 16384
    $region53: #{tpu_custom_call.1} parent=1 // pred_fallthru
      _
    // Predicated region
    $region54: #{tpu_custom_call.1} parent=1 // pred_check
      _
    $region55: #{tpu_custom_call.1} parent=1 // pred_check_branch
      %144 = sbr.rel (0) target = $region57
    $region56: #{tpu_custom_call.1} parent=1 // pred_region
      %146 = dma.done [#allocation9], 64
    $region57: #{tpu_custom_call.1} parent=1 // pred_fallthru
      _
    // Predicated region
    $region58: #{tpu_custom_call.1} parent=1 // pred_check
      _
    $region59: #{tpu_custom_call.1} parent=1 // pred_check_branch
      %148 = sbr.rel (0) target = $region61
    $region60: #{tpu_custom_call.1} parent=1 // pred_region
      %150 = dma.done [#allocation12], 4096
    $region61: #{tpu_custom_call.1} parent=1 // pred_fallthru
      _
    // Predicated region
    $region62: #{tpu_custom_call.1} parent=1 // pred_check
      _
    $region63: #{tpu_custom_call.1} parent=1 // pred_check_branch
      %152 = sbr.rel (0) target = $region65
    $region64: #{tpu_custom_call.1} parent=1 // pred_region
      %154 = dma.done [#allocation12], 16
    $region65: #{tpu_custom_call.1} parent=1 // pred_fallthru
      _
    // Predicated region
    $region66: #{tpu_custom_call.1} parent=1 // pred_check
      _
    $region67: #{tpu_custom_call.1} parent=1 // pred_check_branch
      %156 = sbr.rel (0) target = $region69
    $region68: #{tpu_custom_call.1} parent=1 // pred_region
      %158 = dma.done [#allocation15], 1024
    $region69: #{tpu_custom_call.1} parent=1 // pred_fallthru
      _
    // Predicated region
    $region70: #{tpu_custom_call.1} parent=1 // pred_check
      _
    $region71: #{tpu_custom_call.1} parent=1 // pred_check_branch
      %160 = sbr.rel (0) target = $region73
    $region72: #{tpu_custom_call.1} parent=1 // pred_region
      %162 = dma.done [#allocation15], 16
    $region73: #{tpu_custom_call.1} parent=1 // pred_fallthru
      _
    %v164 = vld [vmem:[#allocation2] sm:$0xff]
    %v165 = vld [vmem:[#allocation2 + $0x8] sm:$0xff]
    %v166 = vld [vmem:[#allocation2 + $0x10] sm:$0xff]
    %v167 = vld [vmem:[#allocation2 + $0x18] sm:$0xff]
    %v168 = vld [vmem:[#allocation2 + $0x20] sm:$0xff]
    %v169 = vld [vmem:[#allocation2 + $0x28] sm:$0xff]
    %v170 = vld [vmem:[#allocation2 + $0x30] sm:$0xff]
    %v171 = vld [vmem:[#allocation2 + $0x38] sm:$0xff]
    %v172 = vld [vmem:[#allocation2 + $0x40] sm:$0xff]
    %v173 = vld [vmem:[#allocation2 + $0x48] sm:$0xff]
    %v174 = vpack.c.bf16 %v164, %v164
    %v175 = vpack.c.bf16 %v165, %v165
    %v176 = vpack.c.bf16 %v166, %v166
    %v177 = vpack.c.bf16 %v167, %v167
    %v178 = vpack.c.bf16 %v168, %v168
    %v179 = vpack.c.bf16 %v169, %v169
    %v180 = vpack.c.bf16 %v170, %v170
    %v181 = vpack.c.bf16 %v171, %v171
    %v182 = vpack.c.bf16 %v172, %v172
    %v183 = vpack.c.bf16 %v173, %v173
    %v184 = vld [vmem:[#allocation5] sm:$0xff]
    %v185 = vld [vmem:[#allocation5 + $0x8] sm:$0xff]
    %v186 = vld [vmem:[#allocation5 + $0x10] sm:$0xff]
    %v187 = vld [vmem:[#allocation5 + $0x18] sm:$0xff]
    %v188 = vld [vmem:[#allocation5 + $0x20] sm:$0xff]
    %v189 = vld [vmem:[#allocation5 + $0x28] sm:$0xff]
    %v190 = vld [vmem:[#allocation5 + $0x30] sm:$0xff]
    %v191 = vld [vmem:[#allocation5 + $0x38] sm:$0xff]
    %v192 = vld [vmem:[#allocation5 + $0x40] sm:$0xff]
    %v193 = vld [vmem:[#allocation5 + $0x48] sm:$0xff]
    %v194 = vld [vmem:[#allocation5 + $0x50] sm:$0xff]
    %v195 = vld [vmem:[#allocation5 + $0x58] sm:$0xff]
    %v196 = vld [vmem:[#allocation5 + $0x60] sm:$0xff]
    %v197 = vld [vmem:[#allocation5 + $0x68] sm:$0xff]
    %v198 = vld [vmem:[#allocation5 + $0x70] sm:$0xff]
    %v199 = vld [vmem:[#allocation5 + $0x78] sm:$0xff]
    %v200 = vld [vmem:[#allocation5 + $0x80] sm:$0xff]
    %v201 = vld [vmem:[#allocation5 + $0x88] sm:$0xff]
    %v202 = vld [vmem:[#allocation5 + $0x90] sm:$0xff]
    %v203 = vld [vmem:[#allocation5 + $0x98] sm:$0xff]
    %v204 = vld [vmem:[#allocation5 + $0xa0] sm:$0xff]
    %v205 = vld [vmem:[#allocation5 + $0xa8] sm:$0xff]
    %v206 = vld [vmem:[#allocation5 + $0xb0] sm:$0xff]
    %v207 = vld [vmem:[#allocation5 + $0xb8] sm:$0xff]
    %v208 = vld [vmem:[#allocation5 + $0xc0] sm:$0xff]
    %v209 = vld [vmem:[#allocation5 + $0xc8] sm:$0xff]
    %v210 = vld [vmem:[#allocation5 + $0xd0] sm:$0xff]
    %v211 = vld [vmem:[#allocation5 + $0xd8] sm:$0xff]
    %v212 = vld [vmem:[#allocation5 + $0xe0] sm:$0xff]
    %v213 = vld [vmem:[#allocation5 + $0xe8] sm:$0xff]
    %v214 = vld [vmem:[#allocation5 + $0xf0] sm:$0xff]
    %v215 = vld [vmem:[#allocation5 + $0xf8] sm:$0xff]
    %v216 = vld [vmem:[#allocation5 + $0x100] sm:$0xff]
    %v217 = vld [vmem:[#allocation5 + $0x108] sm:$0xff]
    %v218 = vld [vmem:[#allocation5 + $0x110] sm:$0xff]
    %v219 = vld [vmem:[#allocation5 + $0x118] sm:$0xff]
    %v220 = vld [vmem:[#allocation5 + $0x120] sm:$0xff]
    %v221 = vld [vmem:[#allocation5 + $0x128] sm:$0xff]
    %v222 = vld [vmem:[#allocation5 + $0x130] sm:$0xff]
    %v223 = vld [vmem:[#allocation5 + $0x138] sm:$0xff]
    %v224 = vld [vmem:[#allocation5 + $0x140] sm:$0xff]
    %v225 = vld [vmem:[#allocation5 + $0x148] sm:$0xff]
    %v226 = vld [vmem:[#allocation5 + $0x150] sm:$0xff]
    %v227 = vld [vmem:[#allocation5 + $0x158] sm:$0xff]
    %v228 = vld [vmem:[#allocation5 + $0x160] sm:$0xff]
    %v229 = vld [vmem:[#allocation5 + $0x168] sm:$0xff]
    %v230 = vld [vmem:[#allocation5 + $0x170] sm:$0xff]
    %v231 = vld [vmem:[#allocation5 + $0x178] sm:$0xff]
    %v232 = vld [vmem:[#allocation5 + $0x180] sm:$0xff]
    %v233 = vld [vmem:[#allocation5 + $0x188] sm:$0xff]
    %v234 = vld [vmem:[#allocation5 + $0x190] sm:$0xff]
    %v235 = vld [vmem:[#allocation5 + $0x198] sm:$0xff]
    %v236 = vld [vmem:[#allocation5 + $0x1a0] sm:$0xff]
    %v237 = vld [vmem:[#allocation5 + $0x1a8] sm:$0xff]
    %v238 = vld [vmem:[#allocation5 + $0x1b0] sm:$0xff]
    %v239 = vld [vmem:[#allocation5 + $0x1b8] sm:$0xff]
    %v240 = vld [vmem:[#allocation5 + $0x1c0] sm:$0xff]
    %v241 = vld [vmem:[#allocation5 + $0x1c8] sm:$0xff]
    %v242 = vld [vmem:[#allocation5 + $0x1d0] sm:$0xff]
    %v243 = vld [vmem:[#allocation5 + $0x1d8] sm:$0xff]
    %v244 = vld [vmem:[#allocation5 + $0x1e0] sm:$0xff]
    %v245 = vld [vmem:[#allocation5 + $0x1e8] sm:$0xff]
    %v246 = vld [vmem:[#allocation5 + $0x1f0] sm:$0xff]
    %v247 = vld [vmem:[#allocation5 + $0x1f8] sm:$0xff]
    %v248 = vld [vmem:[#allocation5 + $0x200] sm:$0xff]
    %v249 = vld [vmem:[#allocation5 + $0x208] sm:$0xff]
    %v250 = vld [vmem:[#allocation5 + $0x210] sm:$0xff]
    %v251 = vld [vmem:[#allocation5 + $0x218] sm:$0xff]
    %v252 = vld [vmem:[#allocation5 + $0x220] sm:$0xff]
    %v253 = vld [vmem:[#allocation5 + $0x228] sm:$0xff]
    %v254 = vld [vmem:[#allocation5 + $0x230] sm:$0xff]
    %v255 = vld [vmem:[#allocation5 + $0x238] sm:$0xff]
    %v256 = vld [vmem:[#allocation5 + $0x240] sm:$0xff]
    %v257 = vld [vmem:[#allocation5 + $0x248] sm:$0xff]
    %v258 = vld [vmem:[#allocation5 + $0x250] sm:$0xff]
    %v259 = vld [vmem:[#allocation5 + $0x258] sm:$0xff]
    %v260 = vld [vmem:[#allocation5 + $0x260] sm:$0xff]
    %v261 = vld [vmem:[#allocation5 + $0x268] sm:$0xff]
    %v262 = vld [vmem:[#allocation5 + $0x270] sm:$0xff]
    %v263 = vld [vmem:[#allocation5 + $0x278] sm:$0xff]
    %v264 = vld [vmem:[#allocation5 + $0x280] sm:$0xff]
    %v265 = vld [vmem:[#allocation5 + $0x288] sm:$0xff]
    %v266 = vld [vmem:[#allocation5 + $0x290] sm:$0xff]
    %v267 = vld [vmem:[#allocation5 + $0x298] sm:$0xff]
    %v268 = vld [vmem:[#allocation5 + $0x2a0] sm:$0xff]
    %v269 = vld [vmem:[#allocation5 + $0x2a8] sm:$0xff]
    %v270 = vld [vmem:[#allocation5 + $0x2b0] sm:$0xff]
    %v271 = vld [vmem:[#allocation5 + $0x2b8] sm:$0xff]
    %v272 = vld [vmem:[#allocation5 + $0x2c0] sm:$0xff]
    %v273 = vld [vmem:[#allocation5 + $0x2c8] sm:$0xff]
    %v274 = vld [vmem:[#allocation5 + $0x2d0] sm:$0xff]
    %v275 = vld [vmem:[#allocation5 + $0x2d8] sm:$0xff]
    %v276 = vld [vmem:[#allocation5 + $0x2e0] sm:$0xff]
    %v277 = vld [vmem:[#allocation5 + $0x2e8] sm:$0xff]
    %v278 = vld [vmem:[#allocation5 + $0x2f0] sm:$0xff]
    %v279 = vld [vmem:[#allocation5 + $0x2f8] sm:$0xff]
    %v280 = vld [vmem:[#allocation5 + $0x300] sm:$0xff]
    %v281 = vld [vmem:[#allocation5 + $0x308] sm:$0xff]
    %v282 = vld [vmem:[#allocation5 + $0x310] sm:$0xff]
    %v283 = vld [vmem:[#allocation5 + $0x318] sm:$0xff]
    %v284 = vld [vmem:[#allocation5 + $0x320] sm:$0xff]
    %v285 = vld [vmem:[#allocation5 + $0x328] sm:$0xff]
    %v286 = vld [vmem:[#allocation5 + $0x330] sm:$0xff]
    %v287 = vld [vmem:[#allocation5 + $0x338] sm:$0xff]
    %v288 = vld [vmem:[#allocation5 + $0x340] sm:$0xff]
    %v289 = vld [vmem:[#allocation5 + $0x348] sm:$0xff]
    %v290 = vld [vmem:[#allocation5 + $0x350] sm:$0xff]
    %v291 = vld [vmem:[#allocation5 + $0x358] sm:$0xff]
    %v292 = vld [vmem:[#allocation5 + $0x360] sm:$0xff]
    %v293 = vld [vmem:[#allocation5 + $0x368] sm:$0xff]
    %v294 = vld [vmem:[#allocation5 + $0x370] sm:$0xff]
    %v295 = vld [vmem:[#allocation5 + $0x378] sm:$0xff]
    %v296 = vld [vmem:[#allocation5 + $0x380] sm:$0xff]
    %v297 = vld [vmem:[#allocation5 + $0x388] sm:$0xff]
    %v298 = vld [vmem:[#allocation5 + $0x390] sm:$0xff]
    %v299 = vld [vmem:[#allocation5 + $0x398] sm:$0xff]
    %v300 = vld [vmem:[#allocation5 + $0x3a0] sm:$0xff]
    %v301 = vld [vmem:[#allocation5 + $0x3a8] sm:$0xff]
    %v302 = vld [vmem:[#allocation5 + $0x3b0] sm:$0xff]
    %v303 = vld [vmem:[#allocation5 + $0x3b8] sm:$0xff]
    %v304 = vld [vmem:[#allocation5 + $0x3c0] sm:$0xff]
    %v305 = vld [vmem:[#allocation5 + $0x3c8] sm:$0xff]
    %v306 = vld [vmem:[#allocation5 + $0x3d0] sm:$0xff]
    %v307 = vld [vmem:[#allocation5 + $0x3d8] sm:$0xff]
    %v308 = vld [vmem:[#allocation5 + $0x3e0] sm:$0xff]
    %v309 = vld [vmem:[#allocation5 + $0x3e8] sm:$0xff]
    %v310 = vld [vmem:[#allocation5 + $0x3f0] sm:$0xff]
    %v311 = vld [vmem:[#allocation5 + $0x3f8] sm:$0xff]
    %v312 = vld [vmem:[#allocation5 + $0x400] sm:$0xff]
    %v313 = vld [vmem:[#allocation5 + $0x408] sm:$0xff]
    %v314 = vld [vmem:[#allocation5 + $0x410] sm:$0xff]
    %v315 = vld [vmem:[#allocation5 + $0x418] sm:$0xff]
    %v316 = vld [vmem:[#allocation5 + $0x420] sm:$0xff]
    %v317 = vld [vmem:[#allocation5 + $0x428] sm:$0xff]
    %v318 = vld [vmem:[#allocation5 + $0x430] sm:$0xff]
    %v319 = vld [vmem:[#allocation5 + $0x438] sm:$0xff]
    %v320 = vld [vmem:[#allocation5 + $0x440] sm:$0xff]
    %v321 = vld [vmem:[#allocation5 + $0x448] sm:$0xff]
    %v322 = vld [vmem:[#allocation5 + $0x450] sm:$0xff]
    %v323 = vld [vmem:[#allocation5 + $0x458] sm:$0xff]
    %v324 = vld [vmem:[#allocation5 + $0x460] sm:$0xff]
    %v325 = vld [vmem:[#allocation5 + $0x468] sm:$0xff]
    %v326 = vld [vmem:[#allocation5 + $0x470] sm:$0xff]
    %v327 = vld [vmem:[#allocation5 + $0x478] sm:$0xff]
    %v328 = vld [vmem:[#allocation5 + $0x480] sm:$0xff]
    %v329 = vld [vmem:[#allocation5 + $0x488] sm:$0xff]
    %v330 = vld [vmem:[#allocation5 + $0x490] sm:$0xff]
    %v331 = vld [vmem:[#allocation5 + $0x498] sm:$0xff]
    %v332 = vld [vmem:[#allocation5 + $0x4a0] sm:$0xff]
    %v333 = vld [vmem:[#allocation5 + $0x4a8] sm:$0xff]
    %v334 = vld [vmem:[#allocation5 + $0x4b0] sm:$0xff]
    %v335 = vld [vmem:[#allocation5 + $0x4b8] sm:$0xff]
    %v336 = vld [vmem:[#allocation5 + $0x4c0] sm:$0xff]
    %v337 = vld [vmem:[#allocation5 + $0x4c8] sm:$0xff]
    %v338 = vld [vmem:[#allocation5 + $0x4d0] sm:$0xff]
    %v339 = vld [vmem:[#allocation5 + $0x4d8] sm:$0xff]
    %v340 = vld [vmem:[#allocation5 + $0x4e0] sm:$0xff]
    %v341 = vld [vmem:[#allocation5 + $0x4e8] sm:$0xff]
    %v342 = vld [vmem:[#allocation5 + $0x4f0] sm:$0xff]
    %v343 = vld [vmem:[#allocation5 + $0x4f8] sm:$0xff]
    %v344 = vld [vmem:[#allocation5 + $0x500] sm:$0xff]
    %v345 = vld [vmem:[#allocation5 + $0x508] sm:$0xff]
    %v346 = vld [vmem:[#allocation5 + $0x510] sm:$0xff]
    %v347 = vld [vmem:[#allocation5 + $0x518] sm:$0xff]
    %v348 = vld [vmem:[#allocation5 + $0x520] sm:$0xff]
    %v349 = vld [vmem:[#allocation5 + $0x528] sm:$0xff]
    %v350 = vld [vmem:[#allocation5 + $0x530] sm:$0xff]
    %v351 = vld [vmem:[#allocation5 + $0x538] sm:$0xff]
    %v352 = vld [vmem:[#allocation5 + $0x540] sm:$0xff]
    %v353 = vld [vmem:[#allocation5 + $0x548] sm:$0xff]
    %v354 = vld [vmem:[#allocation5 + $0x550] sm:$0xff]
    %v355 = vld [vmem:[#allocation5 + $0x558] sm:$0xff]
    %v356 = vld [vmem:[#allocation5 + $0x560] sm:$0xff]
    %v357 = vld [vmem:[#allocation5 + $0x568] sm:$0xff]
    %v358 = vld [vmem:[#allocation5 + $0x570] sm:$0xff]
    %v359 = vld [vmem:[#allocation5 + $0x578] sm:$0xff]
    %v360 = vld [vmem:[#allocation5 + $0x580] sm:$0xff]
    %v361 = vld [vmem:[#allocation5 + $0x588] sm:$0xff]
    %v362 = vld [vmem:[#allocation5 + $0x590] sm:$0xff]
    %v363 = vld [vmem:[#allocation5 + $0x598] sm:$0xff]
    %v364 = vld [vmem:[#allocation5 + $0x5a0] sm:$0xff]
    %v365 = vld [vmem:[#allocation5 + $0x5a8] sm:$0xff]
    %v366 = vld [vmem:[#allocation5 + $0x5b0] sm:$0xff]
    %v367 = vld [vmem:[#allocation5 + $0x5b8] sm:$0xff]
    %v368 = vld [vmem:[#allocation5 + $0x5c0] sm:$0xff]
    %v369 = vld [vmem:[#allocation5 + $0x5c8] sm:$0xff]
    %v370 = vld [vmem:[#allocation5 + $0x5d0] sm:$0xff]
    %v371 = vld [vmem:[#allocation5 + $0x5d8] sm:$0xff]
    %v372 = vld [vmem:[#allocation5 + $0x5e0] sm:$0xff]
    %v373 = vld [vmem:[#allocation5 + $0x5e8] sm:$0xff]
    %v374 = vld [vmem:[#allocation5 + $0x5f0] sm:$0xff]
    %v375 = vld [vmem:[#allocation5 + $0x5f8] sm:$0xff]
    %v376 = vld [vmem:[#allocation5 + $0x600] sm:$0xff]
    %v377 = vld [vmem:[#allocation5 + $0x608] sm:$0xff]
    %v378 = vld [vmem:[#allocation5 + $0x610] sm:$0xff]
    %v379 = vld [vmem:[#allocation5 + $0x618] sm:$0xff]
    %v380 = vld [vmem:[#allocation5 + $0x620] sm:$0xff]
    %v381 = vld [vmem:[#allocation5 + $0x628] sm:$0xff]
    %v382 = vld [vmem:[#allocation5 + $0x630] sm:$0xff]
    %v383 = vld [vmem:[#allocation5 + $0x638] sm:$0xff]
    %v384 = vld [vmem:[#allocation5 + $0x640] sm:$0xff]
    %v385 = vld [vmem:[#allocation5 + $0x648] sm:$0xff]
    %v386 = vld [vmem:[#allocation5 + $0x650] sm:$0xff]
    %v387 = vld [vmem:[#allocation5 + $0x658] sm:$0xff]
    %v388 = vld [vmem:[#allocation5 + $0x660] sm:$0xff]
    %v389 = vld [vmem:[#allocation5 + $0x668] sm:$0xff]
    %v390 = vld [vmem:[#allocation5 + $0x670] sm:$0xff]
    %v391 = vld [vmem:[#allocation5 + $0x678] sm:$0xff]
    %v392 = vld [vmem:[#allocation5 + $0x680] sm:$0xff]
    %v393 = vld [vmem:[#allocation5 + $0x688] sm:$0xff]
    %v394 = vld [vmem:[#allocation5 + $0x690] sm:$0xff]
    %v395 = vld [vmem:[#allocation5 + $0x698] sm:$0xff]
    %v396 = vld [vmem:[#allocation5 + $0x6a0] sm:$0xff]
    %v397 = vld [vmem:[#allocation5 + $0x6a8] sm:$0xff]
    %v398 = vld [vmem:[#allocation5 + $0x6b0] sm:$0xff]
    %v399 = vld [vmem:[#allocation5 + $0x6b8] sm:$0xff]
    %v400 = vld [vmem:[#allocation5 + $0x6c0] sm:$0xff]
    %v401 = vld [vmem:[#allocation5 + $0x6c8] sm:$0xff]
    %v402 = vld [vmem:[#allocation5 + $0x6d0] sm:$0xff]
    %v403 = vld [vmem:[#allocation5 + $0x6d8] sm:$0xff]
    %v404 = vld [vmem:[#allocation5 + $0x6e0] sm:$0xff]
    %v405 = vld [vmem:[#allocation5 + $0x6e8] sm:$0xff]
    %v406 = vld [vmem:[#allocation5 + $0x6f0] sm:$0xff]
    %v407 = vld [vmem:[#allocation5 + $0x6f8] sm:$0xff]
    %v408 = vld [vmem:[#allocation5 + $0x700] sm:$0xff]
    %v409 = vld [vmem:[#allocation5 + $0x708] sm:$0xff]
    %v410 = vld [vmem:[#allocation5 + $0x710] sm:$0xff]
    %v411 = vld [vmem:[#allocation5 + $0x718] sm:$0xff]
    %v412 = vld [vmem:[#allocation5 + $0x720] sm:$0xff]
    %v413 = vld [vmem:[#allocation5 + $0x728] sm:$0xff]
    %v414 = vld [vmem:[#allocation5 + $0x730] sm:$0xff]
    %v415 = vld [vmem:[#allocation5 + $0x738] sm:$0xff]
    %v416 = vld [vmem:[#allocation5 + $0x740] sm:$0xff]
    %v417 = vld [vmem:[#allocation5 + $0x748] sm:$0xff]
    %v418 = vld [vmem:[#allocation5 + $0x750] sm:$0xff]
    %v419 = vld [vmem:[#allocation5 + $0x758] sm:$0xff]
    %v420 = vld [vmem:[#allocation5 + $0x760] sm:$0xff]
    %v421 = vld [vmem:[#allocation5 + $0x768] sm:$0xff]
    %v422 = vld [vmem:[#allocation5 + $0x770] sm:$0xff]
    %v423 = vld [vmem:[#allocation5 + $0x778] sm:$0xff]
    %v424 = vld [vmem:[#allocation5 + $0x780] sm:$0xff]
    %v425 = vld [vmem:[#allocation5 + $0x788] sm:$0xff]
    %v426 = vld [vmem:[#allocation5 + $0x790] sm:$0xff]
    %v427 = vld [vmem:[#allocation5 + $0x798] sm:$0xff]
    %v428 = vld [vmem:[#allocation5 + $0x7a0] sm:$0xff]
    %v429 = vld [vmem:[#allocation5 + $0x7a8] sm:$0xff]
    %v430 = vld [vmem:[#allocation5 + $0x7b0] sm:$0xff]
    %v431 = vld [vmem:[#allocation5 + $0x7b8] sm:$0xff]
    %v432 = vld [vmem:[#allocation5 + $0x7c0] sm:$0xff]
    %v433 = vld [vmem:[#allocation5 + $0x7c8] sm:$0xff]
    %v434 = vld [vmem:[#allocation5 + $0x7d0] sm:$0xff]
    %v435 = vld [vmem:[#allocation5 + $0x7d8] sm:$0xff]
    %v436 = vld [vmem:[#allocation5 + $0x7e0] sm:$0xff]
    %v437 = vld [vmem:[#allocation5 + $0x7e8] sm:$0xff]
    %v438 = vld [vmem:[#allocation5 + $0x7f0] sm:$0xff]
    %v439 = vld [vmem:[#allocation5 + $0x7f8] sm:$0xff]
    %v440 = vld [vmem:[#allocation5 + $0x800] sm:$0xff]
    %v441 = vld [vmem:[#allocation5 + $0x808] sm:$0xff]
    %v442 = vld [vmem:[#allocation5 + $0x810] sm:$0xff]
    %v443 = vld [vmem:[#allocation5 + $0x818] sm:$0xff]
    %v444 = vld [vmem:[#allocation5 + $0x820] sm:$0xff]
    %v445 = vld [vmem:[#allocation5 + $0x828] sm:$0xff]
    %v446 = vld [vmem:[#allocation5 + $0x830] sm:$0xff]
    %v447 = vld [vmem:[#allocation5 + $0x838] sm:$0xff]
    %v448 = vld [vmem:[#allocation5 + $0x840] sm:$0xff]
    %v449 = vld [vmem:[#allocation5 + $0x848] sm:$0xff]
    %v450 = vld [vmem:[#allocation5 + $0x850] sm:$0xff]
    %v451 = vld [vmem:[#allocation5 + $0x858] sm:$0xff]
    %v452 = vld [vmem:[#allocation5 + $0x860] sm:$0xff]
    %v453 = vld [vmem:[#allocation5 + $0x868] sm:$0xff]
    %v454 = vld [vmem:[#allocation5 + $0x870] sm:$0xff]
    %v455 = vld [vmem:[#allocation5 + $0x878] sm:$0xff]
    %v456 = vld [vmem:[#allocation5 + $0x880] sm:$0xff]
    %v457 = vld [vmem:[#allocation5 + $0x888] sm:$0xff]
    %v458 = vld [vmem:[#allocation5 + $0x890] sm:$0xff]
    %v459 = vld [vmem:[#allocation5 + $0x898] sm:$0xff]
    %v460 = vld [vmem:[#allocation5 + $0x8a0] sm:$0xff]
    %v461 = vld [vmem:[#allocation5 + $0x8a8] sm:$0xff]
    %v462 = vld [vmem:[#allocation5 + $0x8b0] sm:$0xff]
    %v463 = vld [vmem:[#allocation5 + $0x8b8] sm:$0xff]
    %v464 = vld [vmem:[#allocation5 + $0x8c0] sm:$0xff]
    %v465 = vld [vmem:[#allocation5 + $0x8c8] sm:$0xff]
    %v466 = vld [vmem:[#allocation5 + $0x8d0] sm:$0xff]
    %v467 = vld [vmem:[#allocation5 + $0x8d8] sm:$0xff]
    %v468 = vld [vmem:[#allocation5 + $0x8e0] sm:$0xff]
    %v469 = vld [vmem:[#allocation5 + $0x8e8] sm:$0xff]
    %v470 = vld [vmem:[#allocation5 + $0x8f0] sm:$0xff]
    %v471 = vld [vmem:[#allocation5 + $0x8f8] sm:$0xff]
    %v472 = vld [vmem:[#allocation5 + $0x900] sm:$0xff]
    %v473 = vld [vmem:[#allocation5 + $0x908] sm:$0xff]
    %v474 = vld [vmem:[#allocation5 + $0x910] sm:$0xff]
    %v475 = vld [vmem:[#allocation5 + $0x918] sm:$0xff]
    %v476 = vld [vmem:[#allocation5 + $0x920] sm:$0xff]
    %v477 = vld [vmem:[#allocation5 + $0x928] sm:$0xff]
    %v478 = vld [vmem:[#allocation5 + $0x930] sm:$0xff]
    %v479 = vld [vmem:[#allocation5 + $0x938] sm:$0xff]
    %v480 = vld [vmem:[#allocation5 + $0x940] sm:$0xff]
    %v481 = vld [vmem:[#allocation5 + $0x948] sm:$0xff]
    %v482 = vld [vmem:[#allocation5 + $0x950] sm:$0xff]
    %v483 = vld [vmem:[#allocation5 + $0x958] sm:$0xff]
    %v484 = vld [vmem:[#allocation5 + $0x960] sm:$0xff]
    %v485 = vld [vmem:[#allocation5 + $0x968] sm:$0xff]
    %v486 = vld [vmem:[#allocation5 + $0x970] sm:$0xff]
    %v487 = vld [vmem:[#allocation5 + $0x978] sm:$0xff]
    %v488 = vld [vmem:[#allocation5 + $0x980] sm:$0xff]
    %v489 = vld [vmem:[#allocation5 + $0x988] sm:$0xff]
    %v490 = vld [vmem:[#allocation5 + $0x990] sm:$0xff]
    %v491 = vld [vmem:[#allocation5 + $0x998] sm:$0xff]
    %v492 = vld [vmem:[#allocation5 + $0x9a0] sm:$0xff]
    %v493 = vld [vmem:[#allocation5 + $0x9a8] sm:$0xff]
    %v494 = vld [vmem:[#allocation5 + $0x9b0] sm:$0xff]
    %v495 = vld [vmem:[#allocation5 + $0x9b8] sm:$0xff]
    %v496 = vld [vmem:[#allocation5 + $0x9c0] sm:$0xff]
    %v497 = vld [vmem:[#allocation5 + $0x9c8] sm:$0xff]
    %v498 = vld [vmem:[#allocation5 + $0x9d0] sm:$0xff]
    %v499 = vld [vmem:[#allocation5 + $0x9d8] sm:$0xff]
    %v500 = vld [vmem:[#allocation5 + $0x9e0] sm:$0xff]
    %v501 = vld [vmem:[#allocation5 + $0x9e8] sm:$0xff]
    %v502 = vld [vmem:[#allocation5 + $0x9f0] sm:$0xff]
    %v503 = vld [vmem:[#allocation5 + $0x9f8] sm:$0xff]
    %v504 = vld [vmem:[#allocation7] sm:$0xf]
    %v506 = vperm.slane %v504, 0
    %v507 = vperm.slane %v504, 1
    %v508 = vperm.slane %v504, 2
    %v509 = vperm.slane %v504, 3
    %v834 = vunpack.c.l.b16 %v184
    %v835 = vunpack.c.h.b16 %v184
    %v836 = vunpack.c.l.b16 %v185
    %v837 = vunpack.c.h.b16 %v185
    %v838 = vunpack.c.l.b16 %v186
    %v839 = vunpack.c.h.b16 %v186
    %v840 = vunpack.c.l.b16 %v187
    %v841 = vunpack.c.h.b16 %v187
    %v842 = vunpack.c.l.b16 %v188
    %v843 = vunpack.c.h.b16 %v188
    %v844 = vunpack.c.l.b16 %v189
    %v845 = vunpack.c.h.b16 %v189
    %v846 = vunpack.c.l.b16 %v190
    %v847 = vunpack.c.h.b16 %v190
    %v848 = vunpack.c.l.b16 %v191
    %v849 = vunpack.c.h.b16 %v191
    %v850 = vunpack.c.l.b16 %v192
    %v851 = vunpack.c.h.b16 %v192
    %v852 = vunpack.c.l.b16 %v193
    %v853 = vunpack.c.h.b16 %v193
    %v854 = vunpack.c.l.b16 %v194
    %v855 = vunpack.c.h.b16 %v194
    %v856 = vunpack.c.l.b16 %v195
    %v857 = vunpack.c.h.b16 %v195
    %v858 = vunpack.c.l.b16 %v196
    %v859 = vunpack.c.h.b16 %v196
    %v860 = vunpack.c.l.b16 %v197
    %v861 = vunpack.c.h.b16 %v197
    %v862 = vunpack.c.l.b16 %v198
    %v863 = vunpack.c.h.b16 %v198
    %v864 = vunpack.c.l.b16 %v199
    %v865 = vunpack.c.h.b16 %v199
    %v866 = vunpack.c.l.b16 %v200
    %v867 = vunpack.c.h.b16 %v200
    %v868 = vunpack.c.l.b16 %v201
    %v869 = vunpack.c.h.b16 %v201
    %v870 = vunpack.c.l.b16 %v202
    %v871 = vunpack.c.h.b16 %v202
    %v872 = vunpack.c.l.b16 %v203
    %v873 = vunpack.c.h.b16 %v203
    %v874 = vunpack.c.l.b16 %v204
    %v875 = vunpack.c.h.b16 %v204
    %v876 = vunpack.c.l.b16 %v205
    %v877 = vunpack.c.h.b16 %v205
    %v878 = vunpack.c.l.b16 %v206
    %v879 = vunpack.c.h.b16 %v206
    %v880 = vunpack.c.l.b16 %v207
    %v881 = vunpack.c.h.b16 %v207
    %v882 = vunpack.c.l.b16 %v208
    %v883 = vunpack.c.h.b16 %v208
    %v884 = vunpack.c.l.b16 %v209
    %v885 = vunpack.c.h.b16 %v209
    %v886 = vunpack.c.l.b16 %v210
    %v887 = vunpack.c.h.b16 %v210
    %v888 = vunpack.c.l.b16 %v211
    %v889 = vunpack.c.h.b16 %v211
    %v890 = vunpack.c.l.b16 %v212
    %v891 = vunpack.c.h.b16 %v212
    %v892 = vunpack.c.l.b16 %v213
    %v893 = vunpack.c.h.b16 %v213
    %v894 = vunpack.c.l.b16 %v214
    %v895 = vunpack.c.h.b16 %v214
    %v896 = vunpack.c.l.b16 %v215
    %v897 = vunpack.c.h.b16 %v215
    %v898 = vunpack.c.l.b16 %v216
    %v899 = vunpack.c.h.b16 %v216
    %v900 = vunpack.c.l.b16 %v217
    %v901 = vunpack.c.h.b16 %v217
    %v902 = vunpack.c.l.b16 %v218
    %v903 = vunpack.c.h.b16 %v218
    %v904 = vunpack.c.l.b16 %v219
    %v905 = vunpack.c.h.b16 %v219
    %v906 = vunpack.c.l.b16 %v220
    %v907 = vunpack.c.h.b16 %v220
    %v908 = vunpack.c.l.b16 %v221
    %v909 = vunpack.c.h.b16 %v221
    %v910 = vunpack.c.l.b16 %v222
    %v911 = vunpack.c.h.b16 %v222
    %v912 = vunpack.c.l.b16 %v223
    %v913 = vunpack.c.h.b16 %v223
    %v914 = vunpack.c.l.b16 %v224
    %v915 = vunpack.c.h.b16 %v224
    %v916 = vunpack.c.l.b16 %v225
    %v917 = vunpack.c.h.b16 %v225
    %v918 = vunpack.c.l.b16 %v226
    %v919 = vunpack.c.h.b16 %v226
    %v920 = vunpack.c.l.b16 %v227
    %v921 = vunpack.c.h.b16 %v227
    %v922 = vunpack.c.l.b16 %v228
    %v923 = vunpack.c.h.b16 %v228
    %v924 = vunpack.c.l.b16 %v229
    %v925 = vunpack.c.h.b16 %v229
    %v926 = vunpack.c.l.b16 %v230
    %v927 = vunpack.c.h.b16 %v230
    %v928 = vunpack.c.l.b16 %v231
    %v929 = vunpack.c.h.b16 %v231
    %v930 = vunpack.c.l.b16 %v232
    %v931 = vunpack.c.h.b16 %v232
    %v932 = vunpack.c.l.b16 %v233
    %v933 = vunpack.c.h.b16 %v233
    %v934 = vunpack.c.l.b16 %v234
    %v935 = vunpack.c.h.b16 %v234
    %v936 = vunpack.c.l.b16 %v235
    %v937 = vunpack.c.h.b16 %v235
    %v938 = vunpack.c.l.b16 %v236
    %v939 = vunpack.c.h.b16 %v236
    %v940 = vunpack.c.l.b16 %v237
    %v941 = vunpack.c.h.b16 %v237
    %v942 = vunpack.c.l.b16 %v238
    %v943 = vunpack.c.h.b16 %v238
    %v944 = vunpack.c.l.b16 %v239
    %v945 = vunpack.c.h.b16 %v239
    %v946 = vunpack.c.l.b16 %v240
    %v947 = vunpack.c.h.b16 %v240
    %v948 = vunpack.c.l.b16 %v241
    %v949 = vunpack.c.h.b16 %v241
    %v950 = vunpack.c.l.b16 %v242
    %v951 = vunpack.c.h.b16 %v242
    %v952 = vunpack.c.l.b16 %v243
    %v953 = vunpack.c.h.b16 %v243
    %v954 = vunpack.c.l.b16 %v244
    %v955 = vunpack.c.h.b16 %v244
    %v956 = vunpack.c.l.b16 %v245
    %v957 = vunpack.c.h.b16 %v245
    %v958 = vunpack.c.l.b16 %v246
    %v959 = vunpack.c.h.b16 %v246
    %v960 = vunpack.c.l.b16 %v247
    %v961 = vunpack.c.h.b16 %v247
    %v962 = vunpack.c.l.b16 %v248
    %v963 = vunpack.c.h.b16 %v248
    %v964 = vunpack.c.l.b16 %v249
    %v965 = vunpack.c.h.b16 %v249
    %v966 = vunpack.c.l.b16 %v250
    %v967 = vunpack.c.h.b16 %v250
    %v968 = vunpack.c.l.b16 %v251
    %v969 = vunpack.c.h.b16 %v251
    %v970 = vunpack.c.l.b16 %v252
    %v971 = vunpack.c.h.b16 %v252
    %v972 = vunpack.c.l.b16 %v253
    %v973 = vunpack.c.h.b16 %v253
    %v974 = vunpack.c.l.b16 %v254
    %v975 = vunpack.c.h.b16 %v254
    %v976 = vunpack.c.l.b16 %v255
    %v977 = vunpack.c.h.b16 %v255
    %v978 = vunpack.c.l.b16 %v256
    %v979 = vunpack.c.h.b16 %v256
    %v980 = vunpack.c.l.b16 %v257
    %v981 = vunpack.c.h.b16 %v257
    %v982 = vunpack.c.l.b16 %v258
    %v983 = vunpack.c.h.b16 %v258
    %v984 = vunpack.c.l.b16 %v259
    %v985 = vunpack.c.h.b16 %v259
    %v986 = vunpack.c.l.b16 %v260
    %v987 = vunpack.c.h.b16 %v260
    %v988 = vunpack.c.l.b16 %v261
    %v989 = vunpack.c.h.b16 %v261
    %v990 = vunpack.c.l.b16 %v262
    %v991 = vunpack.c.h.b16 %v262
    %v992 = vunpack.c.l.b16 %v263
    %v993 = vunpack.c.h.b16 %v263
    %v994 = vunpack.c.l.b16 %v264
    %v995 = vunpack.c.h.b16 %v264
    %v996 = vunpack.c.l.b16 %v265
    %v997 = vunpack.c.h.b16 %v265
    %v998 = vunpack.c.l.b16 %v266
    %v999 = vunpack.c.h.b16 %v266
    %v1000 = vunpack.c.l.b16 %v267
    %v1001 = vunpack.c.h.b16 %v267
    %v1002 = vunpack.c.l.b16 %v268
    %v1003 = vunpack.c.h.b16 %v268
    %v1004 = vunpack.c.l.b16 %v269
    %v1005 = vunpack.c.h.b16 %v269
    %v1006 = vunpack.c.l.b16 %v270
    %v1007 = vunpack.c.h.b16 %v270
    %v1008 = vunpack.c.l.b16 %v271
    %v1009 = vunpack.c.h.b16 %v271
    %v1010 = vunpack.c.l.b16 %v272
    %v1011 = vunpack.c.h.b16 %v272
    %v1012 = vunpack.c.l.b16 %v273
    %v1013 = vunpack.c.h.b16 %v273
    %v1014 = vunpack.c.l.b16 %v274
    %v1015 = vunpack.c.h.b16 %v274
    %v1016 = vunpack.c.l.b16 %v275
    %v1017 = vunpack.c.h.b16 %v275
    %v1018 = vunpack.c.l.b16 %v276
    %v1019 = vunpack.c.h.b16 %v276
    %v1020 = vunpack.c.l.b16 %v277
    %v1021 = vunpack.c.h.b16 %v277
    %v1022 = vunpack.c.l.b16 %v278
    %v1023 = vunpack.c.h.b16 %v278
    %v1024 = vunpack.c.l.b16 %v279
    %v1025 = vunpack.c.h.b16 %v279
    %v1026 = vunpack.c.l.b16 %v280
    %v1027 = vunpack.c.h.b16 %v280
    %v1028 = vunpack.c.l.b16 %v281
    %v1029 = vunpack.c.h.b16 %v281
    %v1030 = vunpack.c.l.b16 %v282
    %v1031 = vunpack.c.h.b16 %v282
    %v1032 = vunpack.c.l.b16 %v283
    %v1033 = vunpack.c.h.b16 %v283
    %v1034 = vunpack.c.l.b16 %v284
    %v1035 = vunpack.c.h.b16 %v284
    %v1036 = vunpack.c.l.b16 %v285
    %v1037 = vunpack.c.h.b16 %v285
    %v1038 = vunpack.c.l.b16 %v286
    %v1039 = vunpack.c.h.b16 %v286
    %v1040 = vunpack.c.l.b16 %v287
    %v1041 = vunpack.c.h.b16 %v287
    %v1042 = vunpack.c.l.b16 %v288
    %v1043 = vunpack.c.h.b16 %v288
    %v1044 = vunpack.c.l.b16 %v289
    %v1045 = vunpack.c.h.b16 %v289
    %v1046 = vunpack.c.l.b16 %v290
    %v1047 = vunpack.c.h.b16 %v290
    %v1048 = vunpack.c.l.b16 %v291
    %v1049 = vunpack.c.h.b16 %v291
    %v1050 = vunpack.c.l.b16 %v292
    %v1051 = vunpack.c.h.b16 %v292
    %v1052 = vunpack.c.l.b16 %v293
    %v1053 = vunpack.c.h.b16 %v293
    %v1054 = vunpack.c.l.b16 %v294
    %v1055 = vunpack.c.h.b16 %v294
    %v1056 = vunpack.c.l.b16 %v295
    %v1057 = vunpack.c.h.b16 %v295
    %v1058 = vunpack.c.l.b16 %v296
    %v1059 = vunpack.c.h.b16 %v296
    %v1060 = vunpack.c.l.b16 %v297
    %v1061 = vunpack.c.h.b16 %v297
    %v1062 = vunpack.c.l.b16 %v298
    %v1063 = vunpack.c.h.b16 %v298
    %v1064 = vunpack.c.l.b16 %v299
    %v1065 = vunpack.c.h.b16 %v299
    %v1066 = vunpack.c.l.b16 %v300
    %v1067 = vunpack.c.h.b16 %v300
    %v1068 = vunpack.c.l.b16 %v301
    %v1069 = vunpack.c.h.b16 %v301
    %v1070 = vunpack.c.l.b16 %v302
    %v1071 = vunpack.c.h.b16 %v302
    %v1072 = vunpack.c.l.b16 %v303
    %v1073 = vunpack.c.h.b16 %v303
    %v1074 = vunpack.c.l.b16 %v304
    %v1075 = vunpack.c.h.b16 %v304
    %v1076 = vunpack.c.l.b16 %v305
    %v1077 = vunpack.c.h.b16 %v305
    %v1078 = vunpack.c.l.b16 %v306
    %v1079 = vunpack.c.h.b16 %v306
    %v1080 = vunpack.c.l.b16 %v307
    %v1081 = vunpack.c.h.b16 %v307
    %v1082 = vunpack.c.l.b16 %v308
    %v1083 = vunpack.c.h.b16 %v308
    %v1084 = vunpack.c.l.b16 %v309
    %v1085 = vunpack.c.h.b16 %v309
    %v1086 = vunpack.c.l.b16 %v310
    %v1087 = vunpack.c.h.b16 %v310
    %v1088 = vunpack.c.l.b16 %v311
    %v1089 = vunpack.c.h.b16 %v311
    %v1090 = vunpack.c.l.b16 %v312
    %v1091 = vunpack.c.h.b16 %v312
    %v1092 = vunpack.c.l.b16 %v313
    %v1093 = vunpack.c.h.b16 %v313
    %v1094 = vunpack.c.l.b16 %v314
    %v1095 = vunpack.c.h.b16 %v314
    %v1096 = vunpack.c.l.b16 %v315
    %v1097 = vunpack.c.h.b16 %v315
    %v1098 = vunpack.c.l.b16 %v316
    %v1099 = vunpack.c.h.b16 %v316
    %v1100 = vunpack.c.l.b16 %v317
    %v1101 = vunpack.c.h.b16 %v317
    %v1102 = vunpack.c.l.b16 %v318
    %v1103 = vunpack.c.h.b16 %v318
    %v1104 = vunpack.c.l.b16 %v319
    %v1105 = vunpack.c.h.b16 %v319
    %v1106 = vunpack.c.l.b16 %v320
    %v1107 = vunpack.c.h.b16 %v320
    %v1108 = vunpack.c.l.b16 %v321
    %v1109 = vunpack.c.h.b16 %v321
    %v1110 = vunpack.c.l.b16 %v322
    %v1111 = vunpack.c.h.b16 %v322
    %v1112 = vunpack.c.l.b16 %v323
    %v1113 = vunpack.c.h.b16 %v323
    %v1114 = vunpack.c.l.b16 %v324
    %v1115 = vunpack.c.h.b16 %v324
    %v1116 = vunpack.c.l.b16 %v325
    %v1117 = vunpack.c.h.b16 %v325
    %v1118 = vunpack.c.l.b16 %v326
    %v1119 = vunpack.c.h.b16 %v326
    %v1120 = vunpack.c.l.b16 %v327
    %v1121 = vunpack.c.h.b16 %v327
    %v1122 = vunpack.c.l.b16 %v328
    %v1123 = vunpack.c.h.b16 %v328
    %v1124 = vunpack.c.l.b16 %v329
    %v1125 = vunpack.c.h.b16 %v329
    %v1126 = vunpack.c.l.b16 %v330
    %v1127 = vunpack.c.h.b16 %v330
    %v1128 = vunpack.c.l.b16 %v331
    %v1129 = vunpack.c.h.b16 %v331
    %v1130 = vunpack.c.l.b16 %v332
    %v1131 = vunpack.c.h.b16 %v332
    %v1132 = vunpack.c.l.b16 %v333
    %v1133 = vunpack.c.h.b16 %v333
    %v1134 = vunpack.c.l.b16 %v334
    %v1135 = vunpack.c.h.b16 %v334
    %v1136 = vunpack.c.l.b16 %v335
    %v1137 = vunpack.c.h.b16 %v335
    %v1138 = vunpack.c.l.b16 %v336
    %v1139 = vunpack.c.h.b16 %v336
    %v1140 = vunpack.c.l.b16 %v337
    %v1141 = vunpack.c.h.b16 %v337
    %v1142 = vunpack.c.l.b16 %v338
    %v1143 = vunpack.c.h.b16 %v338
    %v1144 = vunpack.c.l.b16 %v339
    %v1145 = vunpack.c.h.b16 %v339
    %v1146 = vunpack.c.l.b16 %v340
    %v1147 = vunpack.c.h.b16 %v340
    %v1148 = vunpack.c.l.b16 %v341
    %v1149 = vunpack.c.h.b16 %v341
    %v1150 = vunpack.c.l.b16 %v342
    %v1151 = vunpack.c.h.b16 %v342
    %v1152 = vunpack.c.l.b16 %v343
    %v1153 = vunpack.c.h.b16 %v343
    %v1154 = vunpack.c.l.b16 %v344
    %v1155 = vunpack.c.h.b16 %v344
    %v1156 = vunpack.c.l.b16 %v345
    %v1157 = vunpack.c.h.b16 %v345
    %v1158 = vunpack.c.l.b16 %v346
    %v1159 = vunpack.c.h.b16 %v346
    %v1160 = vunpack.c.l.b16 %v347
    %v1161 = vunpack.c.h.b16 %v347
    %v1162 = vunpack.c.l.b16 %v348
    %v1163 = vunpack.c.h.b16 %v348
    %v1164 = vunpack.c.l.b16 %v349
    %v1165 = vunpack.c.h.b16 %v349
    %v1166 = vunpack.c.l.b16 %v350
    %v1167 = vunpack.c.h.b16 %v350
    %v1168 = vunpack.c.l.b16 %v351
    %v1169 = vunpack.c.h.b16 %v351
    %v1170 = vunpack.c.l.b16 %v352
    %v1171 = vunpack.c.h.b16 %v352
    %v1172 = vunpack.c.l.b16 %v353
    %v1173 = vunpack.c.h.b16 %v353
    %v1174 = vunpack.c.l.b16 %v354
    %v1175 = vunpack.c.h.b16 %v354
    %v1176 = vunpack.c.l.b16 %v355
    %v1177 = vunpack.c.h.b16 %v355
    %v1178 = vunpack.c.l.b16 %v356
    %v1179 = vunpack.c.h.b16 %v356
    %v1180 = vunpack.c.l.b16 %v357
    %v1181 = vunpack.c.h.b16 %v357
    %v1182 = vunpack.c.l.b16 %v358
    %v1183 = vunpack.c.h.b16 %v358
    %v1184 = vunpack.c.l.b16 %v359
    %v1185 = vunpack.c.h.b16 %v359
    %v1186 = vunpack.c.l.b16 %v360
    %v1187 = vunpack.c.h.b16 %v360
    %v1188 = vunpack.c.l.b16 %v361
    %v1189 = vunpack.c.h.b16 %v361
    %v1190 = vunpack.c.l.b16 %v362
    %v1191 = vunpack.c.h.b16 %v362
    %v1192 = vunpack.c.l.b16 %v363
    %v1193 = vunpack.c.h.b16 %v363
    %v1194 = vunpack.c.l.b16 %v364
    %v1195 = vunpack.c.h.b16 %v364
    %v1196 = vunpack.c.l.b16 %v365
    %v1197 = vunpack.c.h.b16 %v365
    %v1198 = vunpack.c.l.b16 %v366
    %v1199 = vunpack.c.h.b16 %v366
    %v1200 = vunpack.c.l.b16 %v367
    %v1201 = vunpack.c.h.b16 %v367
    %v1202 = vunpack.c.l.b16 %v368
    %v1203 = vunpack.c.h.b16 %v368
    %v1204 = vunpack.c.l.b16 %v369
    %v1205 = vunpack.c.h.b16 %v369
    %v1206 = vunpack.c.l.b16 %v370
    %v1207 = vunpack.c.h.b16 %v370
    %v1208 = vunpack.c.l.b16 %v371
    %v1209 = vunpack.c.h.b16 %v371
    %v1210 = vunpack.c.l.b16 %v372
    %v1211 = vunpack.c.h.b16 %v372
    %v1212 = vunpack.c.l.b16 %v373
    %v1213 = vunpack.c.h.b16 %v373
    %v1214 = vunpack.c.l.b16 %v374
    %v1215 = vunpack.c.h.b16 %v374
    %v1216 = vunpack.c.l.b16 %v375
    %v1217 = vunpack.c.h.b16 %v375
    %v1218 = vunpack.c.l.b16 %v376
    %v1219 = vunpack.c.h.b16 %v376
    %v1220 = vunpack.c.l.b16 %v377
    %v1221 = vunpack.c.h.b16 %v377
    %v1222 = vunpack.c.l.b16 %v378
    %v1223 = vunpack.c.h.b16 %v378
    %v1224 = vunpack.c.l.b16 %v379
    %v1225 = vunpack.c.h.b16 %v379
    %v1226 = vunpack.c.l.b16 %v380
    %v1227 = vunpack.c.h.b16 %v380
    %v1228 = vunpack.c.l.b16 %v381
    %v1229 = vunpack.c.h.b16 %v381
    %v1230 = vunpack.c.l.b16 %v382
    %v1231 = vunpack.c.h.b16 %v382
    %v1232 = vunpack.c.l.b16 %v383
    %v1233 = vunpack.c.h.b16 %v383
    %v1234 = vunpack.c.l.b16 %v384
    %v1235 = vunpack.c.h.b16 %v384
    %v1236 = vunpack.c.l.b16 %v385
    %v1237 = vunpack.c.h.b16 %v385
    %v1238 = vunpack.c.l.b16 %v386
    %v1239 = vunpack.c.h.b16 %v386
    %v1240 = vunpack.c.l.b16 %v387
    %v1241 = vunpack.c.h.b16 %v387
    %v1242 = vunpack.c.l.b16 %v388
    %v1243 = vunpack.c.h.b16 %v388
    %v1244 = vunpack.c.l.b16 %v389
    %v1245 = vunpack.c.h.b16 %v389
    %v1246 = vunpack.c.l.b16 %v390
    %v1247 = vunpack.c.h.b16 %v390
    %v1248 = vunpack.c.l.b16 %v391
    %v1249 = vunpack.c.h.b16 %v391
    %v1250 = vunpack.c.l.b16 %v392
    %v1251 = vunpack.c.h.b16 %v392
    %v1252 = vunpack.c.l.b16 %v393
    %v1253 = vunpack.c.h.b16 %v393
    %v1254 = vunpack.c.l.b16 %v394
    %v1255 = vunpack.c.h.b16 %v394
    %v1256 = vunpack.c.l.b16 %v395
    %v1257 = vunpack.c.h.b16 %v395
    %v1258 = vunpack.c.l.b16 %v396
    %v1259 = vunpack.c.h.b16 %v396
    %v1260 = vunpack.c.l.b16 %v397
    %v1261 = vunpack.c.h.b16 %v397
    %v1262 = vunpack.c.l.b16 %v398
    %v1263 = vunpack.c.h.b16 %v398
    %v1264 = vunpack.c.l.b16 %v399
    %v1265 = vunpack.c.h.b16 %v399
    %v1266 = vunpack.c.l.b16 %v400
    %v1267 = vunpack.c.h.b16 %v400
    %v1268 = vunpack.c.l.b16 %v401
    %v1269 = vunpack.c.h.b16 %v401
    %v1270 = vunpack.c.l.b16 %v402
    %v1271 = vunpack.c.h.b16 %v402
    %v1272 = vunpack.c.l.b16 %v403
    %v1273 = vunpack.c.h.b16 %v403
    %v1274 = vunpack.c.l.b16 %v404
    %v1275 = vunpack.c.h.b16 %v404
    %v1276 = vunpack.c.l.b16 %v405
    %v1277 = vunpack.c.h.b16 %v405
    %v1278 = vunpack.c.l.b16 %v406
    %v1279 = vunpack.c.h.b16 %v406
    %v1280 = vunpack.c.l.b16 %v407
    %v1281 = vunpack.c.h.b16 %v407
    %v1282 = vunpack.c.l.b16 %v408
    %v1283 = vunpack.c.h.b16 %v408
    %v1284 = vunpack.c.l.b16 %v409
    %v1285 = vunpack.c.h.b16 %v409
    %v1286 = vunpack.c.l.b16 %v410
    %v1287 = vunpack.c.h.b16 %v410
    %v1288 = vunpack.c.l.b16 %v411
    %v1289 = vunpack.c.h.b16 %v411
    %v1290 = vunpack.c.l.b16 %v412
    %v1291 = vunpack.c.h.b16 %v412
    %v1292 = vunpack.c.l.b16 %v413
    %v1293 = vunpack.c.h.b16 %v413
    %v1294 = vunpack.c.l.b16 %v414
    %v1295 = vunpack.c.h.b16 %v414
    %v1296 = vunpack.c.l.b16 %v415
    %v1297 = vunpack.c.h.b16 %v415
    %v1298 = vunpack.c.l.b16 %v416
    %v1299 = vunpack.c.h.b16 %v416
    %v1300 = vunpack.c.l.b16 %v417
    %v1301 = vunpack.c.h.b16 %v417
    %v1302 = vunpack.c.l.b16 %v418
    %v1303 = vunpack.c.h.b16 %v418
    %v1304 = vunpack.c.l.b16 %v419
    %v1305 = vunpack.c.h.b16 %v419
    %v1306 = vunpack.c.l.b16 %v420
    %v1307 = vunpack.c.h.b16 %v420
    %v1308 = vunpack.c.l.b16 %v421
    %v1309 = vunpack.c.h.b16 %v421
    %v1310 = vunpack.c.l.b16 %v422
    %v1311 = vunpack.c.h.b16 %v422
    %v1312 = vunpack.c.l.b16 %v423
    %v1313 = vunpack.c.h.b16 %v423
    %v1314 = vunpack.c.l.b16 %v424
    %v1315 = vunpack.c.h.b16 %v424
    %v1316 = vunpack.c.l.b16 %v425
    %v1317 = vunpack.c.h.b16 %v425
    %v1318 = vunpack.c.l.b16 %v426
    %v1319 = vunpack.c.h.b16 %v426
    %v1320 = vunpack.c.l.b16 %v427
    %v1321 = vunpack.c.h.b16 %v427
    %v1322 = vunpack.c.l.b16 %v428
    %v1323 = vunpack.c.h.b16 %v428
    %v1324 = vunpack.c.l.b16 %v429
    %v1325 = vunpack.c.h.b16 %v429
    %v1326 = vunpack.c.l.b16 %v430
    %v1327 = vunpack.c.h.b16 %v430
    %v1328 = vunpack.c.l.b16 %v431
    %v1329 = vunpack.c.h.b16 %v431
    %v1330 = vunpack.c.l.b16 %v432
    %v1331 = vunpack.c.h.b16 %v432
    %v1332 = vunpack.c.l.b16 %v433
    %v1333 = vunpack.c.h.b16 %v433
    %v1334 = vunpack.c.l.b16 %v434
    %v1335 = vunpack.c.h.b16 %v434
    %v1336 = vunpack.c.l.b16 %v435
    %v1337 = vunpack.c.h.b16 %v435
    %v1338 = vunpack.c.l.b16 %v436
    %v1339 = vunpack.c.h.b16 %v436
    %v1340 = vunpack.c.l.b16 %v437
    %v1341 = vunpack.c.h.b16 %v437
    %v1342 = vunpack.c.l.b16 %v438
    %v1343 = vunpack.c.h.b16 %v438
    %v1344 = vunpack.c.l.b16 %v439
    %v1345 = vunpack.c.h.b16 %v439
    %v1346 = vunpack.c.l.b16 %v440
    %v1347 = vunpack.c.h.b16 %v440
    %v1348 = vunpack.c.l.b16 %v441
    %v1349 = vunpack.c.h.b16 %v441
    %v1350 = vunpack.c.l.b16 %v442
    %v1351 = vunpack.c.h.b16 %v442
    %v1352 = vunpack.c.l.b16 %v443
    %v1353 = vunpack.c.h.b16 %v443
    %v1354 = vunpack.c.l.b16 %v444
    %v1355 = vunpack.c.h.b16 %v444
    %v1356 = vunpack.c.l.b16 %v445
    %v1357 = vunpack.c.h.b16 %v445
    %v1358 = vunpack.c.l.b16 %v446
    %v1359 = vunpack.c.h.b16 %v446
    %v1360 = vunpack.c.l.b16 %v447
    %v1361 = vunpack.c.h.b16 %v447
    %v1362 = vunpack.c.l.b16 %v448
    %v1363 = vunpack.c.h.b16 %v448
    %v1364 = vunpack.c.l.b16 %v449
    %v1365 = vunpack.c.h.b16 %v449
    %v1366 = vunpack.c.l.b16 %v450
    %v1367 = vunpack.c.h.b16 %v450
    %v1368 = vunpack.c.l.b16 %v451
    %v1369 = vunpack.c.h.b16 %v451
    %v1370 = vunpack.c.l.b16 %v452
    %v1371 = vunpack.c.h.b16 %v452
    %v1372 = vunpack.c.l.b16 %v453
    %v1373 = vunpack.c.h.b16 %v453
    %v1374 = vunpack.c.l.b16 %v454
    %v1375 = vunpack.c.h.b16 %v454
    %v1376 = vunpack.c.l.b16 %v455
    %v1377 = vunpack.c.h.b16 %v455
    %v1378 = vunpack.c.l.b16 %v456
    %v1379 = vunpack.c.h.b16 %v456
    %v1380 = vunpack.c.l.b16 %v457
    %v1381 = vunpack.c.h.b16 %v457
    %v1382 = vunpack.c.l.b16 %v458
    %v1383 = vunpack.c.h.b16 %v458
    %v1384 = vunpack.c.l.b16 %v459
    %v1385 = vunpack.c.h.b16 %v459
    %v1386 = vunpack.c.l.b16 %v460
    %v1387 = vunpack.c.h.b16 %v460
    %v1388 = vunpack.c.l.b16 %v461
    %v1389 = vunpack.c.h.b16 %v461
    %v1390 = vunpack.c.l.b16 %v462
    %v1391 = vunpack.c.h.b16 %v462
    %v1392 = vunpack.c.l.b16 %v463
    %v1393 = vunpack.c.h.b16 %v463
    %v1394 = vunpack.c.l.b16 %v464
    %v1395 = vunpack.c.h.b16 %v464
    %v1396 = vunpack.c.l.b16 %v465
    %v1397 = vunpack.c.h.b16 %v465
    %v1398 = vunpack.c.l.b16 %v466
    %v1399 = vunpack.c.h.b16 %v466
    %v1400 = vunpack.c.l.b16 %v467
    %v1401 = vunpack.c.h.b16 %v467
    %v1402 = vunpack.c.l.b16 %v468
    %v1403 = vunpack.c.h.b16 %v468
    %v1404 = vunpack.c.l.b16 %v469
    %v1405 = vunpack.c.h.b16 %v469
    %v1406 = vunpack.c.l.b16 %v470
    %v1407 = vunpack.c.h.b16 %v470
    %v1408 = vunpack.c.l.b16 %v471
    %v1409 = vunpack.c.h.b16 %v471
    %v1410 = vunpack.c.l.b16 %v472
    %v1411 = vunpack.c.h.b16 %v472
    %v1412 = vunpack.c.l.b16 %v473
    %v1413 = vunpack.c.h.b16 %v473
    %v1414 = vunpack.c.l.b16 %v474
    %v1415 = vunpack.c.h.b16 %v474
    %v1416 = vunpack.c.l.b16 %v475
    %v1417 = vunpack.c.h.b16 %v475
    %v1418 = vunpack.c.l.b16 %v476
    %v1419 = vunpack.c.h.b16 %v476
    %v1420 = vunpack.c.l.b16 %v477
    %v1421 = vunpack.c.h.b16 %v477
    %v1422 = vunpack.c.l.b16 %v478
    %v1423 = vunpack.c.h.b16 %v478
    %v1424 = vunpack.c.l.b16 %v479
    %v1425 = vunpack.c.h.b16 %v479
    %v1426 = vunpack.c.l.b16 %v480
    %v1427 = vunpack.c.h.b16 %v480
    %v1428 = vunpack.c.l.b16 %v481
    %v1429 = vunpack.c.h.b16 %v481
    %v1430 = vunpack.c.l.b16 %v482
    %v1431 = vunpack.c.h.b16 %v482
    %v1432 = vunpack.c.l.b16 %v483
    %v1433 = vunpack.c.h.b16 %v483
    %v1434 = vunpack.c.l.b16 %v484
    %v1435 = vunpack.c.h.b16 %v484
    %v1436 = vunpack.c.l.b16 %v485
    %v1437 = vunpack.c.h.b16 %v485
    %v1438 = vunpack.c.l.b16 %v486
    %v1439 = vunpack.c.h.b16 %v486
    %v1440 = vunpack.c.l.b16 %v487
    %v1441 = vunpack.c.h.b16 %v487
    %v1442 = vunpack.c.l.b16 %v488
    %v1443 = vunpack.c.h.b16 %v488
    %v1444 = vunpack.c.l.b16 %v489
    %v1445 = vunpack.c.h.b16 %v489
    %v1446 = vunpack.c.l.b16 %v490
    %v1447 = vunpack.c.h.b16 %v490
    %v1448 = vunpack.c.l.b16 %v491
    %v1449 = vunpack.c.h.b16 %v491
    %v1450 = vunpack.c.l.b16 %v492
    %v1451 = vunpack.c.h.b16 %v492
    %v1452 = vunpack.c.l.b16 %v493
    %v1453 = vunpack.c.h.b16 %v493
    %v1454 = vunpack.c.l.b16 %v494
    %v1455 = vunpack.c.h.b16 %v494
    %v1456 = vunpack.c.l.b16 %v495
    %v1457 = vunpack.c.h.b16 %v495
    %v1458 = vunpack.c.l.b16 %v496
    %v1459 = vunpack.c.h.b16 %v496
    %v1460 = vunpack.c.l.b16 %v497
    %v1461 = vunpack.c.h.b16 %v497
    %v1462 = vunpack.c.l.b16 %v498
    %v1463 = vunpack.c.h.b16 %v498
    %v1464 = vunpack.c.l.b16 %v499
    %v1465 = vunpack.c.h.b16 %v499
    %v1466 = vunpack.c.l.b16 %v500
    %v1467 = vunpack.c.h.b16 %v500
    %v1468 = vunpack.c.l.b16 %v501
    %v1469 = vunpack.c.h.b16 %v501
    %v1470 = vunpack.c.l.b16 %v502
    %v1471 = vunpack.c.h.b16 %v502
    %v1472 = vunpack.c.l.b16 %v503
    %v1473 = vunpack.c.h.b16 %v503
    %v1474 = vpack.c.b16 %v838, %v834
    %v1475 = vpack.c.b16 %v839, %v835
    %v1476 = vpack.c.b16 %v840, %v836
    %v1477 = vpack.c.b16 %v841, %v837
    %v1478 = vpack.c.b16 %v846, %v842
    %v1479 = vpack.c.b16 %v847, %v843
    %v1480 = vpack.c.b16 %v848, %v844
    %v1481 = vpack.c.b16 %v849, %v845
    %v1482 = vpack.c.b16 %v854, %v850
    %v1483 = vpack.c.b16 %v855, %v851
    %v1484 = vpack.c.b16 %v856, %v852
    %v1485 = vpack.c.b16 %v857, %v853
    %v1486 = vpack.c.b16 %v862, %v858
    %v1487 = vpack.c.b16 %v863, %v859
    %v1488 = vpack.c.b16 %v864, %v860
    %v1489 = vpack.c.b16 %v865, %v861
    %v1490 = vpack.c.b16 %v870, %v866
    %v1491 = vpack.c.b16 %v871, %v867
    %v1492 = vpack.c.b16 %v872, %v868
    %v1493 = vpack.c.b16 %v873, %v869
    %v1494 = vpack.c.b16 %v878, %v874
    %v1495 = vpack.c.b16 %v879, %v875
    %v1496 = vpack.c.b16 %v880, %v876
    %v1497 = vpack.c.b16 %v881, %v877
    %v1498 = vpack.c.b16 %v886, %v882
    %v1499 = vpack.c.b16 %v887, %v883
    %v1500 = vpack.c.b16 %v888, %v884
    %v1501 = vpack.c.b16 %v889, %v885
    %v1502 = vpack.c.b16 %v894, %v890
    %v1503 = vpack.c.b16 %v895, %v891
    %v1504 = vpack.c.b16 %v896, %v892
    %v1505 = vpack.c.b16 %v897, %v893
    %v1506 = vpack.c.b16 %v902, %v898
    %v1507 = vpack.c.b16 %v903, %v899
    %v1508 = vpack.c.b16 %v904, %v900
    %v1509 = vpack.c.b16 %v905, %v901
    %v1510 = vpack.c.b16 %v910, %v906
    %v1511 = vpack.c.b16 %v911, %v907
    %v1512 = vpack.c.b16 %v912, %v908
    %v1513 = vpack.c.b16 %v913, %v909
    %v1514 = vpack.c.b16 %v918, %v914
    %v1515 = vpack.c.b16 %v919, %v915
    %v1516 = vpack.c.b16 %v920, %v916
    %v1517 = vpack.c.b16 %v921, %v917
    %v1518 = vpack.c.b16 %v926, %v922
    %v1519 = vpack.c.b16 %v927, %v923
    %v1520 = vpack.c.b16 %v928, %v924
    %v1521 = vpack.c.b16 %v929, %v925
    %v1522 = vpack.c.b16 %v934, %v930
    %v1523 = vpack.c.b16 %v935, %v931
    %v1524 = vpack.c.b16 %v936, %v932
    %v1525 = vpack.c.b16 %v937, %v933
    %v1526 = vpack.c.b16 %v942, %v938
    %v1527 = vpack.c.b16 %v943, %v939
    %v1528 = vpack.c.b16 %v944, %v940
    %v1529 = vpack.c.b16 %v945, %v941
    %v1530 = vpack.c.b16 %v950, %v946
    %v1531 = vpack.c.b16 %v951, %v947
    %v1532 = vpack.c.b16 %v952, %v948
    %v1533 = vpack.c.b16 %v953, %v949
    %v1534 = vpack.c.b16 %v958, %v954
    %v1535 = vpack.c.b16 %v959, %v955
    %v1536 = vpack.c.b16 %v960, %v956
    %v1537 = vpack.c.b16 %v961, %v957
    %v1538 = vpack.c.b16 %v966, %v962
    %v1539 = vpack.c.b16 %v967, %v963
    %v1540 = vpack.c.b16 %v968, %v964
    %v1541 = vpack.c.b16 %v969, %v965
    %v1542 = vpack.c.b16 %v974, %v970
    %v1543 = vpack.c.b16 %v975, %v971
    %v1544 = vpack.c.b16 %v976, %v972
    %v1545 = vpack.c.b16 %v977, %v973
    %v1546 = vpack.c.b16 %v982, %v978
    %v1547 = vpack.c.b16 %v983, %v979
    %v1548 = vpack.c.b16 %v984, %v980
    %v1549 = vpack.c.b16 %v985, %v981
    %v1550 = vpack.c.b16 %v990, %v986
    %v1551 = vpack.c.b16 %v991, %v987
    %v1552 = vpack.c.b16 %v992, %v988
    %v1553 = vpack.c.b16 %v993, %v989
    %v1554 = vpack.c.b16 %v998, %v994
    %v1555 = vpack.c.b16 %v999, %v995
    %v1556 = vpack.c.b16 %v1000, %v996
    %v1557 = vpack.c.b16 %v1001, %v997
    %v1558 = vpack.c.b16 %v1006, %v1002
    %v1559 = vpack.c.b16 %v1007, %v1003
    %v1560 = vpack.c.b16 %v1008, %v1004
    %v1561 = vpack.c.b16 %v1009, %v1005
    %v1562 = vpack.c.b16 %v1014, %v1010
    %v1563 = vpack.c.b16 %v1015, %v1011
    %v1564 = vpack.c.b16 %v1016, %v1012
    %v1565 = vpack.c.b16 %v1017, %v1013
    %v1566 = vpack.c.b16 %v1022, %v1018
    %v1567 = vpack.c.b16 %v1023, %v1019
    %v1568 = vpack.c.b16 %v1024, %v1020
    %v1569 = vpack.c.b16 %v1025, %v1021
    %v1570 = vpack.c.b16 %v1030, %v1026
    %v1571 = vpack.c.b16 %v1031, %v1027
    %v1572 = vpack.c.b16 %v1032, %v1028
    %v1573 = vpack.c.b16 %v1033, %v1029
    %v1574 = vpack.c.b16 %v1038, %v1034
    %v1575 = vpack.c.b16 %v1039, %v1035
    %v1576 = vpack.c.b16 %v1040, %v1036
    %v1577 = vpack.c.b16 %v1041, %v1037
    %v1578 = vpack.c.b16 %v1046, %v1042
    %v1579 = vpack.c.b16 %v1047, %v1043
    %v1580 = vpack.c.b16 %v1048, %v1044
    %v1581 = vpack.c.b16 %v1049, %v1045
    %v1582 = vpack.c.b16 %v1054, %v1050
    %v1583 = vpack.c.b16 %v1055, %v1051
    %v1584 = vpack.c.b16 %v1056, %v1052
    %v1585 = vpack.c.b16 %v1057, %v1053
    %v1586 = vpack.c.b16 %v1062, %v1058
    %v1587 = vpack.c.b16 %v1063, %v1059
    %v1588 = vpack.c.b16 %v1064, %v1060
    %v1589 = vpack.c.b16 %v1065, %v1061
    %v1590 = vpack.c.b16 %v1070, %v1066
    %v1591 = vpack.c.b16 %v1071, %v1067
    %v1592 = vpack.c.b16 %v1072, %v1068
    %v1593 = vpack.c.b16 %v1073, %v1069
    %v1594 = vpack.c.b16 %v1078, %v1074
    %v1595 = vpack.c.b16 %v1079, %v1075
    %v1596 = vpack.c.b16 %v1080, %v1076
    %v1597 = vpack.c.b16 %v1081, %v1077
    %v1598 = vpack.c.b16 %v1086, %v1082
    %v1599 = vpack.c.b16 %v1087, %v1083
    %v1600 = vpack.c.b16 %v1088, %v1084
    %v1601 = vpack.c.b16 %v1089, %v1085
    %v1602 = vpack.c.b16 %v1094, %v1090
    %v1603 = vpack.c.b16 %v1095, %v1091
    %v1604 = vpack.c.b16 %v1096, %v1092
    %v1605 = vpack.c.b16 %v1097, %v1093
    %v1606 = vpack.c.b16 %v1102, %v1098
    %v1607 = vpack.c.b16 %v1103, %v1099
    %v1608 = vpack.c.b16 %v1104, %v1100
    %v1609 = vpack.c.b16 %v1105, %v1101
    %v1610 = vpack.c.b16 %v1110, %v1106
    %v1611 = vpack.c.b16 %v1111, %v1107
    %v1612 = vpack.c.b16 %v1112, %v1108
    %v1613 = vpack.c.b16 %v1113, %v1109
    %v1614 = vpack.c.b16 %v1118, %v1114
    %v1615 = vpack.c.b16 %v1119, %v1115
    %v1616 = vpack.c.b16 %v1120, %v1116
    %v1617 = vpack.c.b16 %v1121, %v1117
    %v1618 = vpack.c.b16 %v1126, %v1122
    %v1619 = vpack.c.b16 %v1127, %v1123
    %v1620 = vpack.c.b16 %v1128, %v1124
    %v1621 = vpack.c.b16 %v1129, %v1125
    %v1622 = vpack.c.b16 %v1134, %v1130
    %v1623 = vpack.c.b16 %v1135, %v1131
    %v1624 = vpack.c.b16 %v1136, %v1132
    %v1625 = vpack.c.b16 %v1137, %v1133
    %v1626 = vpack.c.b16 %v1142, %v1138
    %v1627 = vpack.c.b16 %v1143, %v1139
    %v1628 = vpack.c.b16 %v1144, %v1140
    %v1629 = vpack.c.b16 %v1145, %v1141
    %v1630 = vpack.c.b16 %v1150, %v1146
    %v1631 = vpack.c.b16 %v1151, %v1147
    %v1632 = vpack.c.b16 %v1152, %v1148
    %v1633 = vpack.c.b16 %v1153, %v1149
    %v1634 = vpack.c.b16 %v1158, %v1154
    %v1635 = vpack.c.b16 %v1159, %v1155
    %v1636 = vpack.c.b16 %v1160, %v1156
    %v1637 = vpack.c.b16 %v1161, %v1157
    %v1638 = vpack.c.b16 %v1166, %v1162
    %v1639 = vpack.c.b16 %v1167, %v1163
    %v1640 = vpack.c.b16 %v1168, %v1164
    %v1641 = vpack.c.b16 %v1169, %v1165
    %v1642 = vpack.c.b16 %v1174, %v1170
    %v1643 = vpack.c.b16 %v1175, %v1171
    %v1644 = vpack.c.b16 %v1176, %v1172
    %v1645 = vpack.c.b16 %v1177, %v1173
    %v1646 = vpack.c.b16 %v1182, %v1178
    %v1647 = vpack.c.b16 %v1183, %v1179
    %v1648 = vpack.c.b16 %v1184, %v1180
    %v1649 = vpack.c.b16 %v1185, %v1181
    %v1650 = vpack.c.b16 %v1190, %v1186
    %v1651 = vpack.c.b16 %v1191, %v1187
    %v1652 = vpack.c.b16 %v1192, %v1188
    %v1653 = vpack.c.b16 %v1193, %v1189
    %v1654 = vpack.c.b16 %v1198, %v1194
    %v1655 = vpack.c.b16 %v1199, %v1195
    %v1656 = vpack.c.b16 %v1200, %v1196
    %v1657 = vpack.c.b16 %v1201, %v1197
    %v1658 = vpack.c.b16 %v1206, %v1202
    %v1659 = vpack.c.b16 %v1207, %v1203
    %v1660 = vpack.c.b16 %v1208, %v1204
    %v1661 = vpack.c.b16 %v1209, %v1205
    %v1662 = vpack.c.b16 %v1214, %v1210
    %v1663 = vpack.c.b16 %v1215, %v1211
    %v1664 = vpack.c.b16 %v1216, %v1212
    %v1665 = vpack.c.b16 %v1217, %v1213
    %v1666 = vpack.c.b16 %v1222, %v1218
    %v1667 = vpack.c.b16 %v1223, %v1219
    %v1668 = vpack.c.b16 %v1224, %v1220
    %v1669 = vpack.c.b16 %v1225, %v1221
    %v1670 = vpack.c.b16 %v1230, %v1226
    %v1671 = vpack.c.b16 %v1231, %v1227
    %v1672 = vpack.c.b16 %v1232, %v1228
    %v1673 = vpack.c.b16 %v1233, %v1229
    %v1674 = vpack.c.b16 %v1238, %v1234
    %v1675 = vpack.c.b16 %v1239, %v1235
    %v1676 = vpack.c.b16 %v1240, %v1236
    %v1677 = vpack.c.b16 %v1241, %v1237
    %v1678 = vpack.c.b16 %v1246, %v1242
    %v1679 = vpack.c.b16 %v1247, %v1243
    %v1680 = vpack.c.b16 %v1248, %v1244
    %v1681 = vpack.c.b16 %v1249, %v1245
    %v1682 = vpack.c.b16 %v1254, %v1250
    %v1683 = vpack.c.b16 %v1255, %v1251
    %v1684 = vpack.c.b16 %v1256, %v1252
    %v1685 = vpack.c.b16 %v1257, %v1253
    %v1686 = vpack.c.b16 %v1262, %v1258
    %v1687 = vpack.c.b16 %v1263, %v1259
    %v1688 = vpack.c.b16 %v1264, %v1260
    %v1689 = vpack.c.b16 %v1265, %v1261
    %v1690 = vpack.c.b16 %v1270, %v1266
    %v1691 = vpack.c.b16 %v1271, %v1267
    %v1692 = vpack.c.b16 %v1272, %v1268
    %v1693 = vpack.c.b16 %v1273, %v1269
    %v1694 = vpack.c.b16 %v1278, %v1274
    %v1695 = vpack.c.b16 %v1279, %v1275
    %v1696 = vpack.c.b16 %v1280, %v1276
    %v1697 = vpack.c.b16 %v1281, %v1277
    %v1698 = vpack.c.b16 %v1286, %v1282
    %v1699 = vpack.c.b16 %v1287, %v1283
    %v1700 = vpack.c.b16 %v1288, %v1284
    %v1701 = vpack.c.b16 %v1289, %v1285
    %v1702 = vpack.c.b16 %v1294, %v1290
    %v1703 = vpack.c.b16 %v1295, %v1291
    %v1704 = vpack.c.b16 %v1296, %v1292
    %v1705 = vpack.c.b16 %v1297, %v1293
    %v1706 = vpack.c.b16 %v1302, %v1298
    %v1707 = vpack.c.b16 %v1303, %v1299
    %v1708 = vpack.c.b16 %v1304, %v1300
    %v1709 = vpack.c.b16 %v1305, %v1301
    %v1710 = vpack.c.b16 %v1310, %v1306
    %v1711 = vpack.c.b16 %v1311, %v1307
    %v1712 = vpack.c.b16 %v1312, %v1308
    %v1713 = vpack.c.b16 %v1313, %v1309
    %v1714 = vpack.c.b16 %v1318, %v1314
    %v1715 = vpack.c.b16 %v1319, %v1315
    %v1716 = vpack.c.b16 %v1320, %v1316
    %v1717 = vpack.c.b16 %v1321, %v1317
    %v1718 = vpack.c.b16 %v1326, %v1322
    %v1719 = vpack.c.b16 %v1327, %v1323
    %v1720 = vpack.c.b16 %v1328, %v1324
    %v1721 = vpack.c.b16 %v1329, %v1325
    %v1722 = vpack.c.b16 %v1334, %v1330
    %v1723 = vpack.c.b16 %v1335, %v1331
    %v1724 = vpack.c.b16 %v1336, %v1332
    %v1725 = vpack.c.b16 %v1337, %v1333
    %v1726 = vpack.c.b16 %v1342, %v1338
    %v1727 = vpack.c.b16 %v1343, %v1339
    %v1728 = vpack.c.b16 %v1344, %v1340
    %v1729 = vpack.c.b16 %v1345, %v1341
    %v1730 = vpack.c.b16 %v1350, %v1346
    %v1731 = vpack.c.b16 %v1351, %v1347
    %v1732 = vpack.c.b16 %v1352, %v1348
    %v1733 = vpack.c.b16 %v1353, %v1349
    %v1734 = vpack.c.b16 %v1358, %v1354
    %v1735 = vpack.c.b16 %v1359, %v1355
    %v1736 = vpack.c.b16 %v1360, %v1356
    %v1737 = vpack.c.b16 %v1361, %v1357
    %v1738 = vpack.c.b16 %v1366, %v1362
    %v1739 = vpack.c.b16 %v1367, %v1363
    %v1740 = vpack.c.b16 %v1368, %v1364
    %v1741 = vpack.c.b16 %v1369, %v1365
    %v1742 = vpack.c.b16 %v1374, %v1370
    %v1743 = vpack.c.b16 %v1375, %v1371
    %v1744 = vpack.c.b16 %v1376, %v1372
    %v1745 = vpack.c.b16 %v1377, %v1373
    %v1746 = vpack.c.b16 %v1382, %v1378
    %v1747 = vpack.c.b16 %v1383, %v1379
    %v1748 = vpack.c.b16 %v1384, %v1380
    %v1749 = vpack.c.b16 %v1385, %v1381
    %v1750 = vpack.c.b16 %v1390, %v1386
    %v1751 = vpack.c.b16 %v1391, %v1387
    %v1752 = vpack.c.b16 %v1392, %v1388
    %v1753 = vpack.c.b16 %v1393, %v1389
    %v1754 = vpack.c.b16 %v1398, %v1394
    %v1755 = vpack.c.b16 %v1399, %v1395
    %v1756 = vpack.c.b16 %v1400, %v1396
    %v1757 = vpack.c.b16 %v1401, %v1397
    %v1758 = vpack.c.b16 %v1406, %v1402
    %v1759 = vpack.c.b16 %v1407, %v1403
    %v1760 = vpack.c.b16 %v1408, %v1404
    %v1761 = vpack.c.b16 %v1409, %v1405
    %v1762 = vpack.c.b16 %v1414, %v1410
    %v1763 = vpack.c.b16 %v1415, %v1411
    %v1764 = vpack.c.b16 %v1416, %v1412
    %v1765 = vpack.c.b16 %v1417, %v1413
    %v1766 = vpack.c.b16 %v1422, %v1418
    %v1767 = vpack.c.b16 %v1423, %v1419
    %v1768 = vpack.c.b16 %v1424, %v1420
    %v1769 = vpack.c.b16 %v1425, %v1421
    %v1770 = vpack.c.b16 %v1430, %v1426
    %v1771 = vpack.c.b16 %v1431, %v1427
    %v1772 = vpack.c.b16 %v1432, %v1428
    %v1773 = vpack.c.b16 %v1433, %v1429
    %v1774 = vpack.c.b16 %v1438, %v1434
    %v1775 = vpack.c.b16 %v1439, %v1435
    %v1776 = vpack.c.b16 %v1440, %v1436
    %v1777 = vpack.c.b16 %v1441, %v1437
    %v1778 = vpack.c.b16 %v1446, %v1442
    %v1779 = vpack.c.b16 %v1447, %v1443
    %v1780 = vpack.c.b16 %v1448, %v1444
    %v1781 = vpack.c.b16 %v1449, %v1445
    %v1782 = vpack.c.b16 %v1454, %v1450
    %v1783 = vpack.c.b16 %v1455, %v1451
    %v1784 = vpack.c.b16 %v1456, %v1452
    %v1785 = vpack.c.b16 %v1457, %v1453
    %v1786 = vpack.c.b16 %v1462, %v1458
    %v1787 = vpack.c.b16 %v1463, %v1459
    %v1788 = vpack.c.b16 %v1464, %v1460
    %v1789 = vpack.c.b16 %v1465, %v1461
    %v1790 = vpack.c.b16 %v1470, %v1466
    %v1791 = vpack.c.b16 %v1471, %v1467
    %v1792 = vpack.c.b16 %v1472, %v1468
    %v1793 = vpack.c.b16 %v1473, %v1469
    %2114 = vmatpush.bf16.msra.mxu0 %v1502
    %2115 = vmatpush.bf16.msra.mxu0 %v1498
    %2116 = vmatpush.bf16.msra.mxu0 %v1494
    %2117 = vmatpush.bf16.msra.mxu0 %v1490
    %2118 = vmatpush.bf16.msra.mxu0 %v1486
    %2119 = vmatpush.bf16.msra.mxu0 %v1482
    %2120 = vmatpush.bf16.msra.mxu0 %v1478
    %2121 = vmatpush.bf16.msra.mxu0 %v1474
    %2122 = vmatmul.bf16.gmra.mxu0 %v174
    %v2123 = vpop.f32.mrf.mxu0
    %v2124 = vadd.f32 %v506, %v2123
    %v2125 = vpop.f32.mrf.mxu0
    %2126 = vdwg.mxu0
    %2127 = vmatpush.bf16.msra.mxu0 %v1534
    %2128 = vmatpush.bf16.msra.mxu0 %v1530
    %2129 = vmatpush.bf16.msra.mxu0 %v1526
    %2130 = vmatpush.bf16.msra.mxu0 %v1522
    %2131 = vmatpush.bf16.msra.mxu0 %v1518
    %2132 = vmatpush.bf16.msra.mxu0 %v1514
    %2133 = vmatpush.bf16.msra.mxu0 %v1510
    %2134 = vmatpush.bf16.msra.mxu0 %v1506
    %2135 = vmatmul.bf16.gmra.mxu0 %v175
    %v2136 = vpop.f32.mrf.mxu0
    %v2137 = vadd.f32 %v2124, %v2136
    %v2138 = vpop.f32.mrf.mxu0
    %2139 = vdwg.mxu0
    %2140 = vmatpush.bf16.msra.mxu0 %v1566
    %2141 = vmatpush.bf16.msra.mxu0 %v1562
    %2142 = vmatpush.bf16.msra.mxu0 %v1558
    %2143 = vmatpush.bf16.msra.mxu0 %v1554
    %2144 = vmatpush.bf16.msra.mxu0 %v1550
    %2145 = vmatpush.bf16.msra.mxu0 %v1546
    %2146 = vmatpush.bf16.msra.mxu0 %v1542
    %2147 = vmatpush.bf16.msra.mxu0 %v1538
    %2148 = vmatmul.bf16.gmra.mxu0 %v176
    %v2149 = vpop.f32.mrf.mxu0
    %v2150 = vadd.f32 %v2137, %v2149
    %v2151 = vpop.f32.mrf.mxu0
    %2152 = vdwg.mxu0
    %2153 = vmatpush.bf16.msra.mxu0 %v1598
    %2154 = vmatpush.bf16.msra.mxu0 %v1594
    %2155 = vmatpush.bf16.msra.mxu0 %v1590
    %2156 = vmatpush.bf16.msra.mxu0 %v1586
    %2157 = vmatpush.bf16.msra.mxu0 %v1582
    %2158 = vmatpush.bf16.msra.mxu0 %v1578
    %2159 = vmatpush.bf16.msra.mxu0 %v1574
    %2160 = vmatpush.bf16.msra.mxu0 %v1570
    %2161 = vmatmul.bf16.gmra.mxu0 %v177
    %v2162 = vpop.f32.mrf.mxu0
    %v2163 = vadd.f32 %v2150, %v2162
    %v2164 = vpop.f32.mrf.mxu0
    %2165 = vdwg.mxu0
    %2166 = vmatpush.bf16.msra.mxu0 %v1630
    %2167 = vmatpush.bf16.msra.mxu0 %v1626
    %2168 = vmatpush.bf16.msra.mxu0 %v1622
    %2169 = vmatpush.bf16.msra.mxu0 %v1618
    %2170 = vmatpush.bf16.msra.mxu0 %v1614
    %2171 = vmatpush.bf16.msra.mxu0 %v1610
    %2172 = vmatpush.bf16.msra.mxu0 %v1606
    %2173 = vmatpush.bf16.msra.mxu0 %v1602
    %2174 = vmatmul.bf16.gmra.mxu0 %v178
    %v2175 = vpop.f32.mrf.mxu0
    %v2176 = vadd.f32 %v2163, %v2175
    %v2177 = vpop.f32.mrf.mxu0
    %2178 = vdwg.mxu0
    %2179 = vmatpush.bf16.msra.mxu0 %v1662
    %2180 = vmatpush.bf16.msra.mxu0 %v1658
    %2181 = vmatpush.bf16.msra.mxu0 %v1654
    %2182 = vmatpush.bf16.msra.mxu0 %v1650
    %2183 = vmatpush.bf16.msra.mxu0 %v1646
    %2184 = vmatpush.bf16.msra.mxu0 %v1642
    %2185 = vmatpush.bf16.msra.mxu0 %v1638
    %2186 = vmatpush.bf16.msra.mxu0 %v1634
    %2187 = vmatmul.bf16.gmra.mxu0 %v179
    %v2188 = vpop.f32.mrf.mxu0
    %v2189 = vadd.f32 %v2176, %v2188
    %v2190 = vpop.f32.mrf.mxu0
    %2191 = vdwg.mxu0
    %2192 = vmatpush.bf16.msra.mxu0 %v1694
    %2193 = vmatpush.bf16.msra.mxu0 %v1690
    %2194 = vmatpush.bf16.msra.mxu0 %v1686
    %2195 = vmatpush.bf16.msra.mxu0 %v1682
    %2196 = vmatpush.bf16.msra.mxu0 %v1678
    %2197 = vmatpush.bf16.msra.mxu0 %v1674
    %2198 = vmatpush.bf16.msra.mxu0 %v1670
    %2199 = vmatpush.bf16.msra.mxu0 %v1666
    %2200 = vmatmul.bf16.gmra.mxu0 %v180
    %v2201 = vpop.f32.mrf.mxu0
    %v2202 = vadd.f32 %v2189, %v2201
    %v2203 = vpop.f32.mrf.mxu0
    %2204 = vdwg.mxu0
    %2205 = vmatpush.bf16.msra.mxu0 %v1726
    %2206 = vmatpush.bf16.msra.mxu0 %v1722
    %2207 = vmatpush.bf16.msra.mxu0 %v1718
    %2208 = vmatpush.bf16.msra.mxu0 %v1714
    %2209 = vmatpush.bf16.msra.mxu0 %v1710
    %2210 = vmatpush.bf16.msra.mxu0 %v1706
    %2211 = vmatpush.bf16.msra.mxu0 %v1702
    %2212 = vmatpush.bf16.msra.mxu0 %v1698
    %2213 = vmatmul.bf16.gmra.mxu0 %v181
    %v2214 = vpop.f32.mrf.mxu0
    %v2215 = vadd.f32 %v2202, %v2214
    %v2216 = vpop.f32.mrf.mxu0
    %2217 = vdwg.mxu0
    %2218 = vmatpush.bf16.msra.mxu0 %v1758
    %2219 = vmatpush.bf16.msra.mxu0 %v1754
    %2220 = vmatpush.bf16.msra.mxu0 %v1750
    %2221 = vmatpush.bf16.msra.mxu0 %v1746
    %2222 = vmatpush.bf16.msra.mxu0 %v1742
    %2223 = vmatpush.bf16.msra.mxu0 %v1738
    %2224 = vmatpush.bf16.msra.mxu0 %v1734
    %2225 = vmatpush.bf16.msra.mxu0 %v1730
    %2226 = vmatmul.bf16.gmra.mxu0 %v182
    %v2227 = vpop.f32.mrf.mxu0
    %v2228 = vadd.f32 %v2215, %v2227
    %v2229 = vpop.f32.mrf.mxu0
    %2230 = vdwg.mxu0
    %2231 = vmatpush.bf16.msra.mxu0 %v1790
    %2232 = vmatpush.bf16.msra.mxu0 %v1786
    %2233 = vmatpush.bf16.msra.mxu0 %v1782
    %2234 = vmatpush.bf16.msra.mxu0 %v1778
    %2235 = vmatpush.bf16.msra.mxu0 %v1774
    %2236 = vmatpush.bf16.msra.mxu0 %v1770
    %2237 = vmatpush.bf16.msra.mxu0 %v1766
    %2238 = vmatpush.bf16.msra.mxu0 %v1762
    %2239 = vmatmul.bf16.gmra.mxu0 %v183
    %v2240 = vpop.f32.mrf.mxu0
    %v2241 = vadd.f32 %v2228, %v2240
    %v2242 = vpop.f32.mrf.mxu0
    %2243 = vdwg.mxu0
    %2244 = vmatpush.bf16.msra.mxu0 %v1503
    %2245 = vmatpush.bf16.msra.mxu0 %v1499
    %2246 = vmatpush.bf16.msra.mxu0 %v1495
    %2247 = vmatpush.bf16.msra.mxu0 %v1491
    %2248 = vmatpush.bf16.msra.mxu0 %v1487
    %2249 = vmatpush.bf16.msra.mxu0 %v1483
    %2250 = vmatpush.bf16.msra.mxu0 %v1479
    %2251 = vmatpush.bf16.msra.mxu0 %v1475
    %2252 = vmatmul.bf16.gmra.mxu0 %v174
    %v2253 = vpop.f32.mrf.mxu0
    %v2254 = vadd.f32 %v507, %v2253
    %v2255 = vpop.f32.mrf.mxu0
    %2256 = vdwg.mxu0
    %2257 = vmatpush.bf16.msra.mxu0 %v1535
    %2258 = vmatpush.bf16.msra.mxu0 %v1531
    %2259 = vmatpush.bf16.msra.mxu0 %v1527
    %2260 = vmatpush.bf16.msra.mxu0 %v1523
    %2261 = vmatpush.bf16.msra.mxu0 %v1519
    %2262 = vmatpush.bf16.msra.mxu0 %v1515
    %2263 = vmatpush.bf16.msra.mxu0 %v1511
    %2264 = vmatpush.bf16.msra.mxu0 %v1507
    %2265 = vmatmul.bf16.gmra.mxu0 %v175
    %v2266 = vpop.f32.mrf.mxu0
    %v2267 = vadd.f32 %v2254, %v2266
    %v2268 = vpop.f32.mrf.mxu0
    %2269 = vdwg.mxu0
    %2270 = vmatpush.bf16.msra.mxu0 %v1567
    %2271 = vmatpush.bf16.msra.mxu0 %v1563
    %2272 = vmatpush.bf16.msra.mxu0 %v1559
    %2273 = vmatpush.bf16.msra.mxu0 %v1555
    %2274 = vmatpush.bf16.msra.mxu0 %v1551
    %2275 = vmatpush.bf16.msra.mxu0 %v1547
    %2276 = vmatpush.bf16.msra.mxu0 %v1543
    %2277 = vmatpush.bf16.msra.mxu0 %v1539
    %2278 = vmatmul.bf16.gmra.mxu0 %v176
    %v2279 = vpop.f32.mrf.mxu0
    %v2280 = vadd.f32 %v2267, %v2279
    %v2281 = vpop.f32.mrf.mxu0
    %2282 = vdwg.mxu0
    %2283 = vmatpush.bf16.msra.mxu0 %v1599
    %2284 = vmatpush.bf16.msra.mxu0 %v1595
    %2285 = vmatpush.bf16.msra.mxu0 %v1591
    %2286 = vmatpush.bf16.msra.mxu0 %v1587
    %2287 = vmatpush.bf16.msra.mxu0 %v1583
    %2288 = vmatpush.bf16.msra.mxu0 %v1579
    %2289 = vmatpush.bf16.msra.mxu0 %v1575
    %2290 = vmatpush.bf16.msra.mxu0 %v1571
    %2291 = vmatmul.bf16.gmra.mxu0 %v177
    %v2292 = vpop.f32.mrf.mxu0
    %v2293 = vadd.f32 %v2280, %v2292
    %v2294 = vpop.f32.mrf.mxu0
    %2295 = vdwg.mxu0
    %2296 = vmatpush.bf16.msra.mxu0 %v1631
    %2297 = vmatpush.bf16.msra.mxu0 %v1627
    %2298 = vmatpush.bf16.msra.mxu0 %v1623
    %2299 = vmatpush.bf16.msra.mxu0 %v1619
    %2300 = vmatpush.bf16.msra.mxu0 %v1615
    %2301 = vmatpush.bf16.msra.mxu0 %v1611
    %2302 = vmatpush.bf16.msra.mxu0 %v1607
    %2303 = vmatpush.bf16.msra.mxu0 %v1603
    %2304 = vmatmul.bf16.gmra.mxu0 %v178
    %v2305 = vpop.f32.mrf.mxu0
    %v2306 = vadd.f32 %v2293, %v2305
    %v2307 = vpop.f32.mrf.mxu0
    %2308 = vdwg.mxu0
    %2309 = vmatpush.bf16.msra.mxu0 %v1663
    %2310 = vmatpush.bf16.msra.mxu0 %v1659
    %2311 = vmatpush.bf16.msra.mxu0 %v1655
    %2312 = vmatpush.bf16.msra.mxu0 %v1651
    %2313 = vmatpush.bf16.msra.mxu0 %v1647
    %2314 = vmatpush.bf16.msra.mxu0 %v1643
    %2315 = vmatpush.bf16.msra.mxu0 %v1639
    %2316 = vmatpush.bf16.msra.mxu0 %v1635
    %2317 = vmatmul.bf16.gmra.mxu0 %v179
    %v2318 = vpop.f32.mrf.mxu0
    %v2319 = vadd.f32 %v2306, %v2318
    %v2320 = vpop.f32.mrf.mxu0
    %2321 = vdwg.mxu0
    %2322 = vmatpush.bf16.msra.mxu0 %v1695
    %2323 = vmatpush.bf16.msra.mxu0 %v1691
    %2324 = vmatpush.bf16.msra.mxu0 %v1687
    %2325 = vmatpush.bf16.msra.mxu0 %v1683
    %2326 = vmatpush.bf16.msra.mxu0 %v1679
    %2327 = vmatpush.bf16.msra.mxu0 %v1675
    %2328 = vmatpush.bf16.msra.mxu0 %v1671
    %2329 = vmatpush.bf16.msra.mxu0 %v1667
    %2330 = vmatmul.bf16.gmra.mxu0 %v180
    %v2331 = vpop.f32.mrf.mxu0
    %v2332 = vadd.f32 %v2319, %v2331
    %v2333 = vpop.f32.mrf.mxu0
    %2334 = vdwg.mxu0
    %2335 = vmatpush.bf16.msra.mxu0 %v1727
    %2336 = vmatpush.bf16.msra.mxu0 %v1723
    %2337 = vmatpush.bf16.msra.mxu0 %v1719
    %2338 = vmatpush.bf16.msra.mxu0 %v1715
    %2339 = vmatpush.bf16.msra.mxu0 %v1711
    %2340 = vmatpush.bf16.msra.mxu0 %v1707
    %2341 = vmatpush.bf16.msra.mxu0 %v1703
    %2342 = vmatpush.bf16.msra.mxu0 %v1699
    %2343 = vmatmul.bf16.gmra.mxu0 %v181
    %v2344 = vpop.f32.mrf.mxu0
    %v2345 = vadd.f32 %v2332, %v2344
    %v2346 = vpop.f32.mrf.mxu0
    %2347 = vdwg.mxu0
    %2348 = vmatpush.bf16.msra.mxu0 %v1759
    %2349 = vmatpush.bf16.msra.mxu0 %v1755
    %2350 = vmatpush.bf16.msra.mxu0 %v1751
    %2351 = vmatpush.bf16.msra.mxu0 %v1747
    %2352 = vmatpush.bf16.msra.mxu0 %v1743
    %2353 = vmatpush.bf16.msra.mxu0 %v1739
    %2354 = vmatpush.bf16.msra.mxu0 %v1735
    %2355 = vmatpush.bf16.msra.mxu0 %v1731
    %2356 = vmatmul.bf16.gmra.mxu0 %v182
    %v2357 = vpop.f32.mrf.mxu0
    %v2358 = vadd.f32 %v2345, %v2357
    %v2359 = vpop.f32.mrf.mxu0
    %2360 = vdwg.mxu0
    %2361 = vmatpush.bf16.msra.mxu0 %v1791
    %2362 = vmatpush.bf16.msra.mxu0 %v1787
    %2363 = vmatpush.bf16.msra.mxu0 %v1783
    %2364 = vmatpush.bf16.msra.mxu0 %v1779
    %2365 = vmatpush.bf16.msra.mxu0 %v1775
    %2366 = vmatpush.bf16.msra.mxu0 %v1771
    %2367 = vmatpush.bf16.msra.mxu0 %v1767
    %2368 = vmatpush.bf16.msra.mxu0 %v1763
    %2369 = vmatmul.bf16.gmra.mxu0 %v183
    %v2370 = vpop.f32.mrf.mxu0
    %v2371 = vadd.f32 %v2358, %v2370
    %v2372 = vpop.f32.mrf.mxu0
    %2373 = vdwg.mxu0
    %2374 = vmatpush.bf16.msra.mxu0 %v1504
    %2375 = vmatpush.bf16.msra.mxu0 %v1500
    %2376 = vmatpush.bf16.msra.mxu0 %v1496
    %2377 = vmatpush.bf16.msra.mxu0 %v1492
    %2378 = vmatpush.bf16.msra.mxu0 %v1488
    %2379 = vmatpush.bf16.msra.mxu0 %v1484
    %2380 = vmatpush.bf16.msra.mxu0 %v1480
    %2381 = vmatpush.bf16.msra.mxu0 %v1476
    %2382 = vmatmul.bf16.gmra.mxu0 %v174
    %v2383 = vpop.f32.mrf.mxu0
    %v2384 = vadd.f32 %v508, %v2383
    %v2385 = vpop.f32.mrf.mxu0
    %2386 = vdwg.mxu0
    %2387 = vmatpush.bf16.msra.mxu0 %v1536
    %2388 = vmatpush.bf16.msra.mxu0 %v1532
    %2389 = vmatpush.bf16.msra.mxu0 %v1528
    %2390 = vmatpush.bf16.msra.mxu0 %v1524
    %2391 = vmatpush.bf16.msra.mxu0 %v1520
    %2392 = vmatpush.bf16.msra.mxu0 %v1516
    %2393 = vmatpush.bf16.msra.mxu0 %v1512
    %2394 = vmatpush.bf16.msra.mxu0 %v1508
    %2395 = vmatmul.bf16.gmra.mxu0 %v175
    %v2396 = vpop.f32.mrf.mxu0
    %v2397 = vadd.f32 %v2384, %v2396
    %v2398 = vpop.f32.mrf.mxu0
    %2399 = vdwg.mxu0
    %2400 = vmatpush.bf16.msra.mxu0 %v1568
    %2401 = vmatpush.bf16.msra.mxu0 %v1564
    %2402 = vmatpush.bf16.msra.mxu0 %v1560
    %2403 = vmatpush.bf16.msra.mxu0 %v1556
    %2404 = vmatpush.bf16.msra.mxu0 %v1552
    %2405 = vmatpush.bf16.msra.mxu0 %v1548
    %2406 = vmatpush.bf16.msra.mxu0 %v1544
    %2407 = vmatpush.bf16.msra.mxu0 %v1540
    %2408 = vmatmul.bf16.gmra.mxu0 %v176
    %v2409 = vpop.f32.mrf.mxu0
    %v2410 = vadd.f32 %v2397, %v2409
    %v2411 = vpop.f32.mrf.mxu0
    %2412 = vdwg.mxu0
    %2413 = vmatpush.bf16.msra.mxu0 %v1600
    %2414 = vmatpush.bf16.msra.mxu0 %v1596
    %2415 = vmatpush.bf16.msra.mxu0 %v1592
    %2416 = vmatpush.bf16.msra.mxu0 %v1588
    %2417 = vmatpush.bf16.msra.mxu0 %v1584
    %2418 = vmatpush.bf16.msra.mxu0 %v1580
    %2419 = vmatpush.bf16.msra.mxu0 %v1576
    %2420 = vmatpush.bf16.msra.mxu0 %v1572
    %2421 = vmatmul.bf16.gmra.mxu0 %v177
    %v2422 = vpop.f32.mrf.mxu0
    %v2423 = vadd.f32 %v2410, %v2422
    %v2424 = vpop.f32.mrf.mxu0
    %2425 = vdwg.mxu0
    %2426 = vmatpush.bf16.msra.mxu0 %v1632
    %2427 = vmatpush.bf16.msra.mxu0 %v1628
    %2428 = vmatpush.bf16.msra.mxu0 %v1624
    %2429 = vmatpush.bf16.msra.mxu0 %v1620
    %2430 = vmatpush.bf16.msra.mxu0 %v1616
    %2431 = vmatpush.bf16.msra.mxu0 %v1612
    %2432 = vmatpush.bf16.msra.mxu0 %v1608
    %2433 = vmatpush.bf16.msra.mxu0 %v1604
    %2434 = vmatmul.bf16.gmra.mxu0 %v178
    %v2435 = vpop.f32.mrf.mxu0
    %v2436 = vadd.f32 %v2423, %v2435
    %v2437 = vpop.f32.mrf.mxu0
    %2438 = vdwg.mxu0
    %2439 = vmatpush.bf16.msra.mxu0 %v1664
    %2440 = vmatpush.bf16.msra.mxu0 %v1660
    %2441 = vmatpush.bf16.msra.mxu0 %v1656
    %2442 = vmatpush.bf16.msra.mxu0 %v1652
    %2443 = vmatpush.bf16.msra.mxu0 %v1648
    %2444 = vmatpush.bf16.msra.mxu0 %v1644
    %2445 = vmatpush.bf16.msra.mxu0 %v1640
    %2446 = vmatpush.bf16.msra.mxu0 %v1636
    %2447 = vmatmul.bf16.gmra.mxu0 %v179
    %v2448 = vpop.f32.mrf.mxu0
    %v2449 = vadd.f32 %v2436, %v2448
    %v2450 = vpop.f32.mrf.mxu0
    %2451 = vdwg.mxu0
    %2452 = vmatpush.bf16.msra.mxu0 %v1696
    %2453 = vmatpush.bf16.msra.mxu0 %v1692
    %2454 = vmatpush.bf16.msra.mxu0 %v1688
    %2455 = vmatpush.bf16.msra.mxu0 %v1684
    %2456 = vmatpush.bf16.msra.mxu0 %v1680
    %2457 = vmatpush.bf16.msra.mxu0 %v1676
    %2458 = vmatpush.bf16.msra.mxu0 %v1672
    %2459 = vmatpush.bf16.msra.mxu0 %v1668
    %2460 = vmatmul.bf16.gmra.mxu0 %v180
    %v2461 = vpop.f32.mrf.mxu0
    %v2462 = vadd.f32 %v2449, %v2461
    %v2463 = vpop.f32.mrf.mxu0
    %2464 = vdwg.mxu0
    %2465 = vmatpush.bf16.msra.mxu0 %v1728
    %2466 = vmatpush.bf16.msra.mxu0 %v1724
    %2467 = vmatpush.bf16.msra.mxu0 %v1720
    %2468 = vmatpush.bf16.msra.mxu0 %v1716
    %2469 = vmatpush.bf16.msra.mxu0 %v1712
    %2470 = vmatpush.bf16.msra.mxu0 %v1708
    %2471 = vmatpush.bf16.msra.mxu0 %v1704
    %2472 = vmatpush.bf16.msra.mxu0 %v1700
    %2473 = vmatmul.bf16.gmra.mxu0 %v181
    %v2474 = vpop.f32.mrf.mxu0
    %v2475 = vadd.f32 %v2462, %v2474
    %v2476 = vpop.f32.mrf.mxu0
    %2477 = vdwg.mxu0
    %2478 = vmatpush.bf16.msra.mxu0 %v1760
    %2479 = vmatpush.bf16.msra.mxu0 %v1756
    %2480 = vmatpush.bf16.msra.mxu0 %v1752
    %2481 = vmatpush.bf16.msra.mxu0 %v1748
    %2482 = vmatpush.bf16.msra.mxu0 %v1744
    %2483 = vmatpush.bf16.msra.mxu0 %v1740
    %2484 = vmatpush.bf16.msra.mxu0 %v1736
    %2485 = vmatpush.bf16.msra.mxu0 %v1732
    %2486 = vmatmul.bf16.gmra.mxu0 %v182
    %v2487 = vpop.f32.mrf.mxu0
    %v2488 = vadd.f32 %v2475, %v2487
    %v2489 = vpop.f32.mrf.mxu0
    %2490 = vdwg.mxu0
    %2491 = vmatpush.bf16.msra.mxu0 %v1792
    %2492 = vmatpush.bf16.msra.mxu0 %v1788
    %2493 = vmatpush.bf16.msra.mxu0 %v1784
    %2494 = vmatpush.bf16.msra.mxu0 %v1780
    %2495 = vmatpush.bf16.msra.mxu0 %v1776
    %2496 = vmatpush.bf16.msra.mxu0 %v1772
    %2497 = vmatpush.bf16.msra.mxu0 %v1768
    %2498 = vmatpush.bf16.msra.mxu0 %v1764
    %2499 = vmatmul.bf16.gmra.mxu0 %v183
    %v2500 = vpop.f32.mrf.mxu0
    %v2501 = vadd.f32 %v2488, %v2500
    %v2502 = vpop.f32.mrf.mxu0
    %2503 = vdwg.mxu0
    %2504 = vmatpush.bf16.msra.mxu0 %v1505
    %2505 = vmatpush.bf16.msra.mxu0 %v1501
    %2506 = vmatpush.bf16.msra.mxu0 %v1497
    %2507 = vmatpush.bf16.msra.mxu0 %v1493
    %2508 = vmatpush.bf16.msra.mxu0 %v1489
    %2509 = vmatpush.bf16.msra.mxu0 %v1485
    %2510 = vmatpush.bf16.msra.mxu0 %v1481
    %2511 = vmatpush.bf16.msra.mxu0 %v1477
    %2512 = vmatmul.bf16.gmra.mxu0 %v174
    %v2513 = vpop.f32.mrf.mxu0
    %v2514 = vadd.f32 %v509, %v2513
    %v2515 = vpop.f32.mrf.mxu0
    %2516 = vdwg.mxu0
    %2517 = vmatpush.bf16.msra.mxu0 %v1537
    %2518 = vmatpush.bf16.msra.mxu0 %v1533
    %2519 = vmatpush.bf16.msra.mxu0 %v1529
    %2520 = vmatpush.bf16.msra.mxu0 %v1525
    %2521 = vmatpush.bf16.msra.mxu0 %v1521
    %2522 = vmatpush.bf16.msra.mxu0 %v1517
    %2523 = vmatpush.bf16.msra.mxu0 %v1513
    %2524 = vmatpush.bf16.msra.mxu0 %v1509
    %2525 = vmatmul.bf16.gmra.mxu0 %v175
    %v2526 = vpop.f32.mrf.mxu0
    %v2527 = vadd.f32 %v2514, %v2526
    %v2528 = vpop.f32.mrf.mxu0
    %2529 = vdwg.mxu0
    %2530 = vmatpush.bf16.msra.mxu0 %v1569
    %2531 = vmatpush.bf16.msra.mxu0 %v1565
    %2532 = vmatpush.bf16.msra.mxu0 %v1561
    %2533 = vmatpush.bf16.msra.mxu0 %v1557
    %2534 = vmatpush.bf16.msra.mxu0 %v1553
    %2535 = vmatpush.bf16.msra.mxu0 %v1549
    %2536 = vmatpush.bf16.msra.mxu0 %v1545
    %2537 = vmatpush.bf16.msra.mxu0 %v1541
    %2538 = vmatmul.bf16.gmra.mxu0 %v176
    %v2539 = vpop.f32.mrf.mxu0
    %v2540 = vadd.f32 %v2527, %v2539
    %v2541 = vpop.f32.mrf.mxu0
    %2542 = vdwg.mxu0
    %2543 = vmatpush.bf16.msra.mxu0 %v1601
    %2544 = vmatpush.bf16.msra.mxu0 %v1597
    %2545 = vmatpush.bf16.msra.mxu0 %v1593
    %2546 = vmatpush.bf16.msra.mxu0 %v1589
    %2547 = vmatpush.bf16.msra.mxu0 %v1585
    %2548 = vmatpush.bf16.msra.mxu0 %v1581
    %2549 = vmatpush.bf16.msra.mxu0 %v1577
    %2550 = vmatpush.bf16.msra.mxu0 %v1573
    %2551 = vmatmul.bf16.gmra.mxu0 %v177
    %v2552 = vpop.f32.mrf.mxu0
    %v2553 = vadd.f32 %v2540, %v2552
    %v2554 = vpop.f32.mrf.mxu0
    %2555 = vdwg.mxu0
    %2556 = vmatpush.bf16.msra.mxu0 %v1633
    %2557 = vmatpush.bf16.msra.mxu0 %v1629
    %2558 = vmatpush.bf16.msra.mxu0 %v1625
    %2559 = vmatpush.bf16.msra.mxu0 %v1621
    %2560 = vmatpush.bf16.msra.mxu0 %v1617
    %2561 = vmatpush.bf16.msra.mxu0 %v1613
    %2562 = vmatpush.bf16.msra.mxu0 %v1609
    %2563 = vmatpush.bf16.msra.mxu0 %v1605
    %2564 = vmatmul.bf16.gmra.mxu0 %v178
    %v2565 = vpop.f32.mrf.mxu0
    %v2566 = vadd.f32 %v2553, %v2565
    %v2567 = vpop.f32.mrf.mxu0
    %2568 = vdwg.mxu0
    %2569 = vmatpush.bf16.msra.mxu0 %v1665
    %2570 = vmatpush.bf16.msra.mxu0 %v1661
    %2571 = vmatpush.bf16.msra.mxu0 %v1657
    %2572 = vmatpush.bf16.msra.mxu0 %v1653
    %2573 = vmatpush.bf16.msra.mxu0 %v1649
    %2574 = vmatpush.bf16.msra.mxu0 %v1645
    %2575 = vmatpush.bf16.msra.mxu0 %v1641
    %2576 = vmatpush.bf16.msra.mxu0 %v1637
    %2577 = vmatmul.bf16.gmra.mxu0 %v179
    %v2578 = vpop.f32.mrf.mxu0
    %v2579 = vadd.f32 %v2566, %v2578
    %v2580 = vpop.f32.mrf.mxu0
    %2581 = vdwg.mxu0
    %2582 = vmatpush.bf16.msra.mxu0 %v1697
    %2583 = vmatpush.bf16.msra.mxu0 %v1693
    %2584 = vmatpush.bf16.msra.mxu0 %v1689
    %2585 = vmatpush.bf16.msra.mxu0 %v1685
    %2586 = vmatpush.bf16.msra.mxu0 %v1681
    %2587 = vmatpush.bf16.msra.mxu0 %v1677
    %2588 = vmatpush.bf16.msra.mxu0 %v1673
    %2589 = vmatpush.bf16.msra.mxu0 %v1669
    %2590 = vmatmul.bf16.gmra.mxu0 %v180
    %v2591 = vpop.f32.mrf.mxu0
    %v2592 = vadd.f32 %v2579, %v2591
    %v2593 = vpop.f32.mrf.mxu0
    %2594 = vdwg.mxu0
    %2595 = vmatpush.bf16.msra.mxu0 %v1729
    %2596 = vmatpush.bf16.msra.mxu0 %v1725
    %2597 = vmatpush.bf16.msra.mxu0 %v1721
    %2598 = vmatpush.bf16.msra.mxu0 %v1717
    %2599 = vmatpush.bf16.msra.mxu0 %v1713
    %2600 = vmatpush.bf16.msra.mxu0 %v1709
    %2601 = vmatpush.bf16.msra.mxu0 %v1705
    %2602 = vmatpush.bf16.msra.mxu0 %v1701
    %2603 = vmatmul.bf16.gmra.mxu0 %v181
    %v2604 = vpop.f32.mrf.mxu0
    %v2605 = vadd.f32 %v2592, %v2604
    %v2606 = vpop.f32.mrf.mxu0
    %2607 = vdwg.mxu0
    %2608 = vmatpush.bf16.msra.mxu0 %v1761
    %2609 = vmatpush.bf16.msra.mxu0 %v1757
    %2610 = vmatpush.bf16.msra.mxu0 %v1753
    %2611 = vmatpush.bf16.msra.mxu0 %v1749
    %2612 = vmatpush.bf16.msra.mxu0 %v1745
    %2613 = vmatpush.bf16.msra.mxu0 %v1741
    %2614 = vmatpush.bf16.msra.mxu0 %v1737
    %2615 = vmatpush.bf16.msra.mxu0 %v1733
    %2616 = vmatmul.bf16.gmra.mxu0 %v182
    %v2617 = vpop.f32.mrf.mxu0
    %v2618 = vadd.f32 %v2605, %v2617
    %v2619 = vpop.f32.mrf.mxu0
    %2620 = vdwg.mxu0
    %2621 = vmatpush.bf16.msra.mxu0 %v1793
    %2622 = vmatpush.bf16.msra.mxu0 %v1789
    %2623 = vmatpush.bf16.msra.mxu0 %v1785
    %2624 = vmatpush.bf16.msra.mxu0 %v1781
    %2625 = vmatpush.bf16.msra.mxu0 %v1777
    %2626 = vmatpush.bf16.msra.mxu0 %v1773
    %2627 = vmatpush.bf16.msra.mxu0 %v1769
    %2628 = vmatpush.bf16.msra.mxu0 %v1765
    %2629 = vmatmul.bf16.gmra.mxu0 %v183
    %v2630 = vpop.f32.mrf.mxu0
    %v2631 = vadd.f32 %v2618, %v2630
    %v2632 = vpop.f32.mrf.mxu0
    %2633 = vdwg.mxu0
    %v2634 = vpack.c.bf16 %v2371, %v2241
    %v2635 = vpack.c.bf16 %v2631, %v2501
    %v2636 = vxor.u32 %v2634, 2147516416
    %v2637 = vxor.u32 %v2635, 2147516416
    %v2638 = vunpack.c.l.bf16 %v2636
    %v2639 = vunpack.c.h.bf16 %v2636
    %v2640 = vunpack.c.l.bf16 %v2637
    %v2641 = vunpack.c.h.bf16 %v2637
    %v2642 = vmul.f32 %v2638, 1.442695
    %v2643 = vpow.pop %v2642
    %v2644 = vmul.f32 %v2639, 1.442695
    %v2645 = vpow.pop %v2644
    %v2646 = vmul.f32 %v2640, 1.442695
    %v2647 = vpow.pop %v2646
    %v2648 = vmul.f32 %v2641, 1.442695
    %v2649 = vpow.pop %v2648
    %v2650 = vpack.c.bf16 %v2645, %v2643
    %v2651 = vpack.c.bf16 %v2649, %v2647
    %v2652 = vunpack.c.l.bf16 %v2650
    %v2653 = vunpack.c.h.bf16 %v2650
    %v2654 = vunpack.c.l.bf16 %v2651
    %v2655 = vunpack.c.h.bf16 %v2651
    %v2656 = vadd.f32 %v2652, 1.0
    %v2657 = vadd.f32 %v2653, 1.0
    %v2658 = vadd.f32 %v2654, 1.0
    %v2659 = vadd.f32 %v2655, 1.0
    %v2660 = vpack.c.bf16 %v2657, %v2656
    %v2661 = vpack.c.bf16 %v2659, %v2658
    %v2662 = vunpack.c.h.bf16 1065369472
    %v2663 = vunpack.c.l.bf16 1065369472
    %v2664 = vunpack.c.h.bf16 %v2660
    %v2665 = vunpack.c.l.bf16 %v2660
    %v2666 = vrcp.pop %v2664
    %v2667 = vmul.f32 %v2662, %v2666
    %v2668 = vrcp.pop %v2665
    %v2669 = vmul.f32 %v2663, %v2668
    %v2670 = vpack.c.bf16 %v2667, %v2669
    %v2671 = vunpack.c.h.bf16 %v2661
    %v2672 = vunpack.c.l.bf16 %v2661
    %v2673 = vrcp.pop %v2671
    %v2674 = vmul.f32 %v2662, %v2673
    %v2675 = vrcp.pop %v2672
    %v2676 = vmul.f32 %v2663, %v2675
    %v2677 = vpack.c.bf16 %v2674, %v2676
    %v2678 = vunpack.c.l.bf16 %v2634
    %v2679 = vunpack.c.h.bf16 %v2634
    %v2680 = vunpack.c.l.bf16 %v2635
    %v2681 = vunpack.c.h.bf16 %v2635
    %v2682 = vunpack.c.l.bf16 %v2670
    %v2683 = vunpack.c.h.bf16 %v2670
    %v2684 = vunpack.c.l.bf16 %v2677
    %v2685 = vunpack.c.h.bf16 %v2677
    %v2686 = vmul.f32 %v2678, %v2682
    %v2687 = vmul.f32 %v2679, %v2683
    %v2688 = vmul.f32 %v2680, %v2684
    %v2689 = vmul.f32 %v2681, %v2685
    %v2690 = vpack.c.bf16 %v2686, %v2686
    %v2691 = vpack.c.bf16 %v2687, %v2687
    %v2692 = vpack.c.bf16 %v2688, %v2688
    %v2693 = vpack.c.bf16 %v2689, %v2689
    %v2694 = vld [vmem:[#allocation8] sm:$0xff]
    %v2695 = vld [vmem:[#allocation8 + $0x8] sm:$0xff]
    %v2696 = vld [vmem:[#allocation8 + $0x10] sm:$0xff]
    %v2697 = vld [vmem:[#allocation8 + $0x18] sm:$0xff]
    %v2698 = vld [vmem:[#allocation8 + $0x20] sm:$0xff]
    %v2699 = vld [vmem:[#allocation8 + $0x28] sm:$0xff]
    %v2700 = vld [vmem:[#allocation8 + $0x30] sm:$0xff]
    %v2701 = vld [vmem:[#allocation8 + $0x38] sm:$0xff]
    %v2702 = vld [vmem:[#allocation8 + $0x40] sm:$0xff]
    %v2703 = vld [vmem:[#allocation8 + $0x48] sm:$0xff]
    %v2704 = vld [vmem:[#allocation8 + $0x50] sm:$0xff]
    %v2705 = vld [vmem:[#allocation8 + $0x58] sm:$0xff]
    %v2706 = vld [vmem:[#allocation8 + $0x60] sm:$0xff]
    %v2707 = vld [vmem:[#allocation8 + $0x68] sm:$0xff]
    %v2708 = vld [vmem:[#allocation8 + $0x70] sm:$0xff]
    %v2709 = vld [vmem:[#allocation8 + $0x78] sm:$0xff]
    %v2710 = vld [vmem:[#allocation8 + $0x80] sm:$0xff]
    %v2711 = vld [vmem:[#allocation8 + $0x88] sm:$0xff]
    %v2712 = vld [vmem:[#allocation8 + $0x90] sm:$0xff]
    %v2713 = vld [vmem:[#allocation8 + $0x98] sm:$0xff]
    %v2714 = vld [vmem:[#allocation8 + $0xa0] sm:$0xff]
    %v2715 = vld [vmem:[#allocation8 + $0xa8] sm:$0xff]
    %v2716 = vld [vmem:[#allocation8 + $0xb0] sm:$0xff]
    %v2717 = vld [vmem:[#allocation8 + $0xb8] sm:$0xff]
    %v2718 = vld [vmem:[#allocation8 + $0xc0] sm:$0xff]
    %v2719 = vld [vmem:[#allocation8 + $0xc8] sm:$0xff]
    %v2720 = vld [vmem:[#allocation8 + $0xd0] sm:$0xff]
    %v2721 = vld [vmem:[#allocation8 + $0xd8] sm:$0xff]
    %v2722 = vld [vmem:[#allocation8 + $0xe0] sm:$0xff]
    %v2723 = vld [vmem:[#allocation8 + $0xe8] sm:$0xff]
    %v2724 = vld [vmem:[#allocation8 + $0xf0] sm:$0xff]
    %v2725 = vld [vmem:[#allocation8 + $0xf8] sm:$0xff]
    %v2726 = vld [vmem:[#allocation8 + $0x100] sm:$0xff]
    %v2727 = vld [vmem:[#allocation8 + $0x108] sm:$0xff]
    %v2728 = vld [vmem:[#allocation8 + $0x110] sm:$0xff]
    %v2729 = vld [vmem:[#allocation8 + $0x118] sm:$0xff]
    %v2730 = vld [vmem:[#allocation8 + $0x120] sm:$0xff]
    %v2731 = vld [vmem:[#allocation8 + $0x128] sm:$0xff]
    %v2732 = vld [vmem:[#allocation8 + $0x130] sm:$0xff]
    %v2733 = vld [vmem:[#allocation8 + $0x138] sm:$0xff]
    %v2734 = vld [vmem:[#allocation8 + $0x140] sm:$0xff]
    %v2735 = vld [vmem:[#allocation8 + $0x148] sm:$0xff]
    %v2736 = vld [vmem:[#allocation8 + $0x150] sm:$0xff]
    %v2737 = vld [vmem:[#allocation8 + $0x158] sm:$0xff]
    %v2738 = vld [vmem:[#allocation8 + $0x160] sm:$0xff]
    %v2739 = vld [vmem:[#allocation8 + $0x168] sm:$0xff]
    %v2740 = vld [vmem:[#allocation8 + $0x170] sm:$0xff]
    %v2741 = vld [vmem:[#allocation8 + $0x178] sm:$0xff]
    %v2742 = vld [vmem:[#allocation8 + $0x180] sm:$0xff]
    %v2743 = vld [vmem:[#allocation8 + $0x188] sm:$0xff]
    %v2744 = vld [vmem:[#allocation8 + $0x190] sm:$0xff]
    %v2745 = vld [vmem:[#allocation8 + $0x198] sm:$0xff]
    %v2746 = vld [vmem:[#allocation8 + $0x1a0] sm:$0xff]
    %v2747 = vld [vmem:[#allocation8 + $0x1a8] sm:$0xff]
    %v2748 = vld [vmem:[#allocation8 + $0x1b0] sm:$0xff]
    %v2749 = vld [vmem:[#allocation8 + $0x1b8] sm:$0xff]
    %v2750 = vld [vmem:[#allocation8 + $0x1c0] sm:$0xff]
    %v2751 = vld [vmem:[#allocation8 + $0x1c8] sm:$0xff]
    %v2752 = vld [vmem:[#allocation8 + $0x1d0] sm:$0xff]
    %v2753 = vld [vmem:[#allocation8 + $0x1d8] sm:$0xff]
    %v2754 = vld [vmem:[#allocation8 + $0x1e0] sm:$0xff]
    %v2755 = vld [vmem:[#allocation8 + $0x1e8] sm:$0xff]
    %v2756 = vld [vmem:[#allocation8 + $0x1f0] sm:$0xff]
    %v2757 = vld [vmem:[#allocation8 + $0x1f8] sm:$0xff]
    %v2758 = vld [vmem:[#allocation8 + $0x200] sm:$0xff]
    %v2759 = vld [vmem:[#allocation8 + $0x208] sm:$0xff]
    %v2760 = vld [vmem:[#allocation8 + $0x210] sm:$0xff]
    %v2761 = vld [vmem:[#allocation8 + $0x218] sm:$0xff]
    %v2762 = vld [vmem:[#allocation8 + $0x220] sm:$0xff]
    %v2763 = vld [vmem:[#allocation8 + $0x228] sm:$0xff]
    %v2764 = vld [vmem:[#allocation8 + $0x230] sm:$0xff]
    %v2765 = vld [vmem:[#allocation8 + $0x238] sm:$0xff]
    %v2766 = vld [vmem:[#allocation8 + $0x240] sm:$0xff]
    %v2767 = vld [vmem:[#allocation8 + $0x248] sm:$0xff]
    %v2768 = vld [vmem:[#allocation8 + $0x250] sm:$0xff]
    %v2769 = vld [vmem:[#allocation8 + $0x258] sm:$0xff]
    %v2770 = vld [vmem:[#allocation8 + $0x260] sm:$0xff]
    %v2771 = vld [vmem:[#allocation8 + $0x268] sm:$0xff]
    %v2772 = vld [vmem:[#allocation8 + $0x270] sm:$0xff]
    %v2773 = vld [vmem:[#allocation8 + $0x278] sm:$0xff]
    %v2774 = vld [vmem:[#allocation8 + $0x280] sm:$0xff]
    %v2775 = vld [vmem:[#allocation8 + $0x288] sm:$0xff]
    %v2776 = vld [vmem:[#allocation8 + $0x290] sm:$0xff]
    %v2777 = vld [vmem:[#allocation8 + $0x298] sm:$0xff]
    %v2778 = vld [vmem:[#allocation8 + $0x2a0] sm:$0xff]
    %v2779 = vld [vmem:[#allocation8 + $0x2a8] sm:$0xff]
    %v2780 = vld [vmem:[#allocation8 + $0x2b0] sm:$0xff]
    %v2781 = vld [vmem:[#allocation8 + $0x2b8] sm:$0xff]
    %v2782 = vld [vmem:[#allocation8 + $0x2c0] sm:$0xff]
    %v2783 = vld [vmem:[#allocation8 + $0x2c8] sm:$0xff]
    %v2784 = vld [vmem:[#allocation8 + $0x2d0] sm:$0xff]
    %v2785 = vld [vmem:[#allocation8 + $0x2d8] sm:$0xff]
    %v2786 = vld [vmem:[#allocation8 + $0x2e0] sm:$0xff]
    %v2787 = vld [vmem:[#allocation8 + $0x2e8] sm:$0xff]
    %v2788 = vld [vmem:[#allocation8 + $0x2f0] sm:$0xff]
    %v2789 = vld [vmem:[#allocation8 + $0x2f8] sm:$0xff]
    %v2790 = vld [vmem:[#allocation8 + $0x300] sm:$0xff]
    %v2791 = vld [vmem:[#allocation8 + $0x308] sm:$0xff]
    %v2792 = vld [vmem:[#allocation8 + $0x310] sm:$0xff]
    %v2793 = vld [vmem:[#allocation8 + $0x318] sm:$0xff]
    %v2794 = vld [vmem:[#allocation8 + $0x320] sm:$0xff]
    %v2795 = vld [vmem:[#allocation8 + $0x328] sm:$0xff]
    %v2796 = vld [vmem:[#allocation8 + $0x330] sm:$0xff]
    %v2797 = vld [vmem:[#allocation8 + $0x338] sm:$0xff]
    %v2798 = vld [vmem:[#allocation8 + $0x340] sm:$0xff]
    %v2799 = vld [vmem:[#allocation8 + $0x348] sm:$0xff]
    %v2800 = vld [vmem:[#allocation8 + $0x350] sm:$0xff]
    %v2801 = vld [vmem:[#allocation8 + $0x358] sm:$0xff]
    %v2802 = vld [vmem:[#allocation8 + $0x360] sm:$0xff]
    %v2803 = vld [vmem:[#allocation8 + $0x368] sm:$0xff]
    %v2804 = vld [vmem:[#allocation8 + $0x370] sm:$0xff]
    %v2805 = vld [vmem:[#allocation8 + $0x378] sm:$0xff]
    %v2806 = vld [vmem:[#allocation8 + $0x380] sm:$0xff]
    %v2807 = vld [vmem:[#allocation8 + $0x388] sm:$0xff]
    %v2808 = vld [vmem:[#allocation8 + $0x390] sm:$0xff]
    %v2809 = vld [vmem:[#allocation8 + $0x398] sm:$0xff]
    %v2810 = vld [vmem:[#allocation8 + $0x3a0] sm:$0xff]
    %v2811 = vld [vmem:[#allocation8 + $0x3a8] sm:$0xff]
    %v2812 = vld [vmem:[#allocation8 + $0x3b0] sm:$0xff]
    %v2813 = vld [vmem:[#allocation8 + $0x3b8] sm:$0xff]
    %v2814 = vld [vmem:[#allocation8 + $0x3c0] sm:$0xff]
    %v2815 = vld [vmem:[#allocation8 + $0x3c8] sm:$0xff]
    %v2816 = vld [vmem:[#allocation8 + $0x3d0] sm:$0xff]
    %v2817 = vld [vmem:[#allocation8 + $0x3d8] sm:$0xff]
    %v2818 = vld [vmem:[#allocation8 + $0x3e0] sm:$0xff]
    %v2819 = vld [vmem:[#allocation8 + $0x3e8] sm:$0xff]
    %v2820 = vld [vmem:[#allocation8 + $0x3f0] sm:$0xff]
    %v2821 = vld [vmem:[#allocation8 + $0x3f8] sm:$0xff]
    %v2822 = vld [vmem:[#allocation10] sm:$0xf]
    %v2824 = vperm.slane %v2822, 0
    %v2825 = vperm.slane %v2822, 1
    %v2826 = vperm.slane %v2822, 2
    %v2827 = vperm.slane %v2822, 3
    %v2960 = vunpack.c.l.b16 %v2694
    %v2961 = vunpack.c.h.b16 %v2694
    %v2962 = vunpack.c.l.b16 %v2695
    %v2963 = vunpack.c.h.b16 %v2695
    %v2964 = vunpack.c.l.b16 %v2696
    %v2965 = vunpack.c.h.b16 %v2696
    %v2966 = vunpack.c.l.b16 %v2697
    %v2967 = vunpack.c.h.b16 %v2697
    %v2968 = vunpack.c.l.b16 %v2698
    %v2969 = vunpack.c.h.b16 %v2698
    %v2970 = vunpack.c.l.b16 %v2699
    %v2971 = vunpack.c.h.b16 %v2699
    %v2972 = vunpack.c.l.b16 %v2700
    %v2973 = vunpack.c.h.b16 %v2700
    %v2974 = vunpack.c.l.b16 %v2701
    %v2975 = vunpack.c.h.b16 %v2701
    %v2976 = vunpack.c.l.b16 %v2702
    %v2977 = vunpack.c.h.b16 %v2702
    %v2978 = vunpack.c.l.b16 %v2703
    %v2979 = vunpack.c.h.b16 %v2703
    %v2980 = vunpack.c.l.b16 %v2704
    %v2981 = vunpack.c.h.b16 %v2704
    %v2982 = vunpack.c.l.b16 %v2705
    %v2983 = vunpack.c.h.b16 %v2705
    %v2984 = vunpack.c.l.b16 %v2706
    %v2985 = vunpack.c.h.b16 %v2706
    %v2986 = vunpack.c.l.b16 %v2707
    %v2987 = vunpack.c.h.b16 %v2707
    %v2988 = vunpack.c.l.b16 %v2708
    %v2989 = vunpack.c.h.b16 %v2708
    %v2990 = vunpack.c.l.b16 %v2709
    %v2991 = vunpack.c.h.b16 %v2709
    %v2992 = vunpack.c.l.b16 %v2710
    %v2993 = vunpack.c.h.b16 %v2710
    %v2994 = vunpack.c.l.b16 %v2711
    %v2995 = vunpack.c.h.b16 %v2711
    %v2996 = vunpack.c.l.b16 %v2712
    %v2997 = vunpack.c.h.b16 %v2712
    %v2998 = vunpack.c.l.b16 %v2713
    %v2999 = vunpack.c.h.b16 %v2713
    %v3000 = vunpack.c.l.b16 %v2714
    %v3001 = vunpack.c.h.b16 %v2714
    %v3002 = vunpack.c.l.b16 %v2715
    %v3003 = vunpack.c.h.b16 %v2715
    %v3004 = vunpack.c.l.b16 %v2716
    %v3005 = vunpack.c.h.b16 %v2716
    %v3006 = vunpack.c.l.b16 %v2717
    %v3007 = vunpack.c.h.b16 %v2717
    %v3008 = vunpack.c.l.b16 %v2718
    %v3009 = vunpack.c.h.b16 %v2718
    %v3010 = vunpack.c.l.b16 %v2719
    %v3011 = vunpack.c.h.b16 %v2719
    %v3012 = vunpack.c.l.b16 %v2720
    %v3013 = vunpack.c.h.b16 %v2720
    %v3014 = vunpack.c.l.b16 %v2721
    %v3015 = vunpack.c.h.b16 %v2721
    %v3016 = vunpack.c.l.b16 %v2722
    %v3017 = vunpack.c.h.b16 %v2722
    %v3018 = vunpack.c.l.b16 %v2723
    %v3019 = vunpack.c.h.b16 %v2723
    %v3020 = vunpack.c.l.b16 %v2724
    %v3021 = vunpack.c.h.b16 %v2724
    %v3022 = vunpack.c.l.b16 %v2725
    %v3023 = vunpack.c.h.b16 %v2725
    %v3024 = vunpack.c.l.b16 %v2726
    %v3025 = vunpack.c.h.b16 %v2726
    %v3026 = vunpack.c.l.b16 %v2727
    %v3027 = vunpack.c.h.b16 %v2727
    %v3028 = vunpack.c.l.b16 %v2728
    %v3029 = vunpack.c.h.b16 %v2728
    %v3030 = vunpack.c.l.b16 %v2729
    %v3031 = vunpack.c.h.b16 %v2729
    %v3032 = vunpack.c.l.b16 %v2730
    %v3033 = vunpack.c.h.b16 %v2730
    %v3034 = vunpack.c.l.b16 %v2731
    %v3035 = vunpack.c.h.b16 %v2731
    %v3036 = vunpack.c.l.b16 %v2732
    %v3037 = vunpack.c.h.b16 %v2732
    %v3038 = vunpack.c.l.b16 %v2733
    %v3039 = vunpack.c.h.b16 %v2733
    %v3040 = vunpack.c.l.b16 %v2734
    %v3041 = vunpack.c.h.b16 %v2734
    %v3042 = vunpack.c.l.b16 %v2735
    %v3043 = vunpack.c.h.b16 %v2735
    %v3044 = vunpack.c.l.b16 %v2736
    %v3045 = vunpack.c.h.b16 %v2736
    %v3046 = vunpack.c.l.b16 %v2737
    %v3047 = vunpack.c.h.b16 %v2737
    %v3048 = vunpack.c.l.b16 %v2738
    %v3049 = vunpack.c.h.b16 %v2738
    %v3050 = vunpack.c.l.b16 %v2739
    %v3051 = vunpack.c.h.b16 %v2739
    %v3052 = vunpack.c.l.b16 %v2740
    %v3053 = vunpack.c.h.b16 %v2740
    %v3054 = vunpack.c.l.b16 %v2741
    %v3055 = vunpack.c.h.b16 %v2741
    %v3056 = vunpack.c.l.b16 %v2742
    %v3057 = vunpack.c.h.b16 %v2742
    %v3058 = vunpack.c.l.b16 %v2743
    %v3059 = vunpack.c.h.b16 %v2743
    %v3060 = vunpack.c.l.b16 %v2744
    %v3061 = vunpack.c.h.b16 %v2744
    %v3062 = vunpack.c.l.b16 %v2745
    %v3063 = vunpack.c.h.b16 %v2745
    %v3064 = vunpack.c.l.b16 %v2746
    %v3065 = vunpack.c.h.b16 %v2746
    %v3066 = vunpack.c.l.b16 %v2747
    %v3067 = vunpack.c.h.b16 %v2747
    %v3068 = vunpack.c.l.b16 %v2748
    %v3069 = vunpack.c.h.b16 %v2748
    %v3070 = vunpack.c.l.b16 %v2749
    %v3071 = vunpack.c.h.b16 %v2749
    %v3072 = vunpack.c.l.b16 %v2750
    %v3073 = vunpack.c.h.b16 %v2750
    %v3074 = vunpack.c.l.b16 %v2751
    %v3075 = vunpack.c.h.b16 %v2751
    %v3076 = vunpack.c.l.b16 %v2752
    %v3077 = vunpack.c.h.b16 %v2752
    %v3078 = vunpack.c.l.b16 %v2753
    %v3079 = vunpack.c.h.b16 %v2753
    %v3080 = vunpack.c.l.b16 %v2754
    %v3081 = vunpack.c.h.b16 %v2754
    %v3082 = vunpack.c.l.b16 %v2755
    %v3083 = vunpack.c.h.b16 %v2755
    %v3084 = vunpack.c.l.b16 %v2756
    %v3085 = vunpack.c.h.b16 %v2756
    %v3086 = vunpack.c.l.b16 %v2757
    %v3087 = vunpack.c.h.b16 %v2757
    %v3088 = vunpack.c.l.b16 %v2758
    %v3089 = vunpack.c.h.b16 %v2758
    %v3090 = vunpack.c.l.b16 %v2759
    %v3091 = vunpack.c.h.b16 %v2759
    %v3092 = vunpack.c.l.b16 %v2760
    %v3093 = vunpack.c.h.b16 %v2760
    %v3094 = vunpack.c.l.b16 %v2761
    %v3095 = vunpack.c.h.b16 %v2761
    %v3096 = vunpack.c.l.b16 %v2762
    %v3097 = vunpack.c.h.b16 %v2762
    %v3098 = vunpack.c.l.b16 %v2763
    %v3099 = vunpack.c.h.b16 %v2763
    %v3100 = vunpack.c.l.b16 %v2764
    %v3101 = vunpack.c.h.b16 %v2764
    %v3102 = vunpack.c.l.b16 %v2765
    %v3103 = vunpack.c.h.b16 %v2765
    %v3104 = vunpack.c.l.b16 %v2766
    %v3105 = vunpack.c.h.b16 %v2766
    %v3106 = vunpack.c.l.b16 %v2767
    %v3107 = vunpack.c.h.b16 %v2767
    %v3108 = vunpack.c.l.b16 %v2768
    %v3109 = vunpack.c.h.b16 %v2768
    %v3110 = vunpack.c.l.b16 %v2769
    %v3111 = vunpack.c.h.b16 %v2769
    %v3112 = vunpack.c.l.b16 %v2770
    %v3113 = vunpack.c.h.b16 %v2770
    %v3114 = vunpack.c.l.b16 %v2771
    %v3115 = vunpack.c.h.b16 %v2771
    %v3116 = vunpack.c.l.b16 %v2772
    %v3117 = vunpack.c.h.b16 %v2772
    %v3118 = vunpack.c.l.b16 %v2773
    %v3119 = vunpack.c.h.b16 %v2773
    %v3120 = vunpack.c.l.b16 %v2774
    %v3121 = vunpack.c.h.b16 %v2774
    %v3122 = vunpack.c.l.b16 %v2775
    %v3123 = vunpack.c.h.b16 %v2775
    %v3124 = vunpack.c.l.b16 %v2776
    %v3125 = vunpack.c.h.b16 %v2776
    %v3126 = vunpack.c.l.b16 %v2777
    %v3127 = vunpack.c.h.b16 %v2777
    %v3128 = vunpack.c.l.b16 %v2778
    %v3129 = vunpack.c.h.b16 %v2778
    %v3130 = vunpack.c.l.b16 %v2779
    %v3131 = vunpack.c.h.b16 %v2779
    %v3132 = vunpack.c.l.b16 %v2780
    %v3133 = vunpack.c.h.b16 %v2780
    %v3134 = vunpack.c.l.b16 %v2781
    %v3135 = vunpack.c.h.b16 %v2781
    %v3136 = vunpack.c.l.b16 %v2782
    %v3137 = vunpack.c.h.b16 %v2782
    %v3138 = vunpack.c.l.b16 %v2783
    %v3139 = vunpack.c.h.b16 %v2783
    %v3140 = vunpack.c.l.b16 %v2784
    %v3141 = vunpack.c.h.b16 %v2784
    %v3142 = vunpack.c.l.b16 %v2785
    %v3143 = vunpack.c.h.b16 %v2785
    %v3144 = vunpack.c.l.b16 %v2786
    %v3145 = vunpack.c.h.b16 %v2786
    %v3146 = vunpack.c.l.b16 %v2787
    %v3147 = vunpack.c.h.b16 %v2787
    %v3148 = vunpack.c.l.b16 %v2788
    %v3149 = vunpack.c.h.b16 %v2788
    %v3150 = vunpack.c.l.b16 %v2789
    %v3151 = vunpack.c.h.b16 %v2789
    %v3152 = vunpack.c.l.b16 %v2790
    %v3153 = vunpack.c.h.b16 %v2790
    %v3154 = vunpack.c.l.b16 %v2791
    %v3155 = vunpack.c.h.b16 %v2791
    %v3156 = vunpack.c.l.b16 %v2792
    %v3157 = vunpack.c.h.b16 %v2792
    %v3158 = vunpack.c.l.b16 %v2793
    %v3159 = vunpack.c.h.b16 %v2793
    %v3160 = vunpack.c.l.b16 %v2794
    %v3161 = vunpack.c.h.b16 %v2794
    %v3162 = vunpack.c.l.b16 %v2795
    %v3163 = vunpack.c.h.b16 %v2795
    %v3164 = vunpack.c.l.b16 %v2796
    %v3165 = vunpack.c.h.b16 %v2796
    %v3166 = vunpack.c.l.b16 %v2797
    %v3167 = vunpack.c.h.b16 %v2797
    %v3168 = vunpack.c.l.b16 %v2798
    %v3169 = vunpack.c.h.b16 %v2798
    %v3170 = vunpack.c.l.b16 %v2799
    %v3171 = vunpack.c.h.b16 %v2799
    %v3172 = vunpack.c.l.b16 %v2800
    %v3173 = vunpack.c.h.b16 %v2800
    %v3174 = vunpack.c.l.b16 %v2801
    %v3175 = vunpack.c.h.b16 %v2801
    %v3176 = vunpack.c.l.b16 %v2802
    %v3177 = vunpack.c.h.b16 %v2802
    %v3178 = vunpack.c.l.b16 %v2803
    %v3179 = vunpack.c.h.b16 %v2803
    %v3180 = vunpack.c.l.b16 %v2804
    %v3181 = vunpack.c.h.b16 %v2804
    %v3182 = vunpack.c.l.b16 %v2805
    %v3183 = vunpack.c.h.b16 %v2805
    %v3184 = vunpack.c.l.b16 %v2806
    %v3185 = vunpack.c.h.b16 %v2806
    %v3186 = vunpack.c.l.b16 %v2807
    %v3187 = vunpack.c.h.b16 %v2807
    %v3188 = vunpack.c.l.b16 %v2808
    %v3189 = vunpack.c.h.b16 %v2808
    %v3190 = vunpack.c.l.b16 %v2809
    %v3191 = vunpack.c.h.b16 %v2809
    %v3192 = vunpack.c.l.b16 %v2810
    %v3193 = vunpack.c.h.b16 %v2810
    %v3194 = vunpack.c.l.b16 %v2811
    %v3195 = vunpack.c.h.b16 %v2811
    %v3196 = vunpack.c.l.b16 %v2812
    %v3197 = vunpack.c.h.b16 %v2812
    %v3198 = vunpack.c.l.b16 %v2813
    %v3199 = vunpack.c.h.b16 %v2813
    %v3200 = vunpack.c.l.b16 %v2814
    %v3201 = vunpack.c.h.b16 %v2814
    %v3202 = vunpack.c.l.b16 %v2815
    %v3203 = vunpack.c.h.b16 %v2815
    %v3204 = vunpack.c.l.b16 %v2816
    %v3205 = vunpack.c.h.b16 %v2816
    %v3206 = vunpack.c.l.b16 %v2817
    %v3207 = vunpack.c.h.b16 %v2817
    %v3208 = vunpack.c.l.b16 %v2818
    %v3209 = vunpack.c.h.b16 %v2818
    %v3210 = vunpack.c.l.b16 %v2819
    %v3211 = vunpack.c.h.b16 %v2819
    %v3212 = vunpack.c.l.b16 %v2820
    %v3213 = vunpack.c.h.b16 %v2820
    %v3214 = vunpack.c.l.b16 %v2821
    %v3215 = vunpack.c.h.b16 %v2821
    %v3216 = vpack.c.b16 %v2964, %v2960
    %v3217 = vpack.c.b16 %v2965, %v2961
    %v3218 = vpack.c.b16 %v2966, %v2962
    %v3219 = vpack.c.b16 %v2967, %v2963
    %v3220 = vpack.c.b16 %v2972, %v2968
    %v3221 = vpack.c.b16 %v2973, %v2969
    %v3222 = vpack.c.b16 %v2974, %v2970
    %v3223 = vpack.c.b16 %v2975, %v2971
    %v3224 = vpack.c.b16 %v2980, %v2976
    %v3225 = vpack.c.b16 %v2981, %v2977
    %v3226 = vpack.c.b16 %v2982, %v2978
    %v3227 = vpack.c.b16 %v2983, %v2979
    %v3228 = vpack.c.b16 %v2988, %v2984
    %v3229 = vpack.c.b16 %v2989, %v2985
    %v3230 = vpack.c.b16 %v2990, %v2986
    %v3231 = vpack.c.b16 %v2991, %v2987
    %v3232 = vpack.c.b16 %v2996, %v2992
    %v3233 = vpack.c.b16 %v2997, %v2993
    %v3234 = vpack.c.b16 %v2998, %v2994
    %v3235 = vpack.c.b16 %v2999, %v2995
    %v3236 = vpack.c.b16 %v3004, %v3000
    %v3237 = vpack.c.b16 %v3005, %v3001
    %v3238 = vpack.c.b16 %v3006, %v3002
    %v3239 = vpack.c.b16 %v3007, %v3003
    %v3240 = vpack.c.b16 %v3012, %v3008
    %v3241 = vpack.c.b16 %v3013, %v3009
    %v3242 = vpack.c.b16 %v3014, %v3010
    %v3243 = vpack.c.b16 %v3015, %v3011
    %v3244 = vpack.c.b16 %v3020, %v3016
    %v3245 = vpack.c.b16 %v3021, %v3017
    %v3246 = vpack.c.b16 %v3022, %v3018
    %v3247 = vpack.c.b16 %v3023, %v3019
    %v3248 = vpack.c.b16 %v3028, %v3024
    %v3249 = vpack.c.b16 %v3029, %v3025
    %v3250 = vpack.c.b16 %v3030, %v3026
    %v3251 = vpack.c.b16 %v3031, %v3027
    %v3252 = vpack.c.b16 %v3036, %v3032
    %v3253 = vpack.c.b16 %v3037, %v3033
    %v3254 = vpack.c.b16 %v3038, %v3034
    %v3255 = vpack.c.b16 %v3039, %v3035
    %v3256 = vpack.c.b16 %v3044, %v3040
    %v3257 = vpack.c.b16 %v3045, %v3041
    %v3258 = vpack.c.b16 %v3046, %v3042
    %v3259 = vpack.c.b16 %v3047, %v3043
    %v3260 = vpack.c.b16 %v3052, %v3048
    %v3261 = vpack.c.b16 %v3053, %v3049
    %v3262 = vpack.c.b16 %v3054, %v3050
    %v3263 = vpack.c.b16 %v3055, %v3051
    %v3264 = vpack.c.b16 %v3060, %v3056
    %v3265 = vpack.c.b16 %v3061, %v3057
    %v3266 = vpack.c.b16 %v3062, %v3058
    %v3267 = vpack.c.b16 %v3063, %v3059
    %v3268 = vpack.c.b16 %v3068, %v3064
    %v3269 = vpack.c.b16 %v3069, %v3065
    %v3270 = vpack.c.b16 %v3070, %v3066
    %v3271 = vpack.c.b16 %v3071, %v3067
    %v3272 = vpack.c.b16 %v3076, %v3072
    %v3273 = vpack.c.b16 %v3077, %v3073
    %v3274 = vpack.c.b16 %v3078, %v3074
    %v3275 = vpack.c.b16 %v3079, %v3075
    %v3276 = vpack.c.b16 %v3084, %v3080
    %v3277 = vpack.c.b16 %v3085, %v3081
    %v3278 = vpack.c.b16 %v3086, %v3082
    %v3279 = vpack.c.b16 %v3087, %v3083
    %v3280 = vpack.c.b16 %v3092, %v3088
    %v3281 = vpack.c.b16 %v3093, %v3089
    %v3282 = vpack.c.b16 %v3094, %v3090
    %v3283 = vpack.c.b16 %v3095, %v3091
    %v3284 = vpack.c.b16 %v3100, %v3096
    %v3285 = vpack.c.b16 %v3101, %v3097
    %v3286 = vpack.c.b16 %v3102, %v3098
    %v3287 = vpack.c.b16 %v3103, %v3099
    %v3288 = vpack.c.b16 %v3108, %v3104
    %v3289 = vpack.c.b16 %v3109, %v3105
    %v3290 = vpack.c.b16 %v3110, %v3106
    %v3291 = vpack.c.b16 %v3111, %v3107
    %v3292 = vpack.c.b16 %v3116, %v3112
    %v3293 = vpack.c.b16 %v3117, %v3113
    %v3294 = vpack.c.b16 %v3118, %v3114
    %v3295 = vpack.c.b16 %v3119, %v3115
    %v3296 = vpack.c.b16 %v3124, %v3120
    %v3297 = vpack.c.b16 %v3125, %v3121
    %v3298 = vpack.c.b16 %v3126, %v3122
    %v3299 = vpack.c.b16 %v3127, %v3123
    %v3300 = vpack.c.b16 %v3132, %v3128
    %v3301 = vpack.c.b16 %v3133, %v3129
    %v3302 = vpack.c.b16 %v3134, %v3130
    %v3303 = vpack.c.b16 %v3135, %v3131
    %v3304 = vpack.c.b16 %v3140, %v3136
    %v3305 = vpack.c.b16 %v3141, %v3137
    %v3306 = vpack.c.b16 %v3142, %v3138
    %v3307 = vpack.c.b16 %v3143, %v3139
    %v3308 = vpack.c.b16 %v3148, %v3144
    %v3309 = vpack.c.b16 %v3149, %v3145
    %v3310 = vpack.c.b16 %v3150, %v3146
    %v3311 = vpack.c.b16 %v3151, %v3147
    %v3312 = vpack.c.b16 %v3156, %v3152
    %v3313 = vpack.c.b16 %v3157, %v3153
    %v3314 = vpack.c.b16 %v3158, %v3154
    %v3315 = vpack.c.b16 %v3159, %v3155
    %v3316 = vpack.c.b16 %v3164, %v3160
    %v3317 = vpack.c.b16 %v3165, %v3161
    %v3318 = vpack.c.b16 %v3166, %v3162
    %v3319 = vpack.c.b16 %v3167, %v3163
    %v3320 = vpack.c.b16 %v3172, %v3168
    %v3321 = vpack.c.b16 %v3173, %v3169
    %v3322 = vpack.c.b16 %v3174, %v3170
    %v3323 = vpack.c.b16 %v3175, %v3171
    %v3324 = vpack.c.b16 %v3180, %v3176
    %v3325 = vpack.c.b16 %v3181, %v3177
    %v3326 = vpack.c.b16 %v3182, %v3178
    %v3327 = vpack.c.b16 %v3183, %v3179
    %v3328 = vpack.c.b16 %v3188, %v3184
    %v3329 = vpack.c.b16 %v3189, %v3185
    %v3330 = vpack.c.b16 %v3190, %v3186
    %v3331 = vpack.c.b16 %v3191, %v3187
    %v3332 = vpack.c.b16 %v3196, %v3192
    %v3333 = vpack.c.b16 %v3197, %v3193
    %v3334 = vpack.c.b16 %v3198, %v3194
    %v3335 = vpack.c.b16 %v3199, %v3195
    %v3336 = vpack.c.b16 %v3204, %v3200
    %v3337 = vpack.c.b16 %v3205, %v3201
    %v3338 = vpack.c.b16 %v3206, %v3202
    %v3339 = vpack.c.b16 %v3207, %v3203
    %v3340 = vpack.c.b16 %v3212, %v3208
    %v3341 = vpack.c.b16 %v3213, %v3209
    %v3342 = vpack.c.b16 %v3214, %v3210
    %v3343 = vpack.c.b16 %v3215, %v3211
    %3472 = vmatpush.bf16.msra.mxu0 %v3244
    %3473 = vmatpush.bf16.msra.mxu0 %v3240
    %3474 = vmatpush.bf16.msra.mxu0 %v3236
    %3475 = vmatpush.bf16.msra.mxu0 %v3232
    %3476 = vmatpush.bf16.msra.mxu0 %v3228
    %3477 = vmatpush.bf16.msra.mxu0 %v3224
    %3478 = vmatpush.bf16.msra.mxu0 %v3220
    %3479 = vmatpush.bf16.msra.mxu0 %v3216
    %3480 = vmatmul.bf16.gmra.mxu0 %v2690
    %v3481 = vpop.f32.mrf.mxu0
    %v3482 = vadd.f32 %v2824, %v3481
    %v3483 = vpop.f32.mrf.mxu0
    %3484 = vdwg.mxu0
    %3485 = vmatpush.bf16.msra.mxu0 %v3276
    %3486 = vmatpush.bf16.msra.mxu0 %v3272
    %3487 = vmatpush.bf16.msra.mxu0 %v3268
    %3488 = vmatpush.bf16.msra.mxu0 %v3264
    %3489 = vmatpush.bf16.msra.mxu0 %v3260
    %3490 = vmatpush.bf16.msra.mxu0 %v3256
    %3491 = vmatpush.bf16.msra.mxu0 %v3252
    %3492 = vmatpush.bf16.msra.mxu0 %v3248
    %3493 = vmatmul.bf16.gmra.mxu0 %v2691
    %v3494 = vpop.f32.mrf.mxu0
    %v3495 = vadd.f32 %v3482, %v3494
    %v3496 = vpop.f32.mrf.mxu0
    %3497 = vdwg.mxu0
    %3498 = vmatpush.bf16.msra.mxu0 %v3308
    %3499 = vmatpush.bf16.msra.mxu0 %v3304
    %3500 = vmatpush.bf16.msra.mxu0 %v3300
    %3501 = vmatpush.bf16.msra.mxu0 %v3296
    %3502 = vmatpush.bf16.msra.mxu0 %v3292
    %3503 = vmatpush.bf16.msra.mxu0 %v3288
    %3504 = vmatpush.bf16.msra.mxu0 %v3284
    %3505 = vmatpush.bf16.msra.mxu0 %v3280
    %3506 = vmatmul.bf16.gmra.mxu0 %v2692
    %v3507 = vpop.f32.mrf.mxu0
    %v3508 = vadd.f32 %v3495, %v3507
    %v3509 = vpop.f32.mrf.mxu0
    %3510 = vdwg.mxu0
    %3511 = vmatpush.bf16.msra.mxu0 %v3340
    %3512 = vmatpush.bf16.msra.mxu0 %v3336
    %3513 = vmatpush.bf16.msra.mxu0 %v3332
    %3514 = vmatpush.bf16.msra.mxu0 %v3328
    %3515 = vmatpush.bf16.msra.mxu0 %v3324
    %3516 = vmatpush.bf16.msra.mxu0 %v3320
    %3517 = vmatpush.bf16.msra.mxu0 %v3316
    %3518 = vmatpush.bf16.msra.mxu0 %v3312
    %3519 = vmatmul.bf16.gmra.mxu0 %v2693
    %v3520 = vpop.f32.mrf.mxu0
    %v3521 = vadd.f32 %v3508, %v3520
    %v3522 = vpop.f32.mrf.mxu0
    %3523 = vdwg.mxu0
    %3524 = vmatpush.bf16.msra.mxu0 %v3245
    %3525 = vmatpush.bf16.msra.mxu0 %v3241
    %3526 = vmatpush.bf16.msra.mxu0 %v3237
    %3527 = vmatpush.bf16.msra.mxu0 %v3233
    %3528 = vmatpush.bf16.msra.mxu0 %v3229
    %3529 = vmatpush.bf16.msra.mxu0 %v3225
    %3530 = vmatpush.bf16.msra.mxu0 %v3221
    %3531 = vmatpush.bf16.msra.mxu0 %v3217
    %3532 = vmatmul.bf16.gmra.mxu0 %v2690
    %v3533 = vpop.f32.mrf.mxu0
    %v3534 = vadd.f32 %v2825, %v3533
    %v3535 = vpop.f32.mrf.mxu0
    %3536 = vdwg.mxu0
    %3537 = vmatpush.bf16.msra.mxu0 %v3277
    %3538 = vmatpush.bf16.msra.mxu0 %v3273
    %3539 = vmatpush.bf16.msra.mxu0 %v3269
    %3540 = vmatpush.bf16.msra.mxu0 %v3265
    %3541 = vmatpush.bf16.msra.mxu0 %v3261
    %3542 = vmatpush.bf16.msra.mxu0 %v3257
    %3543 = vmatpush.bf16.msra.mxu0 %v3253
    %3544 = vmatpush.bf16.msra.mxu0 %v3249
    %3545 = vmatmul.bf16.gmra.mxu0 %v2691
    %v3546 = vpop.f32.mrf.mxu0
    %v3547 = vadd.f32 %v3534, %v3546
    %v3548 = vpop.f32.mrf.mxu0
    %3549 = vdwg.mxu0
    %3550 = vmatpush.bf16.msra.mxu0 %v3309
    %3551 = vmatpush.bf16.msra.mxu0 %v3305
    %3552 = vmatpush.bf16.msra.mxu0 %v3301
    %3553 = vmatpush.bf16.msra.mxu0 %v3297
    %3554 = vmatpush.bf16.msra.mxu0 %v3293
    %3555 = vmatpush.bf16.msra.mxu0 %v3289
    %3556 = vmatpush.bf16.msra.mxu0 %v3285
    %3557 = vmatpush.bf16.msra.mxu0 %v3281
    %3558 = vmatmul.bf16.gmra.mxu0 %v2692
    %v3559 = vpop.f32.mrf.mxu0
    %v3560 = vadd.f32 %v3547, %v3559
    %v3561 = vpop.f32.mrf.mxu0
    %3562 = vdwg.mxu0
    %3563 = vmatpush.bf16.msra.mxu0 %v3341
    %3564 = vmatpush.bf16.msra.mxu0 %v3337
    %3565 = vmatpush.bf16.msra.mxu0 %v3333
    %3566 = vmatpush.bf16.msra.mxu0 %v3329
    %3567 = vmatpush.bf16.msra.mxu0 %v3325
    %3568 = vmatpush.bf16.msra.mxu0 %v3321
    %3569 = vmatpush.bf16.msra.mxu0 %v3317
    %3570 = vmatpush.bf16.msra.mxu0 %v3313
    %3571 = vmatmul.bf16.gmra.mxu0 %v2693
    %v3572 = vpop.f32.mrf.mxu0
    %v3573 = vadd.f32 %v3560, %v3572
    %v3574 = vpop.f32.mrf.mxu0
    %3575 = vdwg.mxu0
    %3576 = vmatpush.bf16.msra.mxu0 %v3246
    %3577 = vmatpush.bf16.msra.mxu0 %v3242
    %3578 = vmatpush.bf16.msra.mxu0 %v3238
    %3579 = vmatpush.bf16.msra.mxu0 %v3234
    %3580 = vmatpush.bf16.msra.mxu0 %v3230
    %3581 = vmatpush.bf16.msra.mxu0 %v3226
    %3582 = vmatpush.bf16.msra.mxu0 %v3222
    %3583 = vmatpush.bf16.msra.mxu0 %v3218
    %3584 = vmatmul.bf16.gmra.mxu0 %v2690
    %v3585 = vpop.f32.mrf.mxu0
    %v3586 = vadd.f32 %v2826, %v3585
    %v3587 = vpop.f32.mrf.mxu0
    %3588 = vdwg.mxu0
    %3589 = vmatpush.bf16.msra.mxu0 %v3278
    %3590 = vmatpush.bf16.msra.mxu0 %v3274
    %3591 = vmatpush.bf16.msra.mxu0 %v3270
    %3592 = vmatpush.bf16.msra.mxu0 %v3266
    %3593 = vmatpush.bf16.msra.mxu0 %v3262
    %3594 = vmatpush.bf16.msra.mxu0 %v3258
    %3595 = vmatpush.bf16.msra.mxu0 %v3254
    %3596 = vmatpush.bf16.msra.mxu0 %v3250
    %3597 = vmatmul.bf16.gmra.mxu0 %v2691
    %v3598 = vpop.f32.mrf.mxu0
    %v3599 = vadd.f32 %v3586, %v3598
    %v3600 = vpop.f32.mrf.mxu0
    %3601 = vdwg.mxu0
    %3602 = vmatpush.bf16.msra.mxu0 %v3310
    %3603 = vmatpush.bf16.msra.mxu0 %v3306
    %3604 = vmatpush.bf16.msra.mxu0 %v3302
    %3605 = vmatpush.bf16.msra.mxu0 %v3298
    %3606 = vmatpush.bf16.msra.mxu0 %v3294
    %3607 = vmatpush.bf16.msra.mxu0 %v3290
    %3608 = vmatpush.bf16.msra.mxu0 %v3286
    %3609 = vmatpush.bf16.msra.mxu0 %v3282
    %3610 = vmatmul.bf16.gmra.mxu0 %v2692
    %v3611 = vpop.f32.mrf.mxu0
    %v3612 = vadd.f32 %v3599, %v3611
    %v3613 = vpop.f32.mrf.mxu0
    %3614 = vdwg.mxu0
    %3615 = vmatpush.bf16.msra.mxu0 %v3342
    %3616 = vmatpush.bf16.msra.mxu0 %v3338
    %3617 = vmatpush.bf16.msra.mxu0 %v3334
    %3618 = vmatpush.bf16.msra.mxu0 %v3330
    %3619 = vmatpush.bf16.msra.mxu0 %v3326
    %3620 = vmatpush.bf16.msra.mxu0 %v3322
    %3621 = vmatpush.bf16.msra.mxu0 %v3318
    %3622 = vmatpush.bf16.msra.mxu0 %v3314
    %3623 = vmatmul.bf16.gmra.mxu0 %v2693
    %v3624 = vpop.f32.mrf.mxu0
    %v3625 = vadd.f32 %v3612, %v3624
    %v3626 = vpop.f32.mrf.mxu0
    %3627 = vdwg.mxu0
    %3628 = vmatpush.bf16.msra.mxu0 %v3247
    %3629 = vmatpush.bf16.msra.mxu0 %v3243
    %3630 = vmatpush.bf16.msra.mxu0 %v3239
    %3631 = vmatpush.bf16.msra.mxu0 %v3235
    %3632 = vmatpush.bf16.msra.mxu0 %v3231
    %3633 = vmatpush.bf16.msra.mxu0 %v3227
    %3634 = vmatpush.bf16.msra.mxu0 %v3223
    %3635 = vmatpush.bf16.msra.mxu0 %v3219
    %3636 = vmatmul.bf16.gmra.mxu0 %v2690
    %v3637 = vpop.f32.mrf.mxu0
    %v3638 = vadd.f32 %v2827, %v3637
    %v3639 = vpop.f32.mrf.mxu0
    %3640 = vdwg.mxu0
    %3641 = vmatpush.bf16.msra.mxu0 %v3279
    %3642 = vmatpush.bf16.msra.mxu0 %v3275
    %3643 = vmatpush.bf16.msra.mxu0 %v3271
    %3644 = vmatpush.bf16.msra.mxu0 %v3267
    %3645 = vmatpush.bf16.msra.mxu0 %v3263
    %3646 = vmatpush.bf16.msra.mxu0 %v3259
    %3647 = vmatpush.bf16.msra.mxu0 %v3255
    %3648 = vmatpush.bf16.msra.mxu0 %v3251
    %3649 = vmatmul.bf16.gmra.mxu0 %v2691
    %v3650 = vpop.f32.mrf.mxu0
    %v3651 = vadd.f32 %v3638, %v3650
    %v3652 = vpop.f32.mrf.mxu0
    %3653 = vdwg.mxu0
    %3654 = vmatpush.bf16.msra.mxu0 %v3311
    %3655 = vmatpush.bf16.msra.mxu0 %v3307
    %3656 = vmatpush.bf16.msra.mxu0 %v3303
    %3657 = vmatpush.bf16.msra.mxu0 %v3299
    %3658 = vmatpush.bf16.msra.mxu0 %v3295
    %3659 = vmatpush.bf16.msra.mxu0 %v3291
    %3660 = vmatpush.bf16.msra.mxu0 %v3287
    %3661 = vmatpush.bf16.msra.mxu0 %v3283
    %3662 = vmatmul.bf16.gmra.mxu0 %v2692
    %v3663 = vpop.f32.mrf.mxu0
    %v3664 = vadd.f32 %v3651, %v3663
    %v3665 = vpop.f32.mrf.mxu0
    %3666 = vdwg.mxu0
    %3667 = vmatpush.bf16.msra.mxu0 %v3343
    %3668 = vmatpush.bf16.msra.mxu0 %v3339
    %3669 = vmatpush.bf16.msra.mxu0 %v3335
    %3670 = vmatpush.bf16.msra.mxu0 %v3331
    %3671 = vmatpush.bf16.msra.mxu0 %v3327
    %3672 = vmatpush.bf16.msra.mxu0 %v3323
    %3673 = vmatpush.bf16.msra.mxu0 %v3319
    %3674 = vmatpush.bf16.msra.mxu0 %v3315
    %3675 = vmatmul.bf16.gmra.mxu0 %v2693
    %v3676 = vpop.f32.mrf.mxu0
    %v3677 = vadd.f32 %v3664, %v3676
    %v3678 = vpop.f32.mrf.mxu0
    %3679 = vdwg.mxu0
    %v3680 = vpack.c.bf16 %v3573, %v3521
    %v3681 = vpack.c.bf16 %v3677, %v3625
    %v3682 = vxor.u32 %v3680, 2147516416
    %v3683 = vxor.u32 %v3681, 2147516416
    %v3684 = vunpack.c.l.bf16 %v3682
    %v3685 = vunpack.c.h.bf16 %v3682
    %v3686 = vunpack.c.l.bf16 %v3683
    %v3687 = vunpack.c.h.bf16 %v3683
    %v3688 = vmul.f32 %v3684, 1.442695
    %v3689 = vpow.pop %v3688
    %v3690 = vmul.f32 %v3685, 1.442695
    %v3691 = vpow.pop %v3690
    %v3692 = vmul.f32 %v3686, 1.442695
    %v3693 = vpow.pop %v3692
    %v3694 = vmul.f32 %v3687, 1.442695
    %v3695 = vpow.pop %v3694
    %v3696 = vpack.c.bf16 %v3691, %v3689
    %v3697 = vpack.c.bf16 %v3695, %v3693
    %v3698 = vunpack.c.l.bf16 %v3696
    %v3699 = vunpack.c.h.bf16 %v3696
    %v3700 = vunpack.c.l.bf16 %v3697
    %v3701 = vunpack.c.h.bf16 %v3697
    %v3702 = vadd.f32 %v3698, 1.0
    %v3703 = vadd.f32 %v3699, 1.0
    %v3704 = vadd.f32 %v3700, 1.0
    %v3705 = vadd.f32 %v3701, 1.0
    %v3706 = vpack.c.bf16 %v3703, %v3702
    %v3707 = vpack.c.bf16 %v3705, %v3704
    %v3708 = vunpack.c.h.bf16 %v3706
    %v3709 = vunpack.c.l.bf16 %v3706
    %v3710 = vrcp.pop %v3708
    %v3711 = vmul.f32 %v2662, %v3710
    %v3712 = vrcp.pop %v3709
    %v3713 = vmul.f32 %v2663, %v3712
    %v3714 = vpack.c.bf16 %v3711, %v3713
    %v3715 = vunpack.c.h.bf16 %v3707
    %v3716 = vunpack.c.l.bf16 %v3707
    %v3717 = vrcp.pop %v3715
    %v3718 = vmul.f32 %v2662, %v3717
    %v3719 = vrcp.pop %v3716
    %v3720 = vmul.f32 %v2663, %v3719
    %v3721 = vpack.c.bf16 %v3718, %v3720
    %v3722 = vunpack.c.l.bf16 %v3680
    %v3723 = vunpack.c.h.bf16 %v3680
    %v3724 = vunpack.c.l.bf16 %v3681
    %v3725 = vunpack.c.h.bf16 %v3681
    %v3726 = vunpack.c.l.bf16 %v3714
    %v3727 = vunpack.c.h.bf16 %v3714
    %v3728 = vunpack.c.l.bf16 %v3721
    %v3729 = vunpack.c.h.bf16 %v3721
    %v3730 = vmul.f32 %v3722, %v3726
    %v3731 = vmul.f32 %v3723, %v3727
    %v3732 = vmul.f32 %v3724, %v3728
    %v3733 = vmul.f32 %v3725, %v3729
    %v3734 = vpack.c.bf16 %v3730, %v3730
    %v3735 = vpack.c.bf16 %v3731, %v3731
    %v3736 = vpack.c.bf16 %v3732, %v3732
    %v3737 = vpack.c.bf16 %v3733, %v3733
    %v3738 = vld [vmem:[#allocation11] sm:$0xf]
    %v3739 = vld [vmem:[#allocation11 + $0x4] sm:$0xf]
    %v3740 = vld [vmem:[#allocation11 + $0x8] sm:$0xf]
    %v3741 = vld [vmem:[#allocation11 + $0xc] sm:$0xf]
    %v3742 = vld [vmem:[#allocation11 + $0x10] sm:$0xf]
    %v3743 = vld [vmem:[#allocation11 + $0x14] sm:$0xf]
    %v3744 = vld [vmem:[#allocation11 + $0x18] sm:$0xf]
    %v3745 = vld [vmem:[#allocation11 + $0x1c] sm:$0xf]
    %v3746 = vld [vmem:[#allocation11 + $0x20] sm:$0xf]
    %v3747 = vld [vmem:[#allocation11 + $0x24] sm:$0xf]
    %v3748 = vld [vmem:[#allocation11 + $0x28] sm:$0xf]
    %v3749 = vld [vmem:[#allocation11 + $0x2c] sm:$0xf]
    %v3750 = vld [vmem:[#allocation11 + $0x30] sm:$0xf]
    %v3751 = vld [vmem:[#allocation11 + $0x34] sm:$0xf]
    %v3752 = vld [vmem:[#allocation11 + $0x38] sm:$0xf]
    %v3753 = vld [vmem:[#allocation11 + $0x3c] sm:$0xf]
    %v3754 = vld [vmem:[#allocation11 + $0x40] sm:$0xf]
    %v3755 = vld [vmem:[#allocation11 + $0x44] sm:$0xf]
    %v3756 = vld [vmem:[#allocation11 + $0x48] sm:$0xf]
    %v3757 = vld [vmem:[#allocation11 + $0x4c] sm:$0xf]
    %v3758 = vld [vmem:[#allocation11 + $0x50] sm:$0xf]
    %v3759 = vld [vmem:[#allocation11 + $0x54] sm:$0xf]
    %v3760 = vld [vmem:[#allocation11 + $0x58] sm:$0xf]
    %v3761 = vld [vmem:[#allocation11 + $0x5c] sm:$0xf]
    %v3762 = vld [vmem:[#allocation11 + $0x60] sm:$0xf]
    %v3763 = vld [vmem:[#allocation11 + $0x64] sm:$0xf]
    %v3764 = vld [vmem:[#allocation11 + $0x68] sm:$0xf]
    %v3765 = vld [vmem:[#allocation11 + $0x6c] sm:$0xf]
    %v3766 = vld [vmem:[#allocation11 + $0x70] sm:$0xf]
    %v3767 = vld [vmem:[#allocation11 + $0x74] sm:$0xf]
    %v3768 = vld [vmem:[#allocation11 + $0x78] sm:$0xf]
    %v3769 = vld [vmem:[#allocation11 + $0x7c] sm:$0xf]
    %v3770 = vld [vmem:[#allocation11 + $0x80] sm:$0xf]
    %v3771 = vld [vmem:[#allocation11 + $0x84] sm:$0xf]
    %v3772 = vld [vmem:[#allocation11 + $0x88] sm:$0xf]
    %v3773 = vld [vmem:[#allocation11 + $0x8c] sm:$0xf]
    %v3774 = vld [vmem:[#allocation11 + $0x90] sm:$0xf]
    %v3775 = vld [vmem:[#allocation11 + $0x94] sm:$0xf]
    %v3776 = vld [vmem:[#allocation11 + $0x98] sm:$0xf]
    %v3777 = vld [vmem:[#allocation11 + $0x9c] sm:$0xf]
    %v3778 = vld [vmem:[#allocation11 + $0xa0] sm:$0xf]
    %v3779 = vld [vmem:[#allocation11 + $0xa4] sm:$0xf]
    %v3780 = vld [vmem:[#allocation11 + $0xa8] sm:$0xf]
    %v3781 = vld [vmem:[#allocation11 + $0xac] sm:$0xf]
    %v3782 = vld [vmem:[#allocation11 + $0xb0] sm:$0xf]
    %v3783 = vld [vmem:[#allocation11 + $0xb4] sm:$0xf]
    %v3784 = vld [vmem:[#allocation11 + $0xb8] sm:$0xf]
    %v3785 = vld [vmem:[#allocation11 + $0xbc] sm:$0xf]
    %v3786 = vld [vmem:[#allocation11 + $0xc0] sm:$0xf]
    %v3787 = vld [vmem:[#allocation11 + $0xc4] sm:$0xf]
    %v3788 = vld [vmem:[#allocation11 + $0xc8] sm:$0xf]
    %v3789 = vld [vmem:[#allocation11 + $0xcc] sm:$0xf]
    %v3790 = vld [vmem:[#allocation11 + $0xd0] sm:$0xf]
    %v3791 = vld [vmem:[#allocation11 + $0xd4] sm:$0xf]
    %v3792 = vld [vmem:[#allocation11 + $0xd8] sm:$0xf]
    %v3793 = vld [vmem:[#allocation11 + $0xdc] sm:$0xf]
    %v3794 = vld [vmem:[#allocation11 + $0xe0] sm:$0xf]
    %v3795 = vld [vmem:[#allocation11 + $0xe4] sm:$0xf]
    %v3796 = vld [vmem:[#allocation11 + $0xe8] sm:$0xf]
    %v3797 = vld [vmem:[#allocation11 + $0xec] sm:$0xf]
    %v3798 = vld [vmem:[#allocation11 + $0xf0] sm:$0xf]
    %v3799 = vld [vmem:[#allocation11 + $0xf4] sm:$0xf]
    %v3800 = vld [vmem:[#allocation11 + $0xf8] sm:$0xf]
    %v3801 = vld [vmem:[#allocation11 + $0xfc] sm:$0xf]
    %v3802 = vld [vmem:[#allocation13] sm:$0x1]
    %v3804 = vperm.slane %v3802, 0
    %v3870 = vunpack.c.l.b16 %v3738
    %v3871 = vunpack.c.l.b16 %v3739
    %v3872 = vunpack.c.l.b16 %v3740
    %v3873 = vunpack.c.l.b16 %v3741
    %v3874 = vunpack.c.l.b16 %v3742
    %v3875 = vunpack.c.l.b16 %v3743
    %v3876 = vunpack.c.l.b16 %v3744
    %v3877 = vunpack.c.l.b16 %v3745
    %v3878 = vunpack.c.l.b16 %v3746
    %v3879 = vunpack.c.l.b16 %v3747
    %v3880 = vunpack.c.l.b16 %v3748
    %v3881 = vunpack.c.l.b16 %v3749
    %v3882 = vunpack.c.l.b16 %v3750
    %v3883 = vunpack.c.l.b16 %v3751
    %v3884 = vunpack.c.l.b16 %v3752
    %v3885 = vunpack.c.l.b16 %v3753
    %v3886 = vunpack.c.l.b16 %v3754
    %v3887 = vunpack.c.l.b16 %v3755
    %v3888 = vunpack.c.l.b16 %v3756
    %v3889 = vunpack.c.l.b16 %v3757
    %v3890 = vunpack.c.l.b16 %v3758
    %v3891 = vunpack.c.l.b16 %v3759
    %v3892 = vunpack.c.l.b16 %v3760
    %v3893 = vunpack.c.l.b16 %v3761
    %v3894 = vunpack.c.l.b16 %v3762
    %v3895 = vunpack.c.l.b16 %v3763
    %v3896 = vunpack.c.l.b16 %v3764
    %v3897 = vunpack.c.l.b16 %v3765
    %v3898 = vunpack.c.l.b16 %v3766
    %v3899 = vunpack.c.l.b16 %v3767
    %v3900 = vunpack.c.l.b16 %v3768
    %v3901 = vunpack.c.l.b16 %v3769
    %v3902 = vunpack.c.l.b16 %v3770
    %v3903 = vunpack.c.l.b16 %v3771
    %v3904 = vunpack.c.l.b16 %v3772
    %v3905 = vunpack.c.l.b16 %v3773
    %v3906 = vunpack.c.l.b16 %v3774
    %v3907 = vunpack.c.l.b16 %v3775
    %v3908 = vunpack.c.l.b16 %v3776
    %v3909 = vunpack.c.l.b16 %v3777
    %v3910 = vunpack.c.l.b16 %v3778
    %v3911 = vunpack.c.l.b16 %v3779
    %v3912 = vunpack.c.l.b16 %v3780
    %v3913 = vunpack.c.l.b16 %v3781
    %v3914 = vunpack.c.l.b16 %v3782
    %v3915 = vunpack.c.l.b16 %v3783
    %v3916 = vunpack.c.l.b16 %v3784
    %v3917 = vunpack.c.l.b16 %v3785
    %v3918 = vunpack.c.l.b16 %v3786
    %v3919 = vunpack.c.l.b16 %v3787
    %v3920 = vunpack.c.l.b16 %v3788
    %v3921 = vunpack.c.l.b16 %v3789
    %v3922 = vunpack.c.l.b16 %v3790
    %v3923 = vunpack.c.l.b16 %v3791
    %v3924 = vunpack.c.l.b16 %v3792
    %v3925 = vunpack.c.l.b16 %v3793
    %v3926 = vunpack.c.l.b16 %v3794
    %v3927 = vunpack.c.l.b16 %v3795
    %v3928 = vunpack.c.l.b16 %v3796
    %v3929 = vunpack.c.l.b16 %v3797
    %v3930 = vunpack.c.l.b16 %v3798
    %v3931 = vunpack.c.l.b16 %v3799
    %v3932 = vunpack.c.l.b16 %v3800
    %v3933 = vunpack.c.l.b16 %v3801
    %v3934 = vpack.c.b16 %v3871, %v3870
    %v3935 = vpack.c.b16 %v3873, %v3872
    %v3936 = vpack.c.b16 %v3875, %v3874
    %v3937 = vpack.c.b16 %v3877, %v3876
    %v3938 = vpack.c.b16 %v3879, %v3878
    %v3939 = vpack.c.b16 %v3881, %v3880
    %v3940 = vpack.c.b16 %v3883, %v3882
    %v3941 = vpack.c.b16 %v3885, %v3884
    %v3942 = vpack.c.b16 %v3887, %v3886
    %v3943 = vpack.c.b16 %v3889, %v3888
    %v3944 = vpack.c.b16 %v3891, %v3890
    %v3945 = vpack.c.b16 %v3893, %v3892
    %v3946 = vpack.c.b16 %v3895, %v3894
    %v3947 = vpack.c.b16 %v3897, %v3896
    %v3948 = vpack.c.b16 %v3899, %v3898
    %v3949 = vpack.c.b16 %v3901, %v3900
    %v3950 = vpack.c.b16 %v3903, %v3902
    %v3951 = vpack.c.b16 %v3905, %v3904
    %v3952 = vpack.c.b16 %v3907, %v3906
    %v3953 = vpack.c.b16 %v3909, %v3908
    %v3954 = vpack.c.b16 %v3911, %v3910
    %v3955 = vpack.c.b16 %v3913, %v3912
    %v3956 = vpack.c.b16 %v3915, %v3914
    %v3957 = vpack.c.b16 %v3917, %v3916
    %v3958 = vpack.c.b16 %v3919, %v3918
    %v3959 = vpack.c.b16 %v3921, %v3920
    %v3960 = vpack.c.b16 %v3923, %v3922
    %v3961 = vpack.c.b16 %v3925, %v3924
    %v3962 = vpack.c.b16 %v3927, %v3926
    %v3963 = vpack.c.b16 %v3929, %v3928
    %v3964 = vpack.c.b16 %v3931, %v3930
    %v3965 = vpack.c.b16 %v3933, %v3932
    %3998 = vmatpush.bf16.msra.mxu0 %v3941
    %3999 = vmatpush.bf16.msra.mxu0 %v3940
    %4000 = vmatpush.bf16.msra.mxu0 %v3939
    %4001 = vmatpush.bf16.msra.mxu0 %v3938
    %4002 = vmatpush.bf16.msra.mxu0 %v3937
    %4003 = vmatpush.bf16.msra.mxu0 %v3936
    %4004 = vmatpush.bf16.msra.mxu0 %v3935
    %4005 = vmatpush.bf16.msra.mxu0 %v3934
    %4006 = vmatmul.bf16.gmra.mxu0 %v3734
    %v4007 = vpop.f32.mrf.mxu0
    %v4008 = vadd.f32 %v3804, %v4007
    %v4009 = vpop.f32.mrf.mxu0
    %4010 = vdwg.mxu0
    %4011 = vmatpush.bf16.msra.mxu0 %v3949
    %4012 = vmatpush.bf16.msra.mxu0 %v3948
    %4013 = vmatpush.bf16.msra.mxu0 %v3947
    %4014 = vmatpush.bf16.msra.mxu0 %v3946
    %4015 = vmatpush.bf16.msra.mxu0 %v3945
    %4016 = vmatpush.bf16.msra.mxu0 %v3944
    %4017 = vmatpush.bf16.msra.mxu0 %v3943
    %4018 = vmatpush.bf16.msra.mxu0 %v3942
    %4019 = vmatmul.bf16.gmra.mxu0 %v3735
    %v4020 = vpop.f32.mrf.mxu0
    %v4021 = vadd.f32 %v4008, %v4020
    %v4022 = vpop.f32.mrf.mxu0
    %4023 = vdwg.mxu0
    %4024 = vmatpush.bf16.msra.mxu0 %v3957
    %4025 = vmatpush.bf16.msra.mxu0 %v3956
    %4026 = vmatpush.bf16.msra.mxu0 %v3955
    %4027 = vmatpush.bf16.msra.mxu0 %v3954
    %4028 = vmatpush.bf16.msra.mxu0 %v3953
    %4029 = vmatpush.bf16.msra.mxu0 %v3952
    %4030 = vmatpush.bf16.msra.mxu0 %v3951
    %4031 = vmatpush.bf16.msra.mxu0 %v3950
    %4032 = vmatmul.bf16.gmra.mxu0 %v3736
    %v4033 = vpop.f32.mrf.mxu0
    %v4034 = vadd.f32 %v4021, %v4033
    %v4035 = vpop.f32.mrf.mxu0
    %4036 = vdwg.mxu0
    %4037 = vmatpush.bf16.msra.mxu0 %v3965
    %4038 = vmatpush.bf16.msra.mxu0 %v3964
    %4039 = vmatpush.bf16.msra.mxu0 %v3963
    %4040 = vmatpush.bf16.msra.mxu0 %v3962
    %4041 = vmatpush.bf16.msra.mxu0 %v3961
    %4042 = vmatpush.bf16.msra.mxu0 %v3960
    %4043 = vmatpush.bf16.msra.mxu0 %v3959
    %4044 = vmatpush.bf16.msra.mxu0 %v3958
    %4045 = vmatmul.bf16.gmra.mxu0 %v3737
    %v4046 = vpop.f32.mrf.mxu0
    %v4047 = vadd.f32 %v4034, %v4046
    %v4048 = vpop.f32.mrf.mxu0
    %4049 = vdwg.mxu0
    %v4050 = vpack.c.bf16 %v4047, %v4047
    %v4051 = vxor.u32 %v4050, 2147516416
    %v4052 = vunpack.c.l.bf16 %v4051
    %v4053 = vmul.f32 %v4052, 1.442695
    %v4054 = vpow.pop %v4053
    %v4055 = vpack.c.bf16 %v4054, %v4054
    %v4056 = vunpack.c.l.bf16 %v4055
    %v4057 = vadd.f32 %v4056, 1.0
    %v4058 = vpack.c.bf16 %v4057, %v4057
    %v4059 = vunpack.c.h.bf16 %v4058
    %v4060 = vunpack.c.l.bf16 %v4058
    %v4061 = vrcp.pop %v4059
    %v4062 = vmul.f32 %v2662, %v4061
    %v4063 = vrcp.pop %v4060
    %v4064 = vmul.f32 %v2663, %v4063
    %v4065 = vpack.c.bf16 %v4062, %v4064
    %v4066 = vunpack.c.l.bf16 %v4050
    %v4067 = vunpack.c.l.bf16 %v4065
    %v4068 = vmul.f32 %v4066, %v4067
    %v4069 = vpack.c.bf16 %v4068, %v4068
    %v4070 = vld [vmem:[#allocation14] sm:$0xf]
    %v4071 = vld [vmem:[#allocation14 + $0x4] sm:$0xf]
    %v4072 = vld [vmem:[#allocation14 + $0x8] sm:$0xf]
    %v4073 = vld [vmem:[#allocation14 + $0xc] sm:$0xf]
    %v4074 = vld [vmem:[#allocation14 + $0x10] sm:$0xf]
    %v4075 = vld [vmem:[#allocation14 + $0x14] sm:$0xf]
    %v4076 = vld [vmem:[#allocation14 + $0x18] sm:$0xf]
    %v4077 = vld [vmem:[#allocation14 + $0x1c] sm:$0xf]
    %v4078 = vld [vmem:[#allocation14 + $0x20] sm:$0xf]
    %v4079 = vld [vmem:[#allocation14 + $0x24] sm:$0xf]
    %v4080 = vld [vmem:[#allocation14 + $0x28] sm:$0xf]
    %v4081 = vld [vmem:[#allocation14 + $0x2c] sm:$0xf]
    %v4082 = vld [vmem:[#allocation14 + $0x30] sm:$0xf]
    %v4083 = vld [vmem:[#allocation14 + $0x34] sm:$0xf]
    %v4084 = vld [vmem:[#allocation14 + $0x38] sm:$0xf]
    %v4085 = vld [vmem:[#allocation14 + $0x3c] sm:$0xf]
    %v4086 = vld [vmem:[#allocation16] sm:$0x1]
    %v4088 = vperm.slane %v4086, 0
    %v4106 = vunpack.c.l.b16 %v4070
    %v4107 = vunpack.c.l.b16 %v4071
    %v4108 = vunpack.c.l.b16 %v4072
    %v4109 = vunpack.c.l.b16 %v4073
    %v4110 = vunpack.c.l.b16 %v4074
    %v4111 = vunpack.c.l.b16 %v4075
    %v4112 = vunpack.c.l.b16 %v4076
    %v4113 = vunpack.c.l.b16 %v4077
    %v4114 = vunpack.c.l.b16 %v4078
    %v4115 = vunpack.c.l.b16 %v4079
    %v4116 = vunpack.c.l.b16 %v4080
    %v4117 = vunpack.c.l.b16 %v4081
    %v4118 = vunpack.c.l.b16 %v4082
    %v4119 = vunpack.c.l.b16 %v4083
    %v4120 = vunpack.c.l.b16 %v4084
    %v4121 = vunpack.c.l.b16 %v4085
    %v4122 = vpack.c.b16 %v4107, %v4106
    %v4123 = vpack.c.b16 %v4109, %v4108
    %v4124 = vpack.c.b16 %v4111, %v4110
    %v4125 = vpack.c.b16 %v4113, %v4112
    %v4126 = vpack.c.b16 %v4115, %v4114
    %v4127 = vpack.c.b16 %v4117, %v4116
    %v4128 = vpack.c.b16 %v4119, %v4118
    %v4129 = vpack.c.b16 %v4121, %v4120
    %4138 = vmatpush.bf16.msra.mxu0 %v4129
    %4139 = vmatpush.bf16.msra.mxu0 %v4128
    %4140 = vmatpush.bf16.msra.mxu0 %v4127
    %4141 = vmatpush.bf16.msra.mxu0 %v4126
    %4142 = vmatpush.bf16.msra.mxu0 %v4125
    %4143 = vmatpush.bf16.msra.mxu0 %v4124
    %4144 = vmatpush.bf16.msra.mxu0 %v4123
    %4145 = vmatpush.bf16.msra.mxu0 %v4122
    %4146 = vmatmul.bf16.gmra.mxu0 %v4069
    %v4147 = vpop.f32.mrf.mxu0
    %v4148 = vadd.f32 %v4088, %v4147
    %v4149 = vpop.f32.mrf.mxu0
    %4150 = vdwg.mxu0
    %v4151 = vpack.c.bf16 %v4148, %v4148
    %4152 = vst [vmem:[#allocation17] sm:$0xf] %v4151
    // Predicated region
    $region74: #{tpu_custom_call.1} parent=1 // pred_check
      _
    $region75: #{tpu_custom_call.1} parent=1 // pred_check_branch
      %4154 = sbr.rel (0) target = $region77
    $region76: #{tpu_custom_call.1} parent=1 // pred_region
      %4156 = vsyncadd [#allocation4], 0
      %s4158 = sshll.u32 [#allocation17], 4
      %s4159 = int_to_ptr.vmem [resolvable:$true] %s4158
      %s4160 = sshll.u32 %s9, 4
      %s4161 = int_to_ptr.hbm [resolvable:$true] %s4160
      %4163 = dma.vmem_to_hbm [thread:$0]  %s4159, 64, %s4161, [#allocation4]
    $region77: #{tpu_custom_call.1} parent=1 // pred_fallthru
      _
    // Predicated region
    $region78: #{tpu_custom_call.1} parent=1 // pred_check
      _
    $region79: #{tpu_custom_call.1} parent=1 // pred_check_branch
      %4165 = sbr.rel (0) target = $region81
    $region80: #{tpu_custom_call.1} parent=1 // pred_region
      %4167 = dma.done [#allocation4], 64
    $region81: #{tpu_custom_call.1} parent=1 // pred_fallthru
      _
    %4168 = vsyncpa [#allocation3], 1
    %4169 = vsyncpa [#allocation6], 1
    %4170 = vsyncpa [#allocation9], 1
    %4171 = vsyncpa [#allocation12], 1
    %4172 = vsyncpa [#allocation15], 1
    %4173 = vsyncpa [#allocation4], 1

</llo_original>
